<compile_context>
chip_gen: v5e
topology: v5e:2x2
jax: 0.10.0
libtpu: 0.0.40
codegen_flags: <defaults>
</compile_context>

<pallas_src>
import functools
import math

import jax
import jax.numpy as jnp
from jax.experimental import pallas as pl
from jax.experimental.pallas import tpu as pltpu


# --------------------------- in-kernel helpers -------------------------------

def _project_heads(inp_f32, w_bf16, b_f32, n):
    """inp [S, D] f32, w [n, D, Dh] bf16, b [n, 1, Dh] f32 -> [n, S, Dh] f32."""
    S, D = inp_f32.shape
    xb = jnp.broadcast_to(inp_f32.astype(jnp.bfloat16), (n, S, D))
    out = jnp.einsum("nsd,nde->nse", xb, w_bf16,
                     preferred_element_type=jnp.float32)
    return out + b_f32


def _mha_core(q, k, v, mask, wo_bf16, bo_f32, scale):
    """q [H,Sq,Dh], k/v [H,Sk,Dh] f32, mask [Sq,Sk] -> [Sq, D] f32."""
    qs = (q * scale).astype(jnp.bfloat16)          # fold 1/sqrt(Dh) into q
    s = jnp.einsum("hqd,hkd->hqk", qs, k.astype(jnp.bfloat16),
                   preferred_element_type=jnp.float32)
    keep = jnp.broadcast_to((mask > 0.0)[None, :, :], s.shape)
    s = jnp.where(keep, s, jnp.float32(-1e9))      # masked_fill(mask == 0, -inf)
    s = s - jnp.max(s, axis=-1, keepdims=True)
    p = jnp.exp(s)
    p = p * pl.reciprocal(jnp.sum(p, axis=-1, keepdims=True), approx=True)
    ctx = jnp.einsum("hqk,hkd->hqd", p.astype(jnp.bfloat16),
                     v.astype(jnp.bfloat16),
                     preferred_element_type=jnp.float32)      # [H, Sq, Dh]
    out = jnp.einsum("hqd,hdf->hqf", ctx.astype(jnp.bfloat16), wo_bf16,
                     preferred_element_type=jnp.float32)      # [H, Sq, D]
    return jnp.sum(out, axis=0) + bo_f32                       # concat-heads @ Wo


def _add_layernorm(y, res, g, b, eps=1e-5):
    x = y + res
    mu = jnp.mean(x, axis=-1, keepdims=True)
    var = jnp.mean(jnp.square(x - mu), axis=-1, keepdims=True)
    return (x - mu) * jax.lax.rsqrt(var + eps) * g + b


# ----------------- fused decoder-stack (all layers + logits) kernel ----------

def _decoder_stack_kernel(
        x_ref, enc_ref, tmask_ref, smask_ref,
        s_wqkv_ref, s_bqkv_ref, s_wo_ref, s_bo_ref,
        c_wq_ref, c_bq_ref, c_wkv_ref, c_bkv_ref, c_wo_ref, c_bo_ref,
        w1_ref, b1_ref, w2_ref, b2_ref,
        ln1_g_ref, ln1_b_ref, ln2_g_ref, ln2_b_ref, ln3_g_ref, ln3_b_ref,
        w_out_ref, b_out_ref,
        o_ref, x_vmem, *, n_head, scale):
    H = n_head
    layer = pl.program_id(1)

    # Load the embedded tokens into the persistent activation scratch once per
    # batch element (layer axis is the inner, sequential grid dimension).
    @pl.when(layer == 0)
    def _():
        x_vmem[...] = x_ref[0].astype(jnp.float32)

    x = x_vmem[...]                           # [St, D] f32
    enc = enc_ref[0].astype(jnp.float32)      # [Se, D]
    tmask = tmask_ref[0]                      # [St, St]
    smask = smask_ref[0]                      # [St, Se]

    # ---- self-attention (fused QKV) + add & norm ----------------------------
    qkv = _project_heads(x, s_wqkv_ref[0], s_bqkv_ref[0], 3 * H)
    a = _mha_core(qkv[:H], qkv[H:2 * H], qkv[2 * H:], tmask,
                  s_wo_ref[0], s_bo_ref[0], scale)
    x = _add_layernorm(a, x, ln1_g_ref[0], ln1_b_ref[0])

    # ---- cross-attention (fused KV) + add & norm ----------------------------
    q = _project_heads(x, c_wq_ref[0], c_bq_ref[0], H)
    kv = _project_heads(enc, c_wkv_ref[0], c_bkv_ref[0], 2 * H)
    a = _mha_core(q, kv[:H], kv[H:], smask, c_wo_ref[0], c_bo_ref[0], scale)
    x = _add_layernorm(a, x, ln2_g_ref[0], ln2_b_ref[0])

    # ---- position-wise FFN + add & norm -------------------------------------
    h = jnp.dot(x.astype(jnp.bfloat16), w1_ref[0],
                preferred_element_type=jnp.float32) + b1_ref[0]
    h = jnp.maximum(h, 0.0)
    y = jnp.dot(h.astype(jnp.bfloat16), w2_ref[0],
                preferred_element_type=jnp.float32) + b2_ref[0]
    x = _add_layernorm(y, x, ln3_g_ref[0], ln3_b_ref[0])

    x_vmem[...] = x

    # ---- final vocab projection on the last layer step ----------------------
    @pl.when(layer == pl.num_programs(1) - 1)
    def _():
        logits = jnp.dot(x.astype(jnp.bfloat16), w_out_ref[...],
                         preferred_element_type=jnp.float32) + b_out_ref[...]
        o_ref[0] = logits.astype(o_ref.dtype)


def decoder_stack_forward(x_emb, enc, tgt_mask, src_mask, layers, w_out, b_out,
                          n_head):
    B, St, D = x_emb.shape
    Se = enc.shape[1]
    V = w_out.shape[1]
    L = layers["w1"].shape[0]
    H = n_head
    Dh = D // H
    scale = 1.0 / math.sqrt(Dh)

    def lspec(arr):                      # per-layer stacked weight
        shp = arr.shape[1:]
        nz = (0,) * len(shp)
        return pl.BlockSpec((1,) + shp, lambda b, l, nz=nz: (l,) + nz)

    def cspec(arr):                      # grid-constant weight
        shp = arr.shape
        z = (0,) * len(shp)
        return pl.BlockSpec(shp, lambda b, l, z=z: z)

    layer_ops = [
        layers["self"]["wqkv"], layers["self"]["bqkv"],
        layers["self"]["wo"], layers["self"]["bo"],
        layers["cross"]["wq"], layers["cross"]["bq"],
        layers["cross"]["wkv"], layers["cross"]["bkv"],
        layers["cross"]["wo"], layers["cross"]["bo"],
        layers["w1"], layers["b1"], layers["w2"], layers["b2"],
        layers["ln1_g"], layers["ln1_b"],
        layers["ln2_g"], layers["ln2_b"],
        layers["ln3_g"], layers["ln3_b"],
    ]

    kernel = functools.partial(_decoder_stack_kernel, n_head=H, scale=scale)
    return pl.pallas_call(
        kernel,
        out_shape=jax.ShapeDtypeStruct((B, St, V), jnp.float32),
        grid=(B, L),
        in_specs=[
            pl.BlockSpec((1, St, D), lambda b, l: (b, 0, 0)),
            pl.BlockSpec((1, Se, D), lambda b, l: (b, 0, 0)),
            pl.BlockSpec((1, St, St), lambda b, l: (b, 0, 0)),
            pl.BlockSpec((1, St, Se), lambda b, l: (b, 0, 0)),
        ] + [lspec(a) for a in layer_ops] + [cspec(w_out), cspec(b_out)],
        out_specs=pl.BlockSpec((1, St, V), lambda b, l: (b, 0, 0)),
        scratch_shapes=[pltpu.VMEM((St, D), jnp.float32)],
        compiler_params=pltpu.CompilerParams(
            dimension_semantics=("parallel", "arbitrary")),
    )(x_emb, enc, tgt_mask, src_mask, *layer_ops, w_out, b_out)


# ------------------------------ params / glue --------------------------------

def sinusoidal_pos_encoding(max_len, d_model):
    pos = jnp.arange(max_len, dtype=jnp.float32)[:, None]
    i = jnp.arange(d_model, dtype=jnp.float32)[None, :]
    angle = pos / jnp.power(10000.0, (2.0 * jnp.floor(i / 2.0)) / d_model)
    return jnp.where(i % 2 == 0, jnp.sin(angle), jnp.cos(angle))   # [max_len, D]


def _linear_params(key, d_in, d_out):
    kw, kb = jax.random.split(key)
    w = jax.random.normal(kw, (d_in, d_out), jnp.float32) * 0.02
    b = jax.random.normal(kb, (d_out,), jnp.float32) * 0.02
    return w, b


def _split_heads_w(w, n_head):
    d_in, d_out = w.shape
    dh = d_out // n_head
    return w.reshape(d_in, n_head, dh).transpose(1, 0, 2)   # [H, D, Dh]


def _split_heads_b(b, n_head):
    dh = b.shape[0] // n_head
    return b.reshape(n_head, 1, dh)                           # [H, 1, Dh]


def _mha_params(key, d_model, n_head, fuse):
    ks = jax.random.split(key, 4)
    wq, bq = _linear_params(ks[0], d_model, d_model)
    wk, bk = _linear_params(ks[1], d_model, d_model)
    wv, bv = _linear_params(ks[2], d_model, d_model)
    wo, bo = _linear_params(ks[3], d_model, d_model)
    H = n_head
    dh = d_model // H
    qh, kh, vh = (_split_heads_w(m, H) for m in (wq, wk, wv))
    bqh, bkh, bvh = (_split_heads_b(v, H) for v in (bq, bk, bv))
    p = {"wo": wo.reshape(H, dh, d_model).astype(jnp.bfloat16),
         "bo": bo.reshape(1, d_model)}
    if fuse == "qkv":      # self-attention: q,k,v share the same input
        p["wqkv"] = jnp.concatenate([qh, kh, vh], axis=0).astype(jnp.bfloat16)
        p["bqkv"] = jnp.concatenate([bqh, bkh, bvh], axis=0)
    else:                  # cross-attention: k,v share the encoder input
        p["wq"] = qh.astype(jnp.bfloat16)
        p["bq"] = bqh
        p["wkv"] = jnp.concatenate([kh, vh], axis=0).astype(jnp.bfloat16)
        p["bkv"] = jnp.concatenate([bkh, bvh], axis=0)
    return p


def init_decoder_params(key, dec_voc_size, max_len, d_model, ffn_hidden,
                        n_head, n_layers):
    keys = jax.random.split(key, 2 + n_layers)
    params = {
        "emb": jax.random.normal(keys[0], (dec_voc_size, d_model),
                                 jnp.float32) * 0.02,
        "pos": sinusoidal_pos_encoding(max_len, d_model),
    }
    per_layer = []
    for li in range(n_layers):
        lk = jax.random.split(keys[2 + li], 4)
        w1, b1 = _linear_params(lk[2], d_model, ffn_hidden)
        w2, b2 = _linear_params(lk[3], ffn_hidden, d_model)
        per_layer.append({
            "self": _mha_params(lk[0], d_model, n_head, fuse="qkv"),
            "cross": _mha_params(lk[1], d_model, n_head, fuse="kv"),
            "w1": w1.astype(jnp.bfloat16), "b1": b1.reshape(1, ffn_hidden),
            "w2": w2.astype(jnp.bfloat16), "b2": b2.reshape(1, d_model),
            "ln1_g": jnp.ones((1, d_model), jnp.float32),
            "ln1_b": jnp.zeros((1, d_model), jnp.float32),
            "ln2_g": jnp.ones((1, d_model), jnp.float32),
            "ln2_b": jnp.zeros((1, d_model), jnp.float32),
            "ln3_g": jnp.ones((1, d_model), jnp.float32),
            "ln3_b": jnp.zeros((1, d_model), jnp.float32),
        })
    # Stack every per-layer tensor along a leading layer dim so one kernel can
    # stream layer l's weights via its BlockSpec.
    params["layers"] = jax.tree_util.tree_map(
        lambda *xs: jnp.stack(xs, axis=0), *per_layer)
    w_out, b_out = _linear_params(keys[1], d_model, dec_voc_size)
    params["w_out"] = w_out.astype(jnp.bfloat16)
    params["b_out"] = b_out.reshape(1, dec_voc_size)
    return params


def decoder_forward(params, tgt_ids, enc, tgt_mask, src_mask, n_head):
    """tgt_ids: [B, St] int32; enc: [B, Se, D];
       tgt_mask: [B, St, St] (1 keep / 0 mask); src_mask: [B, St, Se]."""
    B, St = tgt_ids.shape
    # TransformerEmbedding: token lookup + positional encoding.
    # TODO(synk): embedding gather stays in XLA (no clean Pallas gather at this scale).
    x = jnp.take(params["emb"], tgt_ids, axis=0) + params["pos"][:St][None, :, :]
    return decoder_stack_forward(x, enc, tgt_mask, src_mask, params["layers"],
                                 params["w_out"], params["b_out"], n_head)


# --------------------------------- driver ------------------------------------

if __name__ == "__main__":
    dec_voc_size = 50
    max_len = 16
    d_model = 32
    ffn_hidden = 64
    n_head = 4
    n_layers = 2

    B, St, Se = 2, 8, 8

    key = jax.random.PRNGKey(0)
    k_par, k_tgt, k_enc = jax.random.split(key, 3)

    params = init_decoder_params(k_par, dec_voc_size, max_len, d_model,
                                 ffn_hidden, n_head, n_layers)

    tgt_ids = jax.random.randint(k_tgt, (B, St), 0, dec_voc_size, dtype=jnp.int32)
    enc = jax.random.normal(k_enc, (B, Se, d_model), jnp.float32)

    # causal target mask [B, St, St], full source mask [B, St, Se]
    tgt_mask = jnp.broadcast_to(
        jnp.tril(jnp.ones((St, St), jnp.float32))[None], (B, St, St))
    src_mask = jnp.ones((B, St, Se), jnp.float32)

    out = decoder_forward(params, tgt_ids, enc, tgt_mask, src_mask, n_head)
    out = jax.block_until_ready(out)
    assert out.shape == (B, St, dec_voc_size)
    assert bool(jnp.all(jnp.isfinite(out)))
    print("KERNEL_OK")
</pallas_src>

<mosaic_0001>
module attributes {stable_mosaic.version = 11 : i64} {
  func.func @_decoder_stack_kernel(%arg0: i32, %arg1: i32, %arg2: memref<1x8x32xf32, #tpu.memory_space<vmem>>, %arg3: memref<1x8x32xf32, #tpu.memory_space<vmem>>, %arg4: memref<1x8x8xf32, #tpu.memory_space<vmem>>, %arg5: memref<1x8x8xf32, #tpu.memory_space<vmem>>, %arg6: memref<1x12x32x8xbf16, #tpu.memory_space<vmem>>, %arg7: memref<1x12x1x8xf32, #tpu.memory_space<vmem>>, %arg8: memref<1x4x8x32xbf16, #tpu.memory_space<vmem>>, %arg9: memref<1x1x32xf32, #tpu.memory_space<vmem>>, %arg10: memref<1x4x32x8xbf16, #tpu.memory_space<vmem>>, %arg11: memref<1x4x1x8xf32, #tpu.memory_space<vmem>>, %arg12: memref<1x8x32x8xbf16, #tpu.memory_space<vmem>>, %arg13: memref<1x8x1x8xf32, #tpu.memory_space<vmem>>, %arg14: memref<1x4x8x32xbf16, #tpu.memory_space<vmem>>, %arg15: memref<1x1x32xf32, #tpu.memory_space<vmem>>, %arg16: memref<1x32x64xbf16, #tpu.memory_space<vmem>>, %arg17: memref<1x1x64xf32, #tpu.memory_space<vmem>>, %arg18: memref<1x64x32xbf16, #tpu.memory_space<vmem>>, %arg19: memref<1x1x32xf32, #tpu.memory_space<vmem>>, %arg20: memref<1x1x32xf32, #tpu.memory_space<vmem>>, %arg21: memref<1x1x32xf32, #tpu.memory_space<vmem>>, %arg22: memref<1x1x32xf32, #tpu.memory_space<vmem>>, %arg23: memref<1x1x32xf32, #tpu.memory_space<vmem>>, %arg24: memref<1x1x32xf32, #tpu.memory_space<vmem>>, %arg25: memref<1x1x32xf32, #tpu.memory_space<vmem>>, %arg26: memref<32x50xbf16, #tpu.memory_space<vmem>>, %arg27: memref<1x50xf32, #tpu.memory_space<vmem>>, %arg28: memref<1x8x50xf32, #tpu.memory_space<vmem>>, %arg29: memref<8x32xf32, #tpu.memory_space<vmem>>) attributes {dimension_semantics = [#tpu.dimension_semantics<parallel>, #tpu.dimension_semantics<arbitrary>], iteration_bounds = array<i64: 2, 2>, scalar_prefetch = 0 : i64, scratch_operands = 1 : i64, tpu.core_type = #tpu.core_type<tc>, window_params = [{transform_indices = @transform_0, window_bounds = array<i64: 1, 8, 32>}, {transform_indices = @transform_1, window_bounds = array<i64: 1, 8, 32>}, {transform_indices = @transform_2, window_bounds = array<i64: 1, 8, 8>}, {transform_indices = @transform_3, window_bounds = array<i64: 1, 8, 8>}, {transform_indices = @transform_4, window_bounds = array<i64: 1, 12, 32, 8>}, {transform_indices = @transform_5, window_bounds = array<i64: 1, 12, 1, 8>}, {transform_indices = @transform_6, window_bounds = array<i64: 1, 4, 8, 32>}, {transform_indices = @transform_7, window_bounds = array<i64: 1, 1, 32>}, {transform_indices = @transform_8, window_bounds = array<i64: 1, 4, 32, 8>}, {transform_indices = @transform_9, window_bounds = array<i64: 1, 4, 1, 8>}, {transform_indices = @transform_10, window_bounds = array<i64: 1, 8, 32, 8>}, {transform_indices = @transform_11, window_bounds = array<i64: 1, 8, 1, 8>}, {transform_indices = @transform_12, window_bounds = array<i64: 1, 4, 8, 32>}, {transform_indices = @transform_13, window_bounds = array<i64: 1, 1, 32>}, {transform_indices = @transform_14, window_bounds = array<i64: 1, 32, 64>}, {transform_indices = @transform_15, window_bounds = array<i64: 1, 1, 64>}, {transform_indices = @transform_16, window_bounds = array<i64: 1, 64, 32>}, {transform_indices = @transform_17, window_bounds = array<i64: 1, 1, 32>}, {transform_indices = @transform_18, window_bounds = array<i64: 1, 1, 32>}, {transform_indices = @transform_19, window_bounds = array<i64: 1, 1, 32>}, {transform_indices = @transform_20, window_bounds = array<i64: 1, 1, 32>}, {transform_indices = @transform_21, window_bounds = array<i64: 1, 1, 32>}, {transform_indices = @transform_22, window_bounds = array<i64: 1, 1, 32>}, {transform_indices = @transform_23, window_bounds = array<i64: 1, 1, 32>}, {pipeline_mode = #tpu.pipeline_mode<synchronous>, transform_indices = @transform_24, window_bounds = array<i64: 32, 50>}, {pipeline_mode = #tpu.pipeline_mode<synchronous>, transform_indices = @transform_25, window_bounds = array<i64: 1, 50>}, {transform_indices = @transform_26, window_bounds = array<i64: 1, 8, 50>}]} {
    %c0_i32 = arith.constant 0 : i32
    %0 = arith.cmpi eq, %arg1, %c0_i32 : i32
    %1 = arith.extui %0 : i1 to i32
    %c0_i32_0 = arith.constant 0 : i32
    %2 = arith.cmpi ne, %1, %c0_i32_0 : i32
    scf.if %2 {
      %c0_120 = arith.constant 0 : index
      %c0_121 = arith.constant 0 : index
      %c0_122 = arith.constant 0 : index
      %216 = vector.load %arg2[%c0_120, %c0_121, %c0_122] : memref<1x8x32xf32, #tpu.memory_space<vmem>>, vector<1x8x32xf32>
      %217 = vector.shape_cast %216 : vector<1x8x32xf32> to vector<8x32xf32>
      %c0_123 = arith.constant 0 : index
      %c0_124 = arith.constant 0 : index
      %218 = vector.load %arg29[%c0_123, %c0_124] : memref<8x32xf32, #tpu.memory_space<vmem>>, vector<8x32xf32>
      tpu.vector_store %arg29[%c0_123, %c0_124], %217 {strides = array<i32>} : memref<8x32xf32, #tpu.memory_space<vmem>>, vector<8x32xf32>,
    } else {
    }
    %c0 = arith.constant 0 : index
    %c0_1 = arith.constant 0 : index
    %3 = vector.load %arg29[%c0, %c0_1] : memref<8x32xf32, #tpu.memory_space<vmem>>, vector<8x32xf32>
    %c0_2 = arith.constant 0 : index
    %c0_3 = arith.constant 0 : index
    %c0_4 = arith.constant 0 : index
    %4 = vector.load %arg3[%c0_2, %c0_3, %c0_4] : memref<1x8x32xf32, #tpu.memory_space<vmem>>, vector<1x8x32xf32>
    %5 = vector.shape_cast %4 : vector<1x8x32xf32> to vector<8x32xf32>
    %c0_5 = arith.constant 0 : index
    %c0_6 = arith.constant 0 : index
    %c0_7 = arith.constant 0 : index
    %6 = vector.load %arg4[%c0_5, %c0_6, %c0_7] : memref<1x8x8xf32, #tpu.memory_space<vmem>>, vector<1x8x8xf32>
    %7 = vector.shape_cast %6 : vector<1x8x8xf32> to vector<8x8xf32>
    %c0_8 = arith.constant 0 : index
    %c0_9 = arith.constant 0 : index
    %c0_10 = arith.constant 0 : index
    %8 = vector.load %arg5[%c0_8, %c0_9, %c0_10] : memref<1x8x8xf32, #tpu.memory_space<vmem>>, vector<1x8x8xf32>
    %9 = vector.shape_cast %8 : vector<1x8x8xf32> to vector<8x8xf32>
    %c0_11 = arith.constant 0 : index
    %c0_12 = arith.constant 0 : index
    %c0_13 = arith.constant 0 : index
    %c0_14 = arith.constant 0 : index
    %10 = vector.load %arg6[%c0_11, %c0_12, %c0_13, %c0_14] : memref<1x12x32x8xbf16, #tpu.memory_space<vmem>>, vector<1x12x32x8xbf16>
    %11 = vector.shape_cast %10 : vector<1x12x32x8xbf16> to vector<12x32x8xbf16>
    %c0_15 = arith.constant 0 : index
    %c0_16 = arith.constant 0 : index
    %c0_17 = arith.constant 0 : index
    %c0_18 = arith.constant 0 : index
    %12 = vector.load %arg7[%c0_15, %c0_16, %c0_17, %c0_18] : memref<1x12x1x8xf32, #tpu.memory_space<vmem>>, vector<1x12x1x8xf32>
    %13 = vector.shape_cast %12 : vector<1x12x1x8xf32> to vector<12x1x8xf32>
    %14 = arith.truncf %3 : vector<8x32xf32> to vector<8x32xbf16>
    %15 = vector.shape_cast %14 : vector<8x32xbf16> to vector<1x8x32xbf16>
    %16 = vector.broadcast %15 : vector<1x8x32xbf16> to vector<12x8x32xbf16>
    "tpu.trace_start"() <{level = 10 : i32, message = "nsd,nde->nse"}> : () -> ()
    %cst = arith.constant dense<0.000000e+00> : vector<12x8x8xf32>
    %17 = tpu.matmul %16, %11, %cst {dimension_numbers = #tpu.dot_dimension_numbers<[2], [1], [1], [2], [0, 0, 0, 1, 1, 2], [0], [0]>} : vector<12x8x32xbf16>, vector<12x32x8xbf16>, vector<12x8x8xf32> -> vector<12x8x8xf32>
    "tpu.trace_stop"() : () -> ()
    %18 = vector.broadcast %13 : vector<12x1x8xf32> to vector<12x8x8xf32>
    %19 = arith.addf %17, %18 : vector<12x8x8xf32>
    %20 = vector.extract_strided_slice %19 {offsets = [0, 0, 0], sizes = [4, 8, 8], strides = [1, 1, 1]} : vector<12x8x8xf32> to vector<4x8x8xf32>
    %21 = vector.extract_strided_slice %19 {offsets = [4, 0, 0], sizes = [4, 8, 8], strides = [1, 1, 1]} : vector<12x8x8xf32> to vector<4x8x8xf32>
    %22 = vector.extract_strided_slice %19 {offsets = [8, 0, 0], sizes = [4, 8, 8], strides = [1, 1, 1]} : vector<12x8x8xf32> to vector<4x8x8xf32>
    %c0_19 = arith.constant 0 : index
    %c0_20 = arith.constant 0 : index
    %c0_21 = arith.constant 0 : index
    %c0_22 = arith.constant 0 : index
    %23 = vector.load %arg8[%c0_19, %c0_20, %c0_21, %c0_22] : memref<1x4x8x32xbf16, #tpu.memory_space<vmem>>, vector<1x4x8x32xbf16>
    %24 = vector.shape_cast %23 : vector<1x4x8x32xbf16> to vector<4x8x32xbf16>
    %c0_23 = arith.constant 0 : index
    %c0_24 = arith.constant 0 : index
    %c0_25 = arith.constant 0 : index
    %25 = vector.load %arg9[%c0_23, %c0_24, %c0_25] : memref<1x1x32xf32, #tpu.memory_space<vmem>>, vector<1x1x32xf32>
    %26 = vector.shape_cast %25 : vector<1x1x32xf32> to vector<1x32xf32>
    %cst_26 = arith.constant 0.353553385 : f32
    %27 = vector.broadcast %cst_26 : f32 to vector<4x8x8xf32>
    %28 = arith.mulf %20, %27 : vector<4x8x8xf32>
    %29 = arith.truncf %28 : vector<4x8x8xf32> to vector<4x8x8xbf16>
    %30 = arith.truncf %21 : vector<4x8x8xf32> to vector<4x8x8xbf16>
    "tpu.trace_start"() <{level = 10 : i32, message = "hqd,hkd->hqk"}> : () -> ()
    %cst_27 = arith.constant dense<0.000000e+00> : vector<4x8x8xf32>
    %31 = tpu.matmul %29, %30, %cst_27 {dimension_numbers = #tpu.dot_dimension_numbers<[2], [2], [1], [1], [0, 0, 0, 1, 1, 1], [0], [0]>} : vector<4x8x8xbf16>, vector<4x8x8xbf16>, vector<4x8x8xf32> -> vector<4x8x8xf32>
    %cst_28 = arith.constant 0.000000e+00 : f32
    "tpu.trace_stop"() : () -> ()
    %32 = vector.broadcast %cst_28 : f32 to vector<8x8xf32>
    %33 = arith.cmpf ogt, %7, %32 : vector<8x8xf32>
    %34 = vector.shape_cast %33 : vector<8x8xi1> to vector<1x8x8xi1>
    %35 = vector.shape_cast %34 : vector<1x8x8xi1> to vector<1x8x8xi1>
    %36 = vector.broadcast %35 : vector<1x8x8xi1> to vector<4x8x8xi1>
    %cst_29 = arith.constant -1.000000e+09 : f32
    %37 = vector.broadcast %cst_29 : f32 to vector<4x8x8xf32>
    %38 = arith.select %36, %31, %37 : vector<4x8x8xi1>, vector<4x8x8xf32>
    %cst_30 = arith.constant dense<0xFF800000> : vector<4x8xf32>
    %39 = vector.multi_reduction <maximumf>, %38, %cst_30 [2] : vector<4x8x8xf32> to vector<4x8xf32>
    %40 = vector.shape_cast %39 : vector<4x8xf32> to vector<4x8x1xf32>
    %41 = vector.broadcast %40 : vector<4x8x1xf32> to vector<4x8x8xf32>
    %42 = arith.subf %38, %41 : vector<4x8x8xf32>
    %43 = math.exp %42 : vector<4x8x8xf32>
    %cst_31 = arith.constant dense<0.000000e+00> : vector<4x8xf32>
    %44 = vector.multi_reduction <add>, %43, %cst_31 [2] : vector<4x8x8xf32> to vector<4x8xf32>
    %45 = vector.shape_cast %44 : vector<4x8xf32> to vector<4x8x1xf32>
    %46 = tpu.reciprocal %45 {approx = true} : vector<4x8x1xf32> -> vector<4x8x1xf32>
    %47 = vector.broadcast %46 : vector<4x8x1xf32> to vector<4x8x8xf32>
    %48 = arith.mulf %43, %47 : vector<4x8x8xf32>
    %49 = arith.truncf %48 : vector<4x8x8xf32> to vector<4x8x8xbf16>
    %50 = arith.truncf %22 : vector<4x8x8xf32> to vector<4x8x8xbf16>
    "tpu.trace_start"() <{level = 10 : i32, message = "hqk,hkd->hqd"}> : () -> ()
    %cst_32 = arith.constant dense<0.000000e+00> : vector<4x8x8xf32>
    %51 = tpu.matmul %49, %50, %cst_32 {dimension_numbers = #tpu.dot_dimension_numbers<[2], [1], [1], [2], [0, 0, 0, 1, 1, 2], [0], [0]>} : vector<4x8x8xbf16>, vector<4x8x8xbf16>, vector<4x8x8xf32> -> vector<4x8x8xf32>
    "tpu.trace_stop"() : () -> ()
    %52 = arith.truncf %51 : vector<4x8x8xf32> to vector<4x8x8xbf16>
    "tpu.trace_start"() <{level = 10 : i32, message = "hqd,hdf->hqf"}> : () -> ()
    %cst_33 = arith.constant dense<0.000000e+00> : vector<4x8x32xf32>
    %53 = tpu.matmul %52, %24, %cst_33 {dimension_numbers = #tpu.dot_dimension_numbers<[2], [1], [1], [2], [0, 0, 0, 1, 1, 2], [0], [0]>} : vector<4x8x8xbf16>, vector<4x8x32xbf16>, vector<4x8x32xf32> -> vector<4x8x32xf32>
    "tpu.trace_stop"() : () -> ()
    %cst_34 = arith.constant dense<0.000000e+00> : vector<8x32xf32>
    %54 = vector.multi_reduction <add>, %53, %cst_34 [0] : vector<4x8x32xf32> to vector<8x32xf32>
    %55 = vector.broadcast %26 : vector<1x32xf32> to vector<8x32xf32>
    %56 = arith.addf %54, %55 : vector<8x32xf32>
    %c0_35 = arith.constant 0 : index
    %c0_36 = arith.constant 0 : index
    %c0_37 = arith.constant 0 : index
    %57 = vector.load %arg20[%c0_35, %c0_36, %c0_37] : memref<1x1x32xf32, #tpu.memory_space<vmem>>, vector<1x1x32xf32>
    %58 = vector.shape_cast %57 : vector<1x1x32xf32> to vector<1x32xf32>
    %c0_38 = arith.constant 0 : index
    %c0_39 = arith.constant 0 : index
    %c0_40 = arith.constant 0 : index
    %59 = vector.load %arg21[%c0_38, %c0_39, %c0_40] : memref<1x1x32xf32, #tpu.memory_space<vmem>>, vector<1x1x32xf32>
    %60 = vector.shape_cast %59 : vector<1x1x32xf32> to vector<1x32xf32>
    %61 = arith.addf %56, %3 : vector<8x32xf32>
    %cst_41 = arith.constant dense<0.000000e+00> : vector<8xf32>
    %62 = vector.multi_reduction <add>, %61, %cst_41 [1] : vector<8x32xf32> to vector<8xf32>
    %63 = vector.shape_cast %62 : vector<8xf32> to vector<8x1xf32>
    %cst_42 = arith.constant 3.200000e+01 : f32
    %64 = vector.broadcast %cst_42 : f32 to vector<8x1xf32>
    %65 = arith.divf %63, %64 : vector<8x1xf32>
    %66 = vector.broadcast %65 : vector<8x1xf32> to vector<8x32xf32>
    %67 = arith.subf %61, %66 : vector<8x32xf32>
    %68 = arith.mulf %67, %67 : vector<8x32xf32>
    %cst_43 = arith.constant dense<0.000000e+00> : vector<8xf32>
    %69 = vector.multi_reduction <add>, %68, %cst_43 [1] : vector<8x32xf32> to vector<8xf32>
    %70 = vector.shape_cast %69 : vector<8xf32> to vector<8x1xf32>
    %cst_44 = arith.constant 3.200000e+01 : f32
    %71 = vector.broadcast %cst_44 : f32 to vector<8x1xf32>
    %72 = arith.divf %70, %71 : vector<8x1xf32>
    %73 = vector.broadcast %65 : vector<8x1xf32> to vector<8x32xf32>
    %74 = arith.subf %61, %73 : vector<8x32xf32>
    %cst_45 = arith.constant 9.99999974E-6 : f32
    %75 = vector.broadcast %cst_45 : f32 to vector<8x1xf32>
    %76 = arith.addf %72, %75 : vector<8x1xf32>
    %77 = math.rsqrt %76 : vector<8x1xf32>
    %78 = vector.broadcast %77 : vector<8x1xf32> to vector<8x32xf32>
    %79 = arith.mulf %74, %78 : vector<8x32xf32>
    %80 = vector.broadcast %58 : vector<1x32xf32> to vector<8x32xf32>
    %81 = arith.mulf %79, %80 : vector<8x32xf32>
    %82 = vector.broadcast %60 : vector<1x32xf32> to vector<8x32xf32>
    %83 = arith.addf %81, %82 : vector<8x32xf32>
    %c0_46 = arith.constant 0 : index
    %c0_47 = arith.constant 0 : index
    %c0_48 = arith.constant 0 : index
    %c0_49 = arith.constant 0 : index
    %84 = vector.load %arg10[%c0_46, %c0_47, %c0_48, %c0_49] : memref<1x4x32x8xbf16, #tpu.memory_space<vmem>>, vector<1x4x32x8xbf16>
    %85 = vector.shape_cast %84 : vector<1x4x32x8xbf16> to vector<4x32x8xbf16>
    %c0_50 = arith.constant 0 : index
    %c0_51 = arith.constant 0 : index
    %c0_52 = arith.constant 0 : index
    %c0_53 = arith.constant 0 : index
    %86 = vector.load %arg11[%c0_50, %c0_51, %c0_52, %c0_53] : memref<1x4x1x8xf32, #tpu.memory_space<vmem>>, vector<1x4x1x8xf32>
    %87 = vector.shape_cast %86 : vector<1x4x1x8xf32> to vector<4x1x8xf32>
    %88 = arith.truncf %83 : vector<8x32xf32> to vector<8x32xbf16>
    %89 = vector.shape_cast %88 : vector<8x32xbf16> to vector<1x8x32xbf16>
    %90 = vector.broadcast %89 : vector<1x8x32xbf16> to vector<4x8x32xbf16>
    "tpu.trace_start"() <{level = 10 : i32, message = "nsd,nde->nse"}> : () -> ()
    %cst_54 = arith.constant dense<0.000000e+00> : vector<4x8x8xf32>
    %91 = tpu.matmul %90, %85, %cst_54 {dimension_numbers = #tpu.dot_dimension_numbers<[2], [1], [1], [2], [0, 0, 0, 1, 1, 2], [0], [0]>} : vector<4x8x32xbf16>, vector<4x32x8xbf16>, vector<4x8x8xf32> -> vector<4x8x8xf32>
    "tpu.trace_stop"() : () -> ()
    %92 = vector.broadcast %87 : vector<4x1x8xf32> to vector<4x8x8xf32>
    %93 = arith.addf %91, %92 : vector<4x8x8xf32>
    %c0_55 = arith.constant 0 : index
    %c0_56 = arith.constant 0 : index
    %c0_57 = arith.constant 0 : index
    %c0_58 = arith.constant 0 : index
    %94 = vector.load %arg12[%c0_55, %c0_56, %c0_57, %c0_58] : memref<1x8x32x8xbf16, #tpu.memory_space<vmem>>, vector<1x8x32x8xbf16>
    %95 = vector.shape_cast %94 : vector<1x8x32x8xbf16> to vector<8x32x8xbf16>
    %c0_59 = arith.constant 0 : index
    %c0_60 = arith.constant 0 : index
    %c0_61 = arith.constant 0 : index
    %c0_62 = arith.constant 0 : index
    %96 = vector.load %arg13[%c0_59, %c0_60, %c0_61, %c0_62] : memref<1x8x1x8xf32, #tpu.memory_space<vmem>>, vector<1x8x1x8xf32>
    %97 = vector.shape_cast %96 : vector<1x8x1x8xf32> to vector<8x1x8xf32>
    %98 = arith.truncf %5 : vector<8x32xf32> to vector<8x32xbf16>
    %99 = vector.shape_cast %98 : vector<8x32xbf16> to vector<1x8x32xbf16>
    %100 = vector.broadcast %99 : vector<1x8x32xbf16> to vector<8x8x32xbf16>
    "tpu.trace_start"() <{level = 10 : i32, message = "nsd,nde->nse"}> : () -> ()
    %cst_63 = arith.constant dense<0.000000e+00> : vector<8x8x8xf32>
    %101 = tpu.matmul %100, %95, %cst_63 {dimension_numbers = #tpu.dot_dimension_numbers<[2], [1], [1], [2], [0, 0, 0, 1, 1, 2], [0], [0]>} : vector<8x8x32xbf16>, vector<8x32x8xbf16>, vector<8x8x8xf32> -> vector<8x8x8xf32>
    "tpu.trace_stop"() : () -> ()
    %102 = vector.broadcast %97 : vector<8x1x8xf32> to vector<8x8x8xf32>
    %103 = arith.addf %101, %102 : vector<8x8x8xf32>
    %104 = vector.extract_strided_slice %103 {offsets = [0, 0, 0], sizes = [4, 8, 8], strides = [1, 1, 1]} : vector<8x8x8xf32> to vector<4x8x8xf32>
    %105 = vector.extract_strided_slice %103 {offsets = [4, 0, 0], sizes = [4, 8, 8], strides = [1, 1, 1]} : vector<8x8x8xf32> to vector<4x8x8xf32>
    %c0_64 = arith.constant 0 : index
    %c0_65 = arith.constant 0 : index
    %c0_66 = arith.constant 0 : index
    %c0_67 = arith.constant 0 : index
    %106 = vector.load %arg14[%c0_64, %c0_65, %c0_66, %c0_67] : memref<1x4x8x32xbf16, #tpu.memory_space<vmem>>, vector<1x4x8x32xbf16>
    %107 = vector.shape_cast %106 : vector<1x4x8x32xbf16> to vector<4x8x32xbf16>
    %c0_68 = arith.constant 0 : index
    %c0_69 = arith.constant 0 : index
    %c0_70 = arith.constant 0 : index
    %108 = vector.load %arg15[%c0_68, %c0_69, %c0_70] : memref<1x1x32xf32, #tpu.memory_space<vmem>>, vector<1x1x32xf32>
    %109 = vector.shape_cast %108 : vector<1x1x32xf32> to vector<1x32xf32>
    %cst_71 = arith.constant 0.353553385 : f32
    %110 = vector.broadcast %cst_71 : f32 to vector<4x8x8xf32>
    %111 = arith.mulf %93, %110 : vector<4x8x8xf32>
    %112 = arith.truncf %111 : vector<4x8x8xf32> to vector<4x8x8xbf16>
    %113 = arith.truncf %104 : vector<4x8x8xf32> to vector<4x8x8xbf16>
    "tpu.trace_start"() <{level = 10 : i32, message = "hqd,hkd->hqk"}> : () -> ()
    %cst_72 = arith.constant dense<0.000000e+00> : vector<4x8x8xf32>
    %114 = tpu.matmul %112, %113, %cst_72 {dimension_numbers = #tpu.dot_dimension_numbers<[2], [2], [1], [1], [0, 0, 0, 1, 1, 1], [0], [0]>} : vector<4x8x8xbf16>, vector<4x8x8xbf16>, vector<4x8x8xf32> -> vector<4x8x8xf32>
    %cst_73 = arith.constant 0.000000e+00 : f32
    "tpu.trace_stop"() : () -> ()
    %115 = vector.broadcast %cst_73 : f32 to vector<8x8xf32>
    %116 = arith.cmpf ogt, %9, %115 : vector<8x8xf32>
    %117 = vector.shape_cast %116 : vector<8x8xi1> to vector<1x8x8xi1>
    %118 = vector.shape_cast %117 : vector<1x8x8xi1> to vector<1x8x8xi1>
    %119 = vector.broadcast %118 : vector<1x8x8xi1> to vector<4x8x8xi1>
    %cst_74 = arith.constant -1.000000e+09 : f32
    %120 = vector.broadcast %cst_74 : f32 to vector<4x8x8xf32>
    %121 = arith.select %119, %114, %120 : vector<4x8x8xi1>, vector<4x8x8xf32>
    %cst_75 = arith.constant dense<0xFF800000> : vector<4x8xf32>
    %122 = vector.multi_reduction <maximumf>, %121, %cst_75 [2] : vector<4x8x8xf32> to vector<4x8xf32>
    %123 = vector.shape_cast %122 : vector<4x8xf32> to vector<4x8x1xf32>
    %124 = vector.broadcast %123 : vector<4x8x1xf32> to vector<4x8x8xf32>
    %125 = arith.subf %121, %124 : vector<4x8x8xf32>
    %126 = math.exp %125 : vector<4x8x8xf32>
    %cst_76 = arith.constant dense<0.000000e+00> : vector<4x8xf32>
    %127 = vector.multi_reduction <add>, %126, %cst_76 [2] : vector<4x8x8xf32> to vector<4x8xf32>
    %128 = vector.shape_cast %127 : vector<4x8xf32> to vector<4x8x1xf32>
    %129 = tpu.reciprocal %128 {approx = true} : vector<4x8x1xf32> -> vector<4x8x1xf32>
    %130 = vector.broadcast %129 : vector<4x8x1xf32> to vector<4x8x8xf32>
    %131 = arith.mulf %126, %130 : vector<4x8x8xf32>
    %132 = arith.truncf %131 : vector<4x8x8xf32> to vector<4x8x8xbf16>
    %133 = arith.truncf %105 : vector<4x8x8xf32> to vector<4x8x8xbf16>
    "tpu.trace_start"() <{level = 10 : i32, message = "hqk,hkd->hqd"}> : () -> ()
    %cst_77 = arith.constant dense<0.000000e+00> : vector<4x8x8xf32>
    %134 = tpu.matmul %132, %133, %cst_77 {dimension_numbers = #tpu.dot_dimension_numbers<[2], [1], [1], [2], [0, 0, 0, 1, 1, 2], [0], [0]>} : vector<4x8x8xbf16>, vector<4x8x8xbf16>, vector<4x8x8xf32> -> vector<4x8x8xf32>
    "tpu.trace_stop"() : () -> ()
    %135 = arith.truncf %134 : vector<4x8x8xf32> to vector<4x8x8xbf16>
    "tpu.trace_start"() <{level = 10 : i32, message = "hqd,hdf->hqf"}> : () -> ()
    %cst_78 = arith.constant dense<0.000000e+00> : vector<4x8x32xf32>
    %136 = tpu.matmul %135, %107, %cst_78 {dimension_numbers = #tpu.dot_dimension_numbers<[2], [1], [1], [2], [0, 0, 0, 1, 1, 2], [0], [0]>} : vector<4x8x8xbf16>, vector<4x8x32xbf16>, vector<4x8x32xf32> -> vector<4x8x32xf32>
    "tpu.trace_stop"() : () -> ()
    %cst_79 = arith.constant dense<0.000000e+00> : vector<8x32xf32>
    %137 = vector.multi_reduction <add>, %136, %cst_79 [0] : vector<4x8x32xf32> to vector<8x32xf32>
    %138 = vector.broadcast %109 : vector<1x32xf32> to vector<8x32xf32>
    %139 = arith.addf %137, %138 : vector<8x32xf32>
    %c0_80 = arith.constant 0 : index
    %c0_81 = arith.constant 0 : index
    %c0_82 = arith.constant 0 : index
    %140 = vector.load %arg22[%c0_80, %c0_81, %c0_82] : memref<1x1x32xf32, #tpu.memory_space<vmem>>, vector<1x1x32xf32>
    %141 = vector.shape_cast %140 : vector<1x1x32xf32> to vector<1x32xf32>
    %c0_83 = arith.constant 0 : index
    %c0_84 = arith.constant 0 : index
    %c0_85 = arith.constant 0 : index
    %142 = vector.load %arg23[%c0_83, %c0_84, %c0_85] : memref<1x1x32xf32, #tpu.memory_space<vmem>>, vector<1x1x32xf32>
    %143 = vector.shape_cast %142 : vector<1x1x32xf32> to vector<1x32xf32>
    %144 = arith.addf %139, %83 : vector<8x32xf32>
    %cst_86 = arith.constant dense<0.000000e+00> : vector<8xf32>
    %145 = vector.multi_reduction <add>, %144, %cst_86 [1] : vector<8x32xf32> to vector<8xf32>
    %146 = vector.shape_cast %145 : vector<8xf32> to vector<8x1xf32>
    %cst_87 = arith.constant 3.200000e+01 : f32
    %147 = vector.broadcast %cst_87 : f32 to vector<8x1xf32>
    %148 = arith.divf %146, %147 : vector<8x1xf32>
    %149 = vector.broadcast %148 : vector<8x1xf32> to vector<8x32xf32>
    %150 = arith.subf %144, %149 : vector<8x32xf32>
    %151 = arith.mulf %150, %150 : vector<8x32xf32>
    %cst_88 = arith.constant dense<0.000000e+00> : vector<8xf32>
    %152 = vector.multi_reduction <add>, %151, %cst_88 [1] : vector<8x32xf32> to vector<8xf32>
    %153 = vector.shape_cast %152 : vector<8xf32> to vector<8x1xf32>
    %cst_89 = arith.constant 3.200000e+01 : f32
    %154 = vector.broadcast %cst_89 : f32 to vector<8x1xf32>
    %155 = arith.divf %153, %154 : vector<8x1xf32>
    %156 = vector.broadcast %148 : vector<8x1xf32> to vector<8x32xf32>
    %157 = arith.subf %144, %156 : vector<8x32xf32>
    %cst_90 = arith.constant 9.99999974E-6 : f32
    %158 = vector.broadcast %cst_90 : f32 to vector<8x1xf32>
    %159 = arith.addf %155, %158 : vector<8x1xf32>
    %160 = math.rsqrt %159 : vector<8x1xf32>
    %161 = vector.broadcast %160 : vector<8x1xf32> to vector<8x32xf32>
    %162 = arith.mulf %157, %161 : vector<8x32xf32>
    %163 = vector.broadcast %141 : vector<1x32xf32> to vector<8x32xf32>
    %164 = arith.mulf %162, %163 : vector<8x32xf32>
    %165 = vector.broadcast %143 : vector<1x32xf32> to vector<8x32xf32>
    %166 = arith.addf %164, %165 : vector<8x32xf32>
    %167 = arith.truncf %166 : vector<8x32xf32> to vector<8x32xbf16>
    %c0_91 = arith.constant 0 : index
    %c0_92 = arith.constant 0 : index
    %c0_93 = arith.constant 0 : index
    %168 = vector.load %arg16[%c0_91, %c0_92, %c0_93] : memref<1x32x64xbf16, #tpu.memory_space<vmem>>, vector<1x32x64xbf16>
    %169 = vector.shape_cast %168 : vector<1x32x64xbf16> to vector<32x64xbf16>
    %cst_94 = arith.constant dense<0.000000e+00> : vector<8x64xf32>
    %170 = tpu.matmul %167, %169, %cst_94 {dimension_numbers = #tpu.dot_dimension_numbers<[1], [0], [0], [1], [0, 0, 1, 1], [], []>} : vector<8x32xbf16>, vector<32x64xbf16>, vector<8x64xf32> -> vector<8x64xf32>
    %c0_95 = arith.constant 0 : index
    %c0_96 = arith.constant 0 : index
    %c0_97 = arith.constant 0 : index
    %171 = vector.load %arg17[%c0_95, %c0_96, %c0_97] : memref<1x1x64xf32, #tpu.memory_space<vmem>>, vector<1x1x64xf32>
    %172 = vector.shape_cast %171 : vector<1x1x64xf32> to vector<1x64xf32>
    %173 = vector.broadcast %172 : vector<1x64xf32> to vector<8x64xf32>
    %174 = arith.addf %170, %173 : vector<8x64xf32>
    %cst_98 = arith.constant 0.000000e+00 : f32
    %175 = vector.broadcast %cst_98 : f32 to vector<8x64xf32>
    %176 = arith.maximumf %174, %175 : vector<8x64xf32>
    %177 = arith.truncf %176 : vector<8x64xf32> to vector<8x64xbf16>
    %c0_99 = arith.constant 0 : index
    %c0_100 = arith.constant 0 : index
    %c0_101 = arith.constant 0 : index
    %178 = vector.load %arg18[%c0_99, %c0_100, %c0_101] : memref<1x64x32xbf16, #tpu.memory_space<vmem>>, vector<1x64x32xbf16>
    %179 = vector.shape_cast %178 : vector<1x64x32xbf16> to vector<64x32xbf16>
    %cst_102 = arith.constant dense<0.000000e+00> : vector<8x32xf32>
    %180 = tpu.matmul %177, %179, %cst_102 {dimension_numbers = #tpu.dot_dimension_numbers<[1], [0], [0], [1], [0, 0, 1, 1], [], []>} : vector<8x64xbf16>, vector<64x32xbf16>, vector<8x32xf32> -> vector<8x32xf32>
    %c0_103 = arith.constant 0 : index
    %c0_104 = arith.constant 0 : index
    %c0_105 = arith.constant 0 : index
    %181 = vector.load %arg19[%c0_103, %c0_104, %c0_105] : memref<1x1x32xf32, #tpu.memory_space<vmem>>, vector<1x1x32xf32>
    %182 = vector.shape_cast %181 : vector<1x1x32xf32> to vector<1x32xf32>
    %183 = vector.broadcast %182 : vector<1x32xf32> to vector<8x32xf32>
    %184 = arith.addf %180, %183 : vector<8x32xf32>
    %c0_106 = arith.constant 0 : index
    %c0_107 = arith.constant 0 : index
    %c0_108 = arith.constant 0 : index
    %185 = vector.load %arg24[%c0_106, %c0_107, %c0_108] : memref<1x1x32xf32, #tpu.memory_space<vmem>>, vector<1x1x32xf32>
    %186 = vector.shape_cast %185 : vector<1x1x32xf32> to vector<1x32xf32>
    %c0_109 = arith.constant 0 : index
    %c0_110 = arith.constant 0 : index
    %c0_111 = arith.constant 0 : index
    %187 = vector.load %arg25[%c0_109, %c0_110, %c0_111] : memref<1x1x32xf32, #tpu.memory_space<vmem>>, vector<1x1x32xf32>
    %188 = vector.shape_cast %187 : vector<1x1x32xf32> to vector<1x32xf32>
    %189 = arith.addf %184, %166 : vector<8x32xf32>
    %cst_112 = arith.constant dense<0.000000e+00> : vector<8xf32>
    %190 = vector.multi_reduction <add>, %189, %cst_112 [1] : vector<8x32xf32> to vector<8xf32>
    %191 = vector.shape_cast %190 : vector<8xf32> to vector<8x1xf32>
    %cst_113 = arith.constant 3.200000e+01 : f32
    %192 = vector.broadcast %cst_113 : f32 to vector<8x1xf32>
    %193 = arith.divf %191, %192 : vector<8x1xf32>
    %194 = vector.broadcast %193 : vector<8x1xf32> to vector<8x32xf32>
    %195 = arith.subf %189, %194 : vector<8x32xf32>
    %196 = arith.mulf %195, %195 : vector<8x32xf32>
    %cst_114 = arith.constant dense<0.000000e+00> : vector<8xf32>
    %197 = vector.multi_reduction <add>, %196, %cst_114 [1] : vector<8x32xf32> to vector<8xf32>
    %198 = vector.shape_cast %197 : vector<8xf32> to vector<8x1xf32>
    %cst_115 = arith.constant 3.200000e+01 : f32
    %199 = vector.broadcast %cst_115 : f32 to vector<8x1xf32>
    %200 = arith.divf %198, %199 : vector<8x1xf32>
    %201 = vector.broadcast %193 : vector<8x1xf32> to vector<8x32xf32>
    %202 = arith.subf %189, %201 : vector<8x32xf32>
    %cst_116 = arith.constant 9.99999974E-6 : f32
    %203 = vector.broadcast %cst_116 : f32 to vector<8x1xf32>
    %204 = arith.addf %200, %203 : vector<8x1xf32>
    %205 = math.rsqrt %204 : vector<8x1xf32>
    %206 = vector.broadcast %205 : vector<8x1xf32> to vector<8x32xf32>
    %207 = arith.mulf %202, %206 : vector<8x32xf32>
    %208 = vector.broadcast %186 : vector<1x32xf32> to vector<8x32xf32>
    %209 = arith.mulf %207, %208 : vector<8x32xf32>
    %210 = vector.broadcast %188 : vector<1x32xf32> to vector<8x32xf32>
    %211 = arith.addf %209, %210 : vector<8x32xf32>
    %c0_117 = arith.constant 0 : index
    %c0_118 = arith.constant 0 : index
    %212 = vector.load %arg29[%c0_117, %c0_118] : memref<8x32xf32, #tpu.memory_space<vmem>>, vector<8x32xf32>
    tpu.vector_store %arg29[%c0_117, %c0_118], %211 {strides = array<i32>} : memref<8x32xf32, #tpu.memory_space<vmem>>, vector<8x32xf32>,
    %c1_i32 = arith.constant 1 : i32
    %213 = arith.cmpi eq, %arg1, %c1_i32 : i32
    %214 = arith.extui %213 : i1 to i32
    %c0_i32_119 = arith.constant 0 : i32
    %215 = arith.cmpi ne, %214, %c0_i32_119 : i32
    scf.if %215 {
      %216 = arith.truncf %211 : vector<8x32xf32> to vector<8x32xbf16>
      %c0_120 = arith.constant 0 : index
      %c0_121 = arith.constant 0 : index
      %217 = vector.load %arg26[%c0_120, %c0_121] : memref<32x50xbf16, #tpu.memory_space<vmem>>, vector<32x50xbf16>
      %cst_122 = arith.constant dense<0.000000e+00> : vector<8x50xf32>
      %218 = tpu.matmul %216, %217, %cst_122 {dimension_numbers = #tpu.dot_dimension_numbers<[1], [0], [0], [1], [0, 0, 1, 1], [], []>} : vector<8x32xbf16>, vector<32x50xbf16>, vector<8x50xf32> -> vector<8x50xf32>
      %c0_123 = arith.constant 0 : index
      %c0_124 = arith.constant 0 : index
      %219 = vector.load %arg27[%c0_123, %c0_124] : memref<1x50xf32, #tpu.memory_space<vmem>>, vector<1x50xf32>
      %220 = vector.broadcast %219 : vector<1x50xf32> to vector<8x50xf32>
      %221 = arith.addf %218, %220 : vector<8x50xf32>
      %c0_125 = arith.constant 0 : index
      %c0_126 = arith.constant 0 : index
      %c0_127 = arith.constant 0 : index
      %222 = vector.load %arg28[%c0_125, %c0_126, %c0_127] : memref<1x8x50xf32, #tpu.memory_space<vmem>>, vector<1x8x50xf32>
      %223 = vector.shape_cast %222 : vector<1x8x50xf32> to vector<8x50xf32>
      %224 = vector.shape_cast %221 : vector<8x50xf32> to vector<1x8x50xf32>
      tpu.vector_store %arg28[%c0_125, %c0_126, %c0_127], %224 {strides = array<i32>} : memref<1x8x50xf32, #tpu.memory_space<vmem>>, vector<1x8x50xf32>,
    } else {
    }
    return
  }
  func.func @transform_0(%arg0: i32, %arg1: i32) -> (i32, i32, i32) {
    %c0_i32 = arith.constant 0 : i32
    %c0_i32_0 = arith.constant 0 : i32
    %c0_i32_1 = arith.constant 0 : i32
    return %arg0, %c0_i32, %c0_i32_0 : i32, i32, i32
  }
  func.func @transform_1(%arg0: i32, %arg1: i32) -> (i32, i32, i32) {
    %c0_i32 = arith.constant 0 : i32
    %c0_i32_0 = arith.constant 0 : i32
    %c0_i32_1 = arith.constant 0 : i32
    return %arg0, %c0_i32, %c0_i32_0 : i32, i32, i32
  }
  func.func @transform_2(%arg0: i32, %arg1: i32) -> (i32, i32, i32) {
    %c0_i32 = arith.constant 0 : i32
    %c0_i32_0 = arith.constant 0 : i32
    %c0_i32_1 = arith.constant 0 : i32
    return %arg0, %c0_i32, %c0_i32_0 : i32, i32, i32
  }
  func.func @transform_3(%arg0: i32, %arg1: i32) -> (i32, i32, i32) {
    %c0_i32 = arith.constant 0 : i32
    %c0_i32_0 = arith.constant 0 : i32
    %c0_i32_1 = arith.constant 0 : i32
    return %arg0, %c0_i32, %c0_i32_0 : i32, i32, i32
  }
  func.func @transform_4(%arg0: i32, %arg1: i32) -> (i32, i32, i32, i32) {
    %c0_i32 = arith.constant 0 : i32
    %c0_i32_0 = arith.constant 0 : i32
    %c0_i32_1 = arith.constant 0 : i32
    %c0_i32_2 = arith.constant 0 : i32
    return %arg1, %c0_i32, %c0_i32_0, %c0_i32_1 : i32, i32, i32, i32
  }
  func.func @transform_5(%arg0: i32, %arg1: i32) -> (i32, i32, i32, i32) {
    %c0_i32 = arith.constant 0 : i32
    %c0_i32_0 = arith.constant 0 : i32
    %c0_i32_1 = arith.constant 0 : i32
    %c0_i32_2 = arith.constant 0 : i32
    return %arg1, %c0_i32, %c0_i32_0, %c0_i32_1 : i32, i32, i32, i32
  }
  func.func @transform_6(%arg0: i32, %arg1: i32) -> (i32, i32, i32, i32) {
    %c0_i32 = arith.constant 0 : i32
    %c0_i32_0 = arith.constant 0 : i32
    %c0_i32_1 = arith.constant 0 : i32
    %c0_i32_2 = arith.constant 0 : i32
    return %arg1, %c0_i32, %c0_i32_0, %c0_i32_1 : i32, i32, i32, i32
  }
  func.func @transform_7(%arg0: i32, %arg1: i32) -> (i32, i32, i32) {
    %c0_i32 = arith.constant 0 : i32
    %c0_i32_0 = arith.constant 0 : i32
    %c0_i32_1 = arith.constant 0 : i32
    return %arg1, %c0_i32, %c0_i32_0 : i32, i32, i32
  }
  func.func @transform_8(%arg0: i32, %arg1: i32) -> (i32, i32, i32, i32) {
    %c0_i32 = arith.constant 0 : i32
    %c0_i32_0 = arith.constant 0 : i32
    %c0_i32_1 = arith.constant 0 : i32
    %c0_i32_2 = arith.constant 0 : i32
    return %arg1, %c0_i32, %c0_i32_0, %c0_i32_1 : i32, i32, i32, i32
  }
  func.func @transform_9(%arg0: i32, %arg1: i32) -> (i32, i32, i32, i32) {
    %c0_i32 = arith.constant 0 : i32
    %c0_i32_0 = arith.constant 0 : i32
    %c0_i32_1 = arith.constant 0 : i32
    %c0_i32_2 = arith.constant 0 : i32
    return %arg1, %c0_i32, %c0_i32_0, %c0_i32_1 : i32, i32, i32, i32
  }
  func.func @transform_10(%arg0: i32, %arg1: i32) -> (i32, i32, i32, i32) {
    %c0_i32 = arith.constant 0 : i32
    %c0_i32_0 = arith.constant 0 : i32
    %c0_i32_1 = arith.constant 0 : i32
    %c0_i32_2 = arith.constant 0 : i32
    return %arg1, %c0_i32, %c0_i32_0, %c0_i32_1 : i32, i32, i32, i32
  }
  func.func @transform_11(%arg0: i32, %arg1: i32) -> (i32, i32, i32, i32) {
    %c0_i32 = arith.constant 0 : i32
    %c0_i32_0 = arith.constant 0 : i32
    %c0_i32_1 = arith.constant 0 : i32
    %c0_i32_2 = arith.constant 0 : i32
    return %arg1, %c0_i32, %c0_i32_0, %c0_i32_1 : i32, i32, i32, i32
  }
  func.func @transform_12(%arg0: i32, %arg1: i32) -> (i32, i32, i32, i32) {
    %c0_i32 = arith.constant 0 : i32
    %c0_i32_0 = arith.constant 0 : i32
    %c0_i32_1 = arith.constant 0 : i32
    %c0_i32_2 = arith.constant 0 : i32
    return %arg1, %c0_i32, %c0_i32_0, %c0_i32_1 : i32, i32, i32, i32
  }
  func.func @transform_13(%arg0: i32, %arg1: i32) -> (i32, i32, i32) {
    %c0_i32 = arith.constant 0 : i32
    %c0_i32_0 = arith.constant 0 : i32
    %c0_i32_1 = arith.constant 0 : i32
    return %arg1, %c0_i32, %c0_i32_0 : i32, i32, i32
  }
  func.func @transform_14(%arg0: i32, %arg1: i32) -> (i32, i32, i32) {
    %c0_i32 = arith.constant 0 : i32
    %c0_i32_0 = arith.constant 0 : i32
    %c0_i32_1 = arith.constant 0 : i32
    return %arg1, %c0_i32, %c0_i32_0 : i32, i32, i32
  }
  func.func @transform_15(%arg0: i32, %arg1: i32) -> (i32, i32, i32) {
    %c0_i32 = arith.constant 0 : i32
    %c0_i32_0 = arith.constant 0 : i32
    %c0_i32_1 = arith.constant 0 : i32
    return %arg1, %c0_i32, %c0_i32_0 : i32, i32, i32
  }
  func.func @transform_16(%arg0: i32, %arg1: i32) -> (i32, i32, i32) {
    %c0_i32 = arith.constant 0 : i32
    %c0_i32_0 = arith.constant 0 : i32
    %c0_i32_1 = arith.constant 0 : i32
    return %arg1, %c0_i32, %c0_i32_0 : i32, i32, i32
  }
  func.func @transform_17(%arg0: i32, %arg1: i32) -> (i32, i32, i32) {
    %c0_i32 = arith.constant 0 : i32
    %c0_i32_0 = arith.constant 0 : i32
    %c0_i32_1 = arith.constant 0 : i32
    return %arg1, %c0_i32, %c0_i32_0 : i32, i32, i32
  }
  func.func @transform_18(%arg0: i32, %arg1: i32) -> (i32, i32, i32) {
    %c0_i32 = arith.constant 0 : i32
    %c0_i32_0 = arith.constant 0 : i32
    %c0_i32_1 = arith.constant 0 : i32
    return %arg1, %c0_i32, %c0_i32_0 : i32, i32, i32
  }
  func.func @transform_19(%arg0: i32, %arg1: i32) -> (i32, i32, i32) {
    %c0_i32 = arith.constant 0 : i32
    %c0_i32_0 = arith.constant 0 : i32
    %c0_i32_1 = arith.constant 0 : i32
    return %arg1, %c0_i32, %c0_i32_0 : i32, i32, i32
  }
  func.func @transform_20(%arg0: i32, %arg1: i32) -> (i32, i32, i32) {
    %c0_i32 = arith.constant 0 : i32
    %c0_i32_0 = arith.constant 0 : i32
    %c0_i32_1 = arith.constant 0 : i32
    return %arg1, %c0_i32, %c0_i32_0 : i32, i32, i32
  }
  func.func @transform_21(%arg0: i32, %arg1: i32) -> (i32, i32, i32) {
    %c0_i32 = arith.constant 0 : i32
    %c0_i32_0 = arith.constant 0 : i32
    %c0_i32_1 = arith.constant 0 : i32
    return %arg1, %c0_i32, %c0_i32_0 : i32, i32, i32
  }
  func.func @transform_22(%arg0: i32, %arg1: i32) -> (i32, i32, i32) {
    %c0_i32 = arith.constant 0 : i32
    %c0_i32_0 = arith.constant 0 : i32
    %c0_i32_1 = arith.constant 0 : i32
    return %arg1, %c0_i32, %c0_i32_0 : i32, i32, i32
  }
  func.func @transform_23(%arg0: i32, %arg1: i32) -> (i32, i32, i32) {
    %c0_i32 = arith.constant 0 : i32
    %c0_i32_0 = arith.constant 0 : i32
    %c0_i32_1 = arith.constant 0 : i32
    return %arg1, %c0_i32, %c0_i32_0 : i32, i32, i32
  }
  func.func @transform_24(%arg0: i32, %arg1: i32) -> (i32, i32) {
    %c0_i32 = arith.constant 0 : i32
    %c0_i32_0 = arith.constant 0 : i32
    %c0_i32_1 = arith.constant 0 : i32
    return %c0_i32, %c0_i32_0 : i32, i32
  }
  func.func @transform_25(%arg0: i32, %arg1: i32) -> (i32, i32) {
    %c0_i32 = arith.constant 0 : i32
    %c0_i32_0 = arith.constant 0 : i32
    %c0_i32_1 = arith.constant 0 : i32
    return %c0_i32, %c0_i32_0 : i32, i32
  }
  func.func @transform_26(%arg0: i32, %arg1: i32) -> (i32, i32, i32) {
    %c0_i32 = arith.constant 0 : i32
    %c0_i32_0 = arith.constant 0 : i32
    %c0_i32_1 = arith.constant 0 : i32
    return %arg0, %c0_i32, %c0_i32_0 : i32, i32, i32
  }
}

</mosaic_0001>

<llo_original>
// kernel: tpu_custom_call.1
$region0: #{tpu_custom_call.1}
  #allocation0 [shape = 'u32[]', space=smem, size = 0x4, offset = 0x4, fixed_abs, tag = 'smem constant byte address 0x4 - core index']
  #allocation1 [shape = 'u32[72,128]{1,0:T(1,128)}', space=vmem, size = 0x9000, scoped, tag = 'internal scratch']
  #allocation2 [shape = 'f32[8,32]{1,0:T(8,128)}', space=vmem, size = 0x1000, scoped, tag = 'scratch operand']
  %s0 = inlined_call_operand.vmem [shape: f32[2,8,32], index: 0, kind: input, shape index: {}]
  %s1 = inlined_call_operand.vmem [shape: f32[2,8,32], index: 1, kind: input, shape index: {}]
  %s2 = inlined_call_operand.vmem [shape: f32[2,8,8], index: 2, kind: input, shape index: {}]
  %s3 = inlined_call_operand.vmem [shape: f32[2,8,8], index: 3, kind: input, shape index: {}]
  %s4 = inlined_call_operand.vmem [shape: bf16[2,12,32,8], index: 4, kind: input, shape index: {}]
  %s5 = inlined_call_operand.vmem [shape: f32[2,12,1,8], index: 5, kind: input, shape index: {}]
  %s6 = inlined_call_operand.vmem [shape: bf16[2,4,8,32], index: 6, kind: input, shape index: {}]
  %s7 = inlined_call_operand.vmem [shape: f32[2,1,32], index: 7, kind: input, shape index: {}]
  %s8 = inlined_call_operand.vmem [shape: bf16[2,4,32,8], index: 8, kind: input, shape index: {}]
  %s9 = inlined_call_operand.vmem [shape: f32[2,4,1,8], index: 9, kind: input, shape index: {}]
  %s10 = inlined_call_operand.vmem [shape: bf16[2,8,32,8], index: 10, kind: input, shape index: {}]
  %s11 = inlined_call_operand.vmem [shape: f32[2,8,1,8], index: 11, kind: input, shape index: {}]
  %s12 = inlined_call_operand.vmem [shape: bf16[2,4,8,32], index: 12, kind: input, shape index: {}]
  %s13 = inlined_call_operand.vmem [shape: f32[2,1,32], index: 13, kind: input, shape index: {}]
  %s14 = inlined_call_operand.vmem [shape: bf16[2,32,64], index: 14, kind: input, shape index: {}]
  %s15 = inlined_call_operand.vmem [shape: f32[2,1,64], index: 15, kind: input, shape index: {}]
  %s16 = inlined_call_operand.vmem [shape: bf16[2,64,32], index: 16, kind: input, shape index: {}]
  %s17 = inlined_call_operand.vmem [shape: f32[2,1,32], index: 17, kind: input, shape index: {}]
  %s18 = inlined_call_operand.vmem [shape: f32[2,1,32], index: 18, kind: input, shape index: {}]
  %s19 = inlined_call_operand.vmem [shape: f32[2,1,32], index: 19, kind: input, shape index: {}]
  %s20 = inlined_call_operand.vmem [shape: f32[2,1,32], index: 20, kind: input, shape index: {}]
  %s21 = inlined_call_operand.vmem [shape: f32[2,1,32], index: 21, kind: input, shape index: {}]
  %s22 = inlined_call_operand.vmem [shape: f32[2,1,32], index: 22, kind: input, shape index: {}]
  %s23 = inlined_call_operand.vmem [shape: f32[2,1,32], index: 23, kind: input, shape index: {}]
  %s24 = inlined_call_operand.vmem [shape: bf16[32,50], index: 24, kind: input, shape index: {}]
  %s25 = inlined_call_operand.vmem [shape: f32[1,50], index: 25, kind: input, shape index: {}]
  %s26 = inlined_call_operand.hbm [shape: f32[2,8,50], index: 26, kind: output, shape index: {}]
  %s27 = sld [smem:[#allocation0]]
  $region145: #{tpu_custom_call.1} parent=0
    _
  %s29 = ssub.s32 1, %s27
  %s30 = scalar_select 0, %s29, %s27
  $region1: #{tpu_custom_call.1} parent=0
    #allocation3 [shape = 'u8[8192]{0}', space=vmem, size = 0x2000, scoped, tag = 'output window, operand 0']
    #allocation4 [shape = 's32[2]{0}', space=sflag, size = 0x8, scoped, tag = 'scoped memory for tpu_custom_call.1']
    %31 = vsyncpa [#allocation4], 0
    %s32 = scalar_lea.sflag [#allocation4], 1
    %33 = vsyncpa %s32, 0
    loop: start=0, step=1, limit=6
    $region2: #{tpu_custom_call.1} parent=1 // loop_pre_header
      _
    $region3: #{tpu_custom_call.1} parent=1 // loop_header
      %s35 = sphi 0, %s39
      %p36 = scmp.ge.s32.totalorder %s35, 6
      %s42 = sphi 0, %s54
      %s43 = sphi 0, %s50
      %s44 = sphi 0, %s42
      %s45 = sphi 0, %s43
      %s46 = sphi 0, %s44
      %s47 = sphi 0, %s45
      %s57 = sphi 0, %s59
      %s60 = sphi 0, %s57
      %s61 = sphi 0, %s60
      %s77 = sphi 0, %s61
      %s83 = sphi 0, %s85
      %s86 = sphi 0, %s83
      %s87 = sphi 0, %s86
      %s103 = sphi 0, %s87
      %s109 = sphi 0, %s111
      %s112 = sphi 0, %s109
      %s113 = sphi 0, %s112
      %s129 = sphi 0, %s113
      %s135 = sphi 0, %s137
      %s138 = sphi 0, %s135
      %s139 = sphi 0, %s138
      %s155 = sphi 0, %s139
      %s161 = sphi 0, %s163
      %s164 = sphi 0, %s161
      %s165 = sphi 0, %s164
      %s181 = sphi 0, %s165
      %s187 = sphi 0, %s189
      %s190 = sphi 0, %s187
      %s191 = sphi 0, %s190
      %s207 = sphi 0, %s191
      %s213 = sphi 0, %s215
      %s216 = sphi 0, %s213
      %s217 = sphi 0, %s216
      %s233 = sphi 0, %s217
      %s239 = sphi 0, %s241
      %s242 = sphi 0, %s239
      %s243 = sphi 0, %s242
      %s259 = sphi 0, %s243
      %s265 = sphi 0, %s267
      %s268 = sphi 0, %s265
      %s269 = sphi 0, %s268
      %s285 = sphi 0, %s269
      %s291 = sphi 0, %s293
      %s294 = sphi 0, %s291
      %s295 = sphi 0, %s294
      %s311 = sphi 0, %s295
      %s317 = sphi 0, %s319
      %s320 = sphi 0, %s317
      %s321 = sphi 0, %s320
      %s337 = sphi 0, %s321
      %s343 = sphi 0, %s345
      %s346 = sphi 0, %s343
      %s347 = sphi 0, %s346
      %s363 = sphi 0, %s347
      %s369 = sphi 0, %s371
      %s372 = sphi 0, %s369
      %s373 = sphi 0, %s372
      %s389 = sphi 0, %s373
      %s395 = sphi 0, %s397
      %s398 = sphi 0, %s395
      %s399 = sphi 0, %s398
      %s415 = sphi 0, %s399
      %s421 = sphi 0, %s423
      %s424 = sphi 0, %s421
      %s425 = sphi 0, %s424
      %s441 = sphi 0, %s425
      %s447 = sphi 0, %s449
      %s450 = sphi 0, %s447
      %s451 = sphi 0, %s450
      %s467 = sphi 0, %s451
      %s473 = sphi 0, %s475
      %s476 = sphi 0, %s473
      %s477 = sphi 0, %s476
      %s493 = sphi 0, %s477
      %s499 = sphi 0, %s501
      %s502 = sphi 0, %s499
      %s503 = sphi 0, %s502
      %s519 = sphi 0, %s503
      %s525 = sphi 0, %s527
      %s528 = sphi 0, %s525
      %s529 = sphi 0, %s528
      %s545 = sphi 0, %s529
      %s551 = sphi 0, %s553
      %s554 = sphi 0, %s551
      %s555 = sphi 0, %s554
      %s571 = sphi 0, %s555
      %s577 = sphi 0, %s579
      %s580 = sphi 0, %s577
      %s581 = sphi 0, %s580
      %s597 = sphi 0, %s581
      %s603 = sphi 0, %s605
      %s606 = sphi 0, %s603
      %s607 = sphi 0, %s606
      %s623 = sphi 0, %s607
      %s629 = sphi 0, %s631
      %s632 = sphi 0, %s629
      %s633 = sphi 0, %s632
      %s649 = sphi 0, %s633
      %s655 = sphi 0, %s657
      %s658 = sphi 0, %s655
      %s659 = sphi 0, %s658
      %s675 = sphi 0, %s659
      %s679 = sphi 0, %s679
      %s681 = sphi 0, %s679
      %s682 = sphi 0, %s681
      %s696 = sphi 0, %s682
      %s700 = sphi 0, %s700
      %s702 = sphi 0, %s700
      %s703 = sphi 0, %s702
      %s717 = sphi 0, %s703
      %s723 = sphi 0, %s725
      %s726 = sphi 0, %s723
      %s727 = sphi 0, %s726
      %s743 = sphi 0, %s727
    $region4: #{tpu_custom_call.1} parent=1 // loop_header_branch
      %38 = sbr.rel (%p36) target = $region8
    $region5: #{tpu_custom_call.1} parent=1 // loop_body
      %s40 = ssub.s32 %s35, 1
      %s41 = ssub.s32 %s35, 2
      %s48 = sadd.s32 1, %s43
      %p49 = scmp.ge.s32.totalorder %s48, 2
      %s50 = scalar_select %p49, 0, %s48
      %s51 = sadd.s32 1, %s42
      %s52 = scalar_select %p49, %s51, %s42
      %p53 = scmp.ge.s32.totalorder %s52, 2
      %s54 = scalar_select %p53, 0, %s52
      %s55 = ssub.s32 %s42, %s54
      %p56 = scmp.eq.s32.totalorder %s55, 0
      %s58 = sadd.s32 %s57, 1
      %s59 = scalar_select %p56, %s57, %s58
      %p62 = pneg %p56
      %p63 = scmp.eq.s32.totalorder %s35, 3
      %p64 = por %p62, %p63
      %p65 = scmp.ne.s32.totalorder %s57, %s60
      %p66 = scmp.eq.s32.totalorder %s35, 0
      %p67 = por %p65, %p66
      %p68 = scmp.ne.s32.totalorder %s57, %s60
      %p69 = scmp.eq.s32.totalorder %s40, 3
      %p70 = por %p68, %p69
      %p71 = scmp.ne.s32.totalorder %s60, %s61
      %p72 = scmp.eq.s32.totalorder %s40, 0
      %p73 = por %p71, %p72
      %p74 = scmp.ne.s32.totalorder %s60, %s61
      %p75 = scmp.eq.s32.totalorder %s41, 3
      %p76 = por %p74, %p75
      %p78 = scmp.ne.s32.totalorder %s61, %s77
      %p79 = scmp.eq.s32.totalorder %s41, 0
      %p80 = por %p78, %p79
      %s81 = ssub.s32 %s42, %s54
      %p82 = scmp.eq.s32.totalorder %s81, 0
      %s84 = sadd.s32 %s83, 1
      %s85 = scalar_select %p82, %s83, %s84
      %p88 = pneg %p82
      %p89 = scmp.eq.s32.totalorder %s35, 3
      %p90 = por %p88, %p89
      %p91 = scmp.ne.s32.totalorder %s83, %s86
      %p92 = scmp.eq.s32.totalorder %s35, 0
      %p93 = por %p91, %p92
      %p94 = scmp.ne.s32.totalorder %s83, %s86
      %p95 = scmp.eq.s32.totalorder %s40, 3
      %p96 = por %p94, %p95
      %p97 = scmp.ne.s32.totalorder %s86, %s87
      %p98 = scmp.eq.s32.totalorder %s40, 0
      %p99 = por %p97, %p98
      %p100 = scmp.ne.s32.totalorder %s86, %s87
      %p101 = scmp.eq.s32.totalorder %s41, 3
      %p102 = por %p100, %p101
      %p104 = scmp.ne.s32.totalorder %s87, %s103
      %p105 = scmp.eq.s32.totalorder %s41, 0
      %p106 = por %p104, %p105
      %s107 = ssub.s32 %s42, %s54
      %p108 = scmp.eq.s32.totalorder %s107, 0
      %s110 = sadd.s32 %s109, 1
      %s111 = scalar_select %p108, %s109, %s110
      %p114 = pneg %p108
      %p115 = scmp.eq.s32.totalorder %s35, 3
      %p116 = por %p114, %p115
      %p117 = scmp.ne.s32.totalorder %s109, %s112
      %p118 = scmp.eq.s32.totalorder %s35, 0
      %p119 = por %p117, %p118
      %p120 = scmp.ne.s32.totalorder %s109, %s112
      %p121 = scmp.eq.s32.totalorder %s40, 3
      %p122 = por %p120, %p121
      %p123 = scmp.ne.s32.totalorder %s112, %s113
      %p124 = scmp.eq.s32.totalorder %s40, 0
      %p125 = por %p123, %p124
      %p126 = scmp.ne.s32.totalorder %s112, %s113
      %p127 = scmp.eq.s32.totalorder %s41, 3
      %p128 = por %p126, %p127
      %p130 = scmp.ne.s32.totalorder %s113, %s129
      %p131 = scmp.eq.s32.totalorder %s41, 0
      %p132 = por %p130, %p131
      %s133 = ssub.s32 %s42, %s54
      %p134 = scmp.eq.s32.totalorder %s133, 0
      %s136 = sadd.s32 %s135, 1
      %s137 = scalar_select %p134, %s135, %s136
      %p140 = pneg %p134
      %p141 = scmp.eq.s32.totalorder %s35, 3
      %p142 = por %p140, %p141
      %p143 = scmp.ne.s32.totalorder %s135, %s138
      %p144 = scmp.eq.s32.totalorder %s35, 0
      %p145 = por %p143, %p144
      %p146 = scmp.ne.s32.totalorder %s135, %s138
      %p147 = scmp.eq.s32.totalorder %s40, 3
      %p148 = por %p146, %p147
      %p149 = scmp.ne.s32.totalorder %s138, %s139
      %p150 = scmp.eq.s32.totalorder %s40, 0
      %p151 = por %p149, %p150
      %p152 = scmp.ne.s32.totalorder %s138, %s139
      %p153 = scmp.eq.s32.totalorder %s41, 3
      %p154 = por %p152, %p153
      %p156 = scmp.ne.s32.totalorder %s139, %s155
      %p157 = scmp.eq.s32.totalorder %s41, 0
      %p158 = por %p156, %p157
      %s159 = ssub.s32 %s43, %s50
      %p160 = scmp.eq.s32.totalorder %s159, 0
      %s162 = sadd.s32 %s161, 1
      %s163 = scalar_select %p160, %s161, %s162
      %p166 = pneg %p160
      %p167 = scmp.eq.s32.totalorder %s35, 3
      %p168 = por %p166, %p167
      %p169 = scmp.ne.s32.totalorder %s161, %s164
      %p170 = scmp.eq.s32.totalorder %s35, 0
      %p171 = por %p169, %p170
      %p172 = scmp.ne.s32.totalorder %s161, %s164
      %p173 = scmp.eq.s32.totalorder %s40, 3
      %p174 = por %p172, %p173
      %p175 = scmp.ne.s32.totalorder %s164, %s165
      %p176 = scmp.eq.s32.totalorder %s40, 0
      %p177 = por %p175, %p176
      %p178 = scmp.ne.s32.totalorder %s164, %s165
      %p179 = scmp.eq.s32.totalorder %s41, 3
      %p180 = por %p178, %p179
      %p182 = scmp.ne.s32.totalorder %s165, %s181
      %p183 = scmp.eq.s32.totalorder %s41, 0
      %p184 = por %p182, %p183
      %s185 = ssub.s32 %s43, %s50
      %p186 = scmp.eq.s32.totalorder %s185, 0
      %s188 = sadd.s32 %s187, 1
      %s189 = scalar_select %p186, %s187, %s188
      %p192 = pneg %p186
      %p193 = scmp.eq.s32.totalorder %s35, 3
      %p194 = por %p192, %p193
      %p195 = scmp.ne.s32.totalorder %s187, %s190
      %p196 = scmp.eq.s32.totalorder %s35, 0
      %p197 = por %p195, %p196
      %p198 = scmp.ne.s32.totalorder %s187, %s190
      %p199 = scmp.eq.s32.totalorder %s40, 3
      %p200 = por %p198, %p199
      %p201 = scmp.ne.s32.totalorder %s190, %s191
      %p202 = scmp.eq.s32.totalorder %s40, 0
      %p203 = por %p201, %p202
      %p204 = scmp.ne.s32.totalorder %s190, %s191
      %p205 = scmp.eq.s32.totalorder %s41, 3
      %p206 = por %p204, %p205
      %p208 = scmp.ne.s32.totalorder %s191, %s207
      %p209 = scmp.eq.s32.totalorder %s41, 0
      %p210 = por %p208, %p209
      %s211 = ssub.s32 %s43, %s50
      %p212 = scmp.eq.s32.totalorder %s211, 0
      %s214 = sadd.s32 %s213, 1
      %s215 = scalar_select %p212, %s213, %s214
      %p218 = pneg %p212
      %p219 = scmp.eq.s32.totalorder %s35, 3
      %p220 = por %p218, %p219
      %p221 = scmp.ne.s32.totalorder %s213, %s216
      %p222 = scmp.eq.s32.totalorder %s35, 0
      %p223 = por %p221, %p222
      %p224 = scmp.ne.s32.totalorder %s213, %s216
      %p225 = scmp.eq.s32.totalorder %s40, 3
      %p226 = por %p224, %p225
      %p227 = scmp.ne.s32.totalorder %s216, %s217
      %p228 = scmp.eq.s32.totalorder %s40, 0
      %p229 = por %p227, %p228
      %p230 = scmp.ne.s32.totalorder %s216, %s217
      %p231 = scmp.eq.s32.totalorder %s41, 3
      %p232 = por %p230, %p231
      %p234 = scmp.ne.s32.totalorder %s217, %s233
      %p235 = scmp.eq.s32.totalorder %s41, 0
      %p236 = por %p234, %p235
      %s237 = ssub.s32 %s43, %s50
      %p238 = scmp.eq.s32.totalorder %s237, 0
      %s240 = sadd.s32 %s239, 1
      %s241 = scalar_select %p238, %s239, %s240
      %p244 = pneg %p238
      %p245 = scmp.eq.s32.totalorder %s35, 3
      %p246 = por %p244, %p245
      %p247 = scmp.ne.s32.totalorder %s239, %s242
      %p248 = scmp.eq.s32.totalorder %s35, 0
      %p249 = por %p247, %p248
      %p250 = scmp.ne.s32.totalorder %s239, %s242
      %p251 = scmp.eq.s32.totalorder %s40, 3
      %p252 = por %p250, %p251
      %p253 = scmp.ne.s32.totalorder %s242, %s243
      %p254 = scmp.eq.s32.totalorder %s40, 0
      %p255 = por %p253, %p254
      %p256 = scmp.ne.s32.totalorder %s242, %s243
      %p257 = scmp.eq.s32.totalorder %s41, 3
      %p258 = por %p256, %p257
      %p260 = scmp.ne.s32.totalorder %s243, %s259
      %p261 = scmp.eq.s32.totalorder %s41, 0
      %p262 = por %p260, %p261
      %s263 = ssub.s32 %s43, %s50
      %p264 = scmp.eq.s32.totalorder %s263, 0
      %s266 = sadd.s32 %s265, 1
      %s267 = scalar_select %p264, %s265, %s266
      %p270 = pneg %p264
      %p271 = scmp.eq.s32.totalorder %s35, 3
      %p272 = por %p270, %p271
      %p273 = scmp.ne.s32.totalorder %s265, %s268
      %p274 = scmp.eq.s32.totalorder %s35, 0
      %p275 = por %p273, %p274
      %p276 = scmp.ne.s32.totalorder %s265, %s268
      %p277 = scmp.eq.s32.totalorder %s40, 3
      %p278 = por %p276, %p277
      %p279 = scmp.ne.s32.totalorder %s268, %s269
      %p280 = scmp.eq.s32.totalorder %s40, 0
      %p281 = por %p279, %p280
      %p282 = scmp.ne.s32.totalorder %s268, %s269
      %p283 = scmp.eq.s32.totalorder %s41, 3
      %p284 = por %p282, %p283
      %p286 = scmp.ne.s32.totalorder %s269, %s285
      %p287 = scmp.eq.s32.totalorder %s41, 0
      %p288 = por %p286, %p287
      %s289 = ssub.s32 %s43, %s50
      %p290 = scmp.eq.s32.totalorder %s289, 0
      %s292 = sadd.s32 %s291, 1
      %s293 = scalar_select %p290, %s291, %s292
      %p296 = pneg %p290
      %p297 = scmp.eq.s32.totalorder %s35, 3
      %p298 = por %p296, %p297
      %p299 = scmp.ne.s32.totalorder %s291, %s294
      %p300 = scmp.eq.s32.totalorder %s35, 0
      %p301 = por %p299, %p300
      %p302 = scmp.ne.s32.totalorder %s291, %s294
      %p303 = scmp.eq.s32.totalorder %s40, 3
      %p304 = por %p302, %p303
      %p305 = scmp.ne.s32.totalorder %s294, %s295
      %p306 = scmp.eq.s32.totalorder %s40, 0
      %p307 = por %p305, %p306
      %p308 = scmp.ne.s32.totalorder %s294, %s295
      %p309 = scmp.eq.s32.totalorder %s41, 3
      %p310 = por %p308, %p309
      %p312 = scmp.ne.s32.totalorder %s295, %s311
      %p313 = scmp.eq.s32.totalorder %s41, 0
      %p314 = por %p312, %p313
      %s315 = ssub.s32 %s43, %s50
      %p316 = scmp.eq.s32.totalorder %s315, 0
      %s318 = sadd.s32 %s317, 1
      %s319 = scalar_select %p316, %s317, %s318
      %p322 = pneg %p316
      %p323 = scmp.eq.s32.totalorder %s35, 3
      %p324 = por %p322, %p323
      %p325 = scmp.ne.s32.totalorder %s317, %s320
      %p326 = scmp.eq.s32.totalorder %s35, 0
      %p327 = por %p325, %p326
      %p328 = scmp.ne.s32.totalorder %s317, %s320
      %p329 = scmp.eq.s32.totalorder %s40, 3
      %p330 = por %p328, %p329
      %p331 = scmp.ne.s32.totalorder %s320, %s321
      %p332 = scmp.eq.s32.totalorder %s40, 0
      %p333 = por %p331, %p332
      %p334 = scmp.ne.s32.totalorder %s320, %s321
      %p335 = scmp.eq.s32.totalorder %s41, 3
      %p336 = por %p334, %p335
      %p338 = scmp.ne.s32.totalorder %s321, %s337
      %p339 = scmp.eq.s32.totalorder %s41, 0
      %p340 = por %p338, %p339
      %s341 = ssub.s32 %s43, %s50
      %p342 = scmp.eq.s32.totalorder %s341, 0
      %s344 = sadd.s32 %s343, 1
      %s345 = scalar_select %p342, %s343, %s344
      %p348 = pneg %p342
      %p349 = scmp.eq.s32.totalorder %s35, 3
      %p350 = por %p348, %p349
      %p351 = scmp.ne.s32.totalorder %s343, %s346
      %p352 = scmp.eq.s32.totalorder %s35, 0
      %p353 = por %p351, %p352
      %p354 = scmp.ne.s32.totalorder %s343, %s346
      %p355 = scmp.eq.s32.totalorder %s40, 3
      %p356 = por %p354, %p355
      %p357 = scmp.ne.s32.totalorder %s346, %s347
      %p358 = scmp.eq.s32.totalorder %s40, 0
      %p359 = por %p357, %p358
      %p360 = scmp.ne.s32.totalorder %s346, %s347
      %p361 = scmp.eq.s32.totalorder %s41, 3
      %p362 = por %p360, %p361
      %p364 = scmp.ne.s32.totalorder %s347, %s363
      %p365 = scmp.eq.s32.totalorder %s41, 0
      %p366 = por %p364, %p365
      %s367 = ssub.s32 %s43, %s50
      %p368 = scmp.eq.s32.totalorder %s367, 0
      %s370 = sadd.s32 %s369, 1
      %s371 = scalar_select %p368, %s369, %s370
      %p374 = pneg %p368
      %p375 = scmp.eq.s32.totalorder %s35, 3
      %p376 = por %p374, %p375
      %p377 = scmp.ne.s32.totalorder %s369, %s372
      %p378 = scmp.eq.s32.totalorder %s35, 0
      %p379 = por %p377, %p378
      %p380 = scmp.ne.s32.totalorder %s369, %s372
      %p381 = scmp.eq.s32.totalorder %s40, 3
      %p382 = por %p380, %p381
      %p383 = scmp.ne.s32.totalorder %s372, %s373
      %p384 = scmp.eq.s32.totalorder %s40, 0
      %p385 = por %p383, %p384
      %p386 = scmp.ne.s32.totalorder %s372, %s373
      %p387 = scmp.eq.s32.totalorder %s41, 3
      %p388 = por %p386, %p387
      %p390 = scmp.ne.s32.totalorder %s373, %s389
      %p391 = scmp.eq.s32.totalorder %s41, 0
      %p392 = por %p390, %p391
      %s393 = ssub.s32 %s43, %s50
      %p394 = scmp.eq.s32.totalorder %s393, 0
      %s396 = sadd.s32 %s395, 1
      %s397 = scalar_select %p394, %s395, %s396
      %p400 = pneg %p394
      %p401 = scmp.eq.s32.totalorder %s35, 3
      %p402 = por %p400, %p401
      %p403 = scmp.ne.s32.totalorder %s395, %s398
      %p404 = scmp.eq.s32.totalorder %s35, 0
      %p405 = por %p403, %p404
      %p406 = scmp.ne.s32.totalorder %s395, %s398
      %p407 = scmp.eq.s32.totalorder %s40, 3
      %p408 = por %p406, %p407
      %p409 = scmp.ne.s32.totalorder %s398, %s399
      %p410 = scmp.eq.s32.totalorder %s40, 0
      %p411 = por %p409, %p410
      %p412 = scmp.ne.s32.totalorder %s398, %s399
      %p413 = scmp.eq.s32.totalorder %s41, 3
      %p414 = por %p412, %p413
      %p416 = scmp.ne.s32.totalorder %s399, %s415
      %p417 = scmp.eq.s32.totalorder %s41, 0
      %p418 = por %p416, %p417
      %s419 = ssub.s32 %s43, %s50
      %p420 = scmp.eq.s32.totalorder %s419, 0
      %s422 = sadd.s32 %s421, 1
      %s423 = scalar_select %p420, %s421, %s422
      %p426 = pneg %p420
      %p427 = scmp.eq.s32.totalorder %s35, 3
      %p428 = por %p426, %p427
      %p429 = scmp.ne.s32.totalorder %s421, %s424
      %p430 = scmp.eq.s32.totalorder %s35, 0
      %p431 = por %p429, %p430
      %p432 = scmp.ne.s32.totalorder %s421, %s424
      %p433 = scmp.eq.s32.totalorder %s40, 3
      %p434 = por %p432, %p433
      %p435 = scmp.ne.s32.totalorder %s424, %s425
      %p436 = scmp.eq.s32.totalorder %s40, 0
      %p437 = por %p435, %p436
      %p438 = scmp.ne.s32.totalorder %s424, %s425
      %p439 = scmp.eq.s32.totalorder %s41, 3
      %p440 = por %p438, %p439
      %p442 = scmp.ne.s32.totalorder %s425, %s441
      %p443 = scmp.eq.s32.totalorder %s41, 0
      %p444 = por %p442, %p443
      %s445 = ssub.s32 %s43, %s50
      %p446 = scmp.eq.s32.totalorder %s445, 0
      %s448 = sadd.s32 %s447, 1
      %s449 = scalar_select %p446, %s447, %s448
      %p452 = pneg %p446
      %p453 = scmp.eq.s32.totalorder %s35, 3
      %p454 = por %p452, %p453
      %p455 = scmp.ne.s32.totalorder %s447, %s450
      %p456 = scmp.eq.s32.totalorder %s35, 0
      %p457 = por %p455, %p456
      %p458 = scmp.ne.s32.totalorder %s447, %s450
      %p459 = scmp.eq.s32.totalorder %s40, 3
      %p460 = por %p458, %p459
      %p461 = scmp.ne.s32.totalorder %s450, %s451
      %p462 = scmp.eq.s32.totalorder %s40, 0
      %p463 = por %p461, %p462
      %p464 = scmp.ne.s32.totalorder %s450, %s451
      %p465 = scmp.eq.s32.totalorder %s41, 3
      %p466 = por %p464, %p465
      %p468 = scmp.ne.s32.totalorder %s451, %s467
      %p469 = scmp.eq.s32.totalorder %s41, 0
      %p470 = por %p468, %p469
      %s471 = ssub.s32 %s43, %s50
      %p472 = scmp.eq.s32.totalorder %s471, 0
      %s474 = sadd.s32 %s473, 1
      %s475 = scalar_select %p472, %s473, %s474
      %p478 = pneg %p472
      %p479 = scmp.eq.s32.totalorder %s35, 3
      %p480 = por %p478, %p479
      %p481 = scmp.ne.s32.totalorder %s473, %s476
      %p482 = scmp.eq.s32.totalorder %s35, 0
      %p483 = por %p481, %p482
      %p484 = scmp.ne.s32.totalorder %s473, %s476
      %p485 = scmp.eq.s32.totalorder %s40, 3
      %p486 = por %p484, %p485
      %p487 = scmp.ne.s32.totalorder %s476, %s477
      %p488 = scmp.eq.s32.totalorder %s40, 0
      %p489 = por %p487, %p488
      %p490 = scmp.ne.s32.totalorder %s476, %s477
      %p491 = scmp.eq.s32.totalorder %s41, 3
      %p492 = por %p490, %p491
      %p494 = scmp.ne.s32.totalorder %s477, %s493
      %p495 = scmp.eq.s32.totalorder %s41, 0
      %p496 = por %p494, %p495
      %s497 = ssub.s32 %s43, %s50
      %p498 = scmp.eq.s32.totalorder %s497, 0
      %s500 = sadd.s32 %s499, 1
      %s501 = scalar_select %p498, %s499, %s500
      %p504 = pneg %p498
      %p505 = scmp.eq.s32.totalorder %s35, 3
      %p506 = por %p504, %p505
      %p507 = scmp.ne.s32.totalorder %s499, %s502
      %p508 = scmp.eq.s32.totalorder %s35, 0
      %p509 = por %p507, %p508
      %p510 = scmp.ne.s32.totalorder %s499, %s502
      %p511 = scmp.eq.s32.totalorder %s40, 3
      %p512 = por %p510, %p511
      %p513 = scmp.ne.s32.totalorder %s502, %s503
      %p514 = scmp.eq.s32.totalorder %s40, 0
      %p515 = por %p513, %p514
      %p516 = scmp.ne.s32.totalorder %s502, %s503
      %p517 = scmp.eq.s32.totalorder %s41, 3
      %p518 = por %p516, %p517
      %p520 = scmp.ne.s32.totalorder %s503, %s519
      %p521 = scmp.eq.s32.totalorder %s41, 0
      %p522 = por %p520, %p521
      %s523 = ssub.s32 %s43, %s50
      %p524 = scmp.eq.s32.totalorder %s523, 0
      %s526 = sadd.s32 %s525, 1
      %s527 = scalar_select %p524, %s525, %s526
      %p530 = pneg %p524
      %p531 = scmp.eq.s32.totalorder %s35, 3
      %p532 = por %p530, %p531
      %p533 = scmp.ne.s32.totalorder %s525, %s528
      %p534 = scmp.eq.s32.totalorder %s35, 0
      %p535 = por %p533, %p534
      %p536 = scmp.ne.s32.totalorder %s525, %s528
      %p537 = scmp.eq.s32.totalorder %s40, 3
      %p538 = por %p536, %p537
      %p539 = scmp.ne.s32.totalorder %s528, %s529
      %p540 = scmp.eq.s32.totalorder %s40, 0
      %p541 = por %p539, %p540
      %p542 = scmp.ne.s32.totalorder %s528, %s529
      %p543 = scmp.eq.s32.totalorder %s41, 3
      %p544 = por %p542, %p543
      %p546 = scmp.ne.s32.totalorder %s529, %s545
      %p547 = scmp.eq.s32.totalorder %s41, 0
      %p548 = por %p546, %p547
      %s549 = ssub.s32 %s43, %s50
      %p550 = scmp.eq.s32.totalorder %s549, 0
      %s552 = sadd.s32 %s551, 1
      %s553 = scalar_select %p550, %s551, %s552
      %p556 = pneg %p550
      %p557 = scmp.eq.s32.totalorder %s35, 3
      %p558 = por %p556, %p557
      %p559 = scmp.ne.s32.totalorder %s551, %s554
      %p560 = scmp.eq.s32.totalorder %s35, 0
      %p561 = por %p559, %p560
      %p562 = scmp.ne.s32.totalorder %s551, %s554
      %p563 = scmp.eq.s32.totalorder %s40, 3
      %p564 = por %p562, %p563
      %p565 = scmp.ne.s32.totalorder %s554, %s555
      %p566 = scmp.eq.s32.totalorder %s40, 0
      %p567 = por %p565, %p566
      %p568 = scmp.ne.s32.totalorder %s554, %s555
      %p569 = scmp.eq.s32.totalorder %s41, 3
      %p570 = por %p568, %p569
      %p572 = scmp.ne.s32.totalorder %s555, %s571
      %p573 = scmp.eq.s32.totalorder %s41, 0
      %p574 = por %p572, %p573
      %s575 = ssub.s32 %s43, %s50
      %p576 = scmp.eq.s32.totalorder %s575, 0
      %s578 = sadd.s32 %s577, 1
      %s579 = scalar_select %p576, %s577, %s578
      %p582 = pneg %p576
      %p583 = scmp.eq.s32.totalorder %s35, 3
      %p584 = por %p582, %p583
      %p585 = scmp.ne.s32.totalorder %s577, %s580
      %p586 = scmp.eq.s32.totalorder %s35, 0
      %p587 = por %p585, %p586
      %p588 = scmp.ne.s32.totalorder %s577, %s580
      %p589 = scmp.eq.s32.totalorder %s40, 3
      %p590 = por %p588, %p589
      %p591 = scmp.ne.s32.totalorder %s580, %s581
      %p592 = scmp.eq.s32.totalorder %s40, 0
      %p593 = por %p591, %p592
      %p594 = scmp.ne.s32.totalorder %s580, %s581
      %p595 = scmp.eq.s32.totalorder %s41, 3
      %p596 = por %p594, %p595
      %p598 = scmp.ne.s32.totalorder %s581, %s597
      %p599 = scmp.eq.s32.totalorder %s41, 0
      %p600 = por %p598, %p599
      %s601 = ssub.s32 %s43, %s50
      %p602 = scmp.eq.s32.totalorder %s601, 0
      %s604 = sadd.s32 %s603, 1
      %s605 = scalar_select %p602, %s603, %s604
      %p608 = pneg %p602
      %p609 = scmp.eq.s32.totalorder %s35, 3
      %p610 = por %p608, %p609
      %p611 = scmp.ne.s32.totalorder %s603, %s606
      %p612 = scmp.eq.s32.totalorder %s35, 0
      %p613 = por %p611, %p612
      %p614 = scmp.ne.s32.totalorder %s603, %s606
      %p615 = scmp.eq.s32.totalorder %s40, 3
      %p616 = por %p614, %p615
      %p617 = scmp.ne.s32.totalorder %s606, %s607
      %p618 = scmp.eq.s32.totalorder %s40, 0
      %p619 = por %p617, %p618
      %p620 = scmp.ne.s32.totalorder %s606, %s607
      %p621 = scmp.eq.s32.totalorder %s41, 3
      %p622 = por %p620, %p621
      %p624 = scmp.ne.s32.totalorder %s607, %s623
      %p625 = scmp.eq.s32.totalorder %s41, 0
      %p626 = por %p624, %p625
      %s627 = ssub.s32 %s43, %s50
      %p628 = scmp.eq.s32.totalorder %s627, 0
      %s630 = sadd.s32 %s629, 1
      %s631 = scalar_select %p628, %s629, %s630
      %p634 = pneg %p628
      %p635 = scmp.eq.s32.totalorder %s35, 3
      %p636 = por %p634, %p635
      %p637 = scmp.ne.s32.totalorder %s629, %s632
      %p638 = scmp.eq.s32.totalorder %s35, 0
      %p639 = por %p637, %p638
      %p640 = scmp.ne.s32.totalorder %s629, %s632
      %p641 = scmp.eq.s32.totalorder %s40, 3
      %p642 = por %p640, %p641
      %p643 = scmp.ne.s32.totalorder %s632, %s633
      %p644 = scmp.eq.s32.totalorder %s40, 0
      %p645 = por %p643, %p644
      %p646 = scmp.ne.s32.totalorder %s632, %s633
      %p647 = scmp.eq.s32.totalorder %s41, 3
      %p648 = por %p646, %p647
      %p650 = scmp.ne.s32.totalorder %s633, %s649
      %p651 = scmp.eq.s32.totalorder %s41, 0
      %p652 = por %p650, %p651
      %s653 = ssub.s32 %s43, %s50
      %p654 = scmp.eq.s32.totalorder %s653, 0
      %s656 = sadd.s32 %s655, 1
      %s657 = scalar_select %p654, %s655, %s656
      %p660 = pneg %p654
      %p661 = scmp.eq.s32.totalorder %s35, 3
      %p662 = por %p660, %p661
      %p663 = scmp.ne.s32.totalorder %s655, %s658
      %p664 = scmp.eq.s32.totalorder %s35, 0
      %p665 = por %p663, %p664
      %p666 = scmp.ne.s32.totalorder %s655, %s658
      %p667 = scmp.eq.s32.totalorder %s40, 3
      %p668 = por %p666, %p667
      %p669 = scmp.ne.s32.totalorder %s658, %s659
      %p670 = scmp.eq.s32.totalorder %s40, 0
      %p671 = por %p669, %p670
      %p672 = scmp.ne.s32.totalorder %s658, %s659
      %p673 = scmp.eq.s32.totalorder %s41, 3
      %p674 = por %p672, %p673
      %p676 = scmp.ne.s32.totalorder %s659, %s675
      %p677 = scmp.eq.s32.totalorder %s41, 0
      %p678 = por %p676, %p677
      %s680 = sadd.s32 %s679, 1
      %p683 = scmp.eq.s32.totalorder %s35, 3
      %p684 = scmp.ne.s32.totalorder %s679, %s681
      %p685 = scmp.eq.s32.totalorder %s35, 0
      %p686 = por %p684, %p685
      %p687 = scmp.ne.s32.totalorder %s679, %s681
      %p688 = scmp.eq.s32.totalorder %s40, 3
      %p689 = por %p687, %p688
      %p690 = scmp.ne.s32.totalorder %s681, %s682
      %p691 = scmp.eq.s32.totalorder %s40, 0
      %p692 = por %p690, %p691
      %p693 = scmp.ne.s32.totalorder %s681, %s682
      %p694 = scmp.eq.s32.totalorder %s41, 3
      %p695 = por %p693, %p694
      %p697 = scmp.ne.s32.totalorder %s682, %s696
      %p698 = scmp.eq.s32.totalorder %s41, 0
      %p699 = por %p697, %p698
      %s701 = sadd.s32 %s700, 1
      %p704 = scmp.eq.s32.totalorder %s35, 3
      %p705 = scmp.ne.s32.totalorder %s700, %s702
      %p706 = scmp.eq.s32.totalorder %s35, 0
      %p707 = por %p705, %p706
      %p708 = scmp.ne.s32.totalorder %s700, %s702
      %p709 = scmp.eq.s32.totalorder %s40, 3
      %p710 = por %p708, %p709
      %p711 = scmp.ne.s32.totalorder %s702, %s703
      %p712 = scmp.eq.s32.totalorder %s40, 0
      %p713 = por %p711, %p712
      %p714 = scmp.ne.s32.totalorder %s702, %s703
      %p715 = scmp.eq.s32.totalorder %s41, 3
      %p716 = por %p714, %p715
      %p718 = scmp.ne.s32.totalorder %s703, %s717
      %p719 = scmp.eq.s32.totalorder %s41, 0
      %p720 = por %p718, %p719
      %s721 = ssub.s32 %s42, %s54
      %p722 = scmp.eq.s32.totalorder %s721, 0
      %s724 = sadd.s32 %s723, 1
      %s725 = scalar_select %p722, %s723, %s724
      %p728 = pneg %p722
      %p729 = scmp.eq.s32.totalorder %s35, 3
      %p730 = por %p728, %p729
      %p731 = scmp.ne.s32.totalorder %s723, %s726
      %p732 = scmp.eq.s32.totalorder %s35, 0
      %p733 = por %p731, %p732
      %p734 = scmp.ne.s32.totalorder %s723, %s726
      %p735 = scmp.eq.s32.totalorder %s40, 3
      %p736 = por %p734, %p735
      %p737 = scmp.ne.s32.totalorder %s726, %s727
      %p738 = scmp.eq.s32.totalorder %s40, 0
      %p739 = por %p737, %p738
      %p740 = scmp.ne.s32.totalorder %s726, %s727
      %p741 = scmp.eq.s32.totalorder %s41, 3
      %p742 = por %p740, %p741
      %p744 = scmp.ne.s32.totalorder %s727, %s743
      %p745 = scmp.eq.s32.totalorder %s41, 0
      %p746 = por %p744, %p745
      %p747 = scmp.le.s32.totalorder 1, %s35
      %p748 = scmp.lt.s32.totalorder %s35, 5
      %p749 = pnand %p747, %p748
      %p750 = pneg %p749
      // Predicated region
      $region9: #{tpu_custom_call.1} parent=5 // pred_check
        _
      $region10: #{tpu_custom_call.1} parent=5 // pred_check_branch
        %752 = sbr.rel (%p749) target = $region12
      $region11: #{tpu_custom_call.1} parent=5 // pred_region
        %s753 = ssub.s32 %s35, 1
        // Predicated region
        $region13: #{tpu_custom_call.1} parent=11 // pred_check
          %p754 = pneg %p692
        $region14: #{tpu_custom_call.1} parent=11 // pred_check_branch
          %756 = sbr.rel (%p754) target = $region16
        $region15: #{tpu_custom_call.1} parent=11 // pred_region
          _
        $region16: #{tpu_custom_call.1} parent=11 // pred_fallthru
          _
        // Predicated region
        $region17: #{tpu_custom_call.1} parent=11 // pred_check
          %p757 = pneg %p713
        $region18: #{tpu_custom_call.1} parent=11 // pred_check_branch
          %759 = sbr.rel (%p757) target = $region20
        $region19: #{tpu_custom_call.1} parent=11 // pred_region
          _
        $region20: #{tpu_custom_call.1} parent=11 // pred_fallthru
          _
      $region12: #{tpu_custom_call.1} parent=5 // pred_fallthru
        _
      %p760 = scmp.lt.s32.totalorder %s35, 4
      // Predicated region
      $region21: #{tpu_custom_call.1} parent=5 // pred_check
        %p761 = pneg %p760
      $region22: #{tpu_custom_call.1} parent=5 // pred_check_branch
        %763 = sbr.rel (%p761) target = $region24
      $region23: #{tpu_custom_call.1} parent=5 // pred_region
        // Predicated region
        $region25: #{tpu_custom_call.1} parent=23 // pred_check
          %p764 = pneg %p67
        $region26: #{tpu_custom_call.1} parent=23 // pred_check_branch
          %766 = sbr.rel (%p764) target = $region28
        $region27: #{tpu_custom_call.1} parent=23 // pred_region
          %p767 = scmp.lt.s32.totalorder %s42, 1
          %s768 = scalar_select %p767, %s42, 1
          %s769 = smul.addr %s768, 8
          %s770 = scalar_lea.vmem %s0, %s769
        $region28: #{tpu_custom_call.1} parent=23 // pred_fallthru
          _
        // Predicated region
        $region29: #{tpu_custom_call.1} parent=23 // pred_check
          %p771 = pneg %p93
        $region30: #{tpu_custom_call.1} parent=23 // pred_check_branch
          %773 = sbr.rel (%p771) target = $region32
        $region31: #{tpu_custom_call.1} parent=23 // pred_region
          %p774 = scmp.lt.s32.totalorder %s42, 1
          %s775 = scalar_select %p774, %s42, 1
          %s776 = smul.addr %s775, 8
          %s777 = scalar_lea.vmem %s1, %s776
        $region32: #{tpu_custom_call.1} parent=23 // pred_fallthru
          _
        // Predicated region
        $region33: #{tpu_custom_call.1} parent=23 // pred_check
          %p778 = pneg %p119
        $region34: #{tpu_custom_call.1} parent=23 // pred_check_branch
          %780 = sbr.rel (%p778) target = $region36
        $region35: #{tpu_custom_call.1} parent=23 // pred_region
          %p781 = scmp.lt.s32.totalorder %s42, 1
          %s782 = scalar_select %p781, %s42, 1
          %s783 = smul.addr %s782, 8
          %s784 = scalar_lea.vmem %s2, %s783
        $region36: #{tpu_custom_call.1} parent=23 // pred_fallthru
          _
        // Predicated region
        $region37: #{tpu_custom_call.1} parent=23 // pred_check
          %p785 = pneg %p145
        $region38: #{tpu_custom_call.1} parent=23 // pred_check_branch
          %787 = sbr.rel (%p785) target = $region40
        $region39: #{tpu_custom_call.1} parent=23 // pred_region
          %p788 = scmp.lt.s32.totalorder %s42, 1
          %s789 = scalar_select %p788, %s42, 1
          %s790 = smul.addr %s789, 8
          %s791 = scalar_lea.vmem %s3, %s790
        $region40: #{tpu_custom_call.1} parent=23 // pred_fallthru
          _
        // Predicated region
        $region41: #{tpu_custom_call.1} parent=23 // pred_check
          %p792 = pneg %p171
        $region42: #{tpu_custom_call.1} parent=23 // pred_check_branch
          %794 = sbr.rel (%p792) target = $region44
        $region43: #{tpu_custom_call.1} parent=23 // pred_region
          %p795 = scmp.lt.s32.totalorder %s43, 1
          %s796 = scalar_select %p795, %s43, 1
          %s797 = smul.addr %s796, 48
          %s798 = smul.addr %s797, 4
          %s799 = scalar_lea.vmem %s4, %s798
        $region44: #{tpu_custom_call.1} parent=23 // pred_fallthru
          _
        // Predicated region
        $region45: #{tpu_custom_call.1} parent=23 // pred_check
          %p800 = pneg %p197
        $region46: #{tpu_custom_call.1} parent=23 // pred_check_branch
          %802 = sbr.rel (%p800) target = $region48
        $region47: #{tpu_custom_call.1} parent=23 // pred_region
          %p803 = scmp.lt.s32.totalorder %s43, 1
          %s804 = scalar_select %p803, %s43, 1
          %s805 = smul.addr %s804, 12
          %s806 = scalar_lea.vmem %s5, %s805
        $region48: #{tpu_custom_call.1} parent=23 // pred_fallthru
          _
        // Predicated region
        $region49: #{tpu_custom_call.1} parent=23 // pred_check
          %p807 = pneg %p223
        $region50: #{tpu_custom_call.1} parent=23 // pred_check_branch
          %809 = sbr.rel (%p807) target = $region52
        $region51: #{tpu_custom_call.1} parent=23 // pred_region
          %p810 = scmp.lt.s32.totalorder %s43, 1
          %s811 = scalar_select %p810, %s43, 1
          %s812 = smul.addr %s811, 4
          %s813 = smul.addr %s812, 4
          %s814 = scalar_lea.vmem %s6, %s813
        $region52: #{tpu_custom_call.1} parent=23 // pred_fallthru
          _
        // Predicated region
        $region53: #{tpu_custom_call.1} parent=23 // pred_check
          %p815 = pneg %p249
        $region54: #{tpu_custom_call.1} parent=23 // pred_check_branch
          %817 = sbr.rel (%p815) target = $region56
        $region55: #{tpu_custom_call.1} parent=23 // pred_region
          %p818 = scmp.lt.s32.totalorder %s43, 1
          %s819 = scalar_select %p818, %s43, 1
          %s820 = scalar_lea.vmem %s7, %s819
        $region56: #{tpu_custom_call.1} parent=23 // pred_fallthru
          _
        // Predicated region
        $region57: #{tpu_custom_call.1} parent=23 // pred_check
          %p821 = pneg %p275
        $region58: #{tpu_custom_call.1} parent=23 // pred_check_branch
          %823 = sbr.rel (%p821) target = $region60
        $region59: #{tpu_custom_call.1} parent=23 // pred_region
          %p824 = scmp.lt.s32.totalorder %s43, 1
          %s825 = scalar_select %p824, %s43, 1
          %s826 = smul.addr %s825, 16
          %s827 = smul.addr %s826, 4
          %s828 = scalar_lea.vmem %s8, %s827
        $region60: #{tpu_custom_call.1} parent=23 // pred_fallthru
          _
        // Predicated region
        $region61: #{tpu_custom_call.1} parent=23 // pred_check
          %p829 = pneg %p301
        $region62: #{tpu_custom_call.1} parent=23 // pred_check_branch
          %831 = sbr.rel (%p829) target = $region64
        $region63: #{tpu_custom_call.1} parent=23 // pred_region
          %p832 = scmp.lt.s32.totalorder %s43, 1
          %s833 = scalar_select %p832, %s43, 1
          %s834 = smul.addr %s833, 4
          %s835 = scalar_lea.vmem %s9, %s834
        $region64: #{tpu_custom_call.1} parent=23 // pred_fallthru
          _
        // Predicated region
        $region65: #{tpu_custom_call.1} parent=23 // pred_check
          %p836 = pneg %p327
        $region66: #{tpu_custom_call.1} parent=23 // pred_check_branch
          %838 = sbr.rel (%p836) target = $region68
        $region67: #{tpu_custom_call.1} parent=23 // pred_region
          %p839 = scmp.lt.s32.totalorder %s43, 1
          %s840 = scalar_select %p839, %s43, 1
          %s841 = smul.addr %s840, 32
          %s842 = smul.addr %s841, 4
          %s843 = scalar_lea.vmem %s10, %s842
        $region68: #{tpu_custom_call.1} parent=23 // pred_fallthru
          _
        // Predicated region
        $region69: #{tpu_custom_call.1} parent=23 // pred_check
          %p844 = pneg %p353
        $region70: #{tpu_custom_call.1} parent=23 // pred_check_branch
          %846 = sbr.rel (%p844) target = $region72
        $region71: #{tpu_custom_call.1} parent=23 // pred_region
          %p847 = scmp.lt.s32.totalorder %s43, 1
          %s848 = scalar_select %p847, %s43, 1
          %s849 = smul.addr %s848, 8
          %s850 = scalar_lea.vmem %s11, %s849
        $region72: #{tpu_custom_call.1} parent=23 // pred_fallthru
          _
        // Predicated region
        $region73: #{tpu_custom_call.1} parent=23 // pred_check
          %p851 = pneg %p379
        $region74: #{tpu_custom_call.1} parent=23 // pred_check_branch
          %853 = sbr.rel (%p851) target = $region76
        $region75: #{tpu_custom_call.1} parent=23 // pred_region
          %p854 = scmp.lt.s32.totalorder %s43, 1
          %s855 = scalar_select %p854, %s43, 1
          %s856 = smul.addr %s855, 4
          %s857 = smul.addr %s856, 4
          %s858 = scalar_lea.vmem %s12, %s857
        $region76: #{tpu_custom_call.1} parent=23 // pred_fallthru
          _
        // Predicated region
        $region77: #{tpu_custom_call.1} parent=23 // pred_check
          %p859 = pneg %p405
        $region78: #{tpu_custom_call.1} parent=23 // pred_check_branch
          %861 = sbr.rel (%p859) target = $region80
        $region79: #{tpu_custom_call.1} parent=23 // pred_region
          %p862 = scmp.lt.s32.totalorder %s43, 1
          %s863 = scalar_select %p862, %s43, 1
          %s864 = scalar_lea.vmem %s13, %s863
        $region80: #{tpu_custom_call.1} parent=23 // pred_fallthru
          _
        // Predicated region
        $region81: #{tpu_custom_call.1} parent=23 // pred_check
          %p865 = pneg %p431
        $region82: #{tpu_custom_call.1} parent=23 // pred_check_branch
          %867 = sbr.rel (%p865) target = $region84
        $region83: #{tpu_custom_call.1} parent=23 // pred_region
          %p868 = scmp.lt.s32.totalorder %s43, 1
          %s869 = scalar_select %p868, %s43, 1
          %s870 = smul.addr %s869, 4
          %s871 = smul.addr %s870, 4
          %s872 = scalar_lea.vmem %s14, %s871
        $region84: #{tpu_custom_call.1} parent=23 // pred_fallthru
          _
        // Predicated region
        $region85: #{tpu_custom_call.1} parent=23 // pred_check
          %p873 = pneg %p457
        $region86: #{tpu_custom_call.1} parent=23 // pred_check_branch
          %875 = sbr.rel (%p873) target = $region88
        $region87: #{tpu_custom_call.1} parent=23 // pred_region
          %p876 = scmp.lt.s32.totalorder %s43, 1
          %s877 = scalar_select %p876, %s43, 1
          %s878 = scalar_lea.vmem %s15, %s877
        $region88: #{tpu_custom_call.1} parent=23 // pred_fallthru
          _
        // Predicated region
        $region89: #{tpu_custom_call.1} parent=23 // pred_check
          %p879 = pneg %p483
        $region90: #{tpu_custom_call.1} parent=23 // pred_check_branch
          %881 = sbr.rel (%p879) target = $region92
        $region91: #{tpu_custom_call.1} parent=23 // pred_region
          %p882 = scmp.lt.s32.totalorder %s43, 1
          %s883 = scalar_select %p882, %s43, 1
          %s884 = smul.addr %s883, 8
          %s885 = smul.addr %s884, 4
          %s886 = scalar_lea.vmem %s16, %s885
        $region92: #{tpu_custom_call.1} parent=23 // pred_fallthru
          _
        // Predicated region
        $region93: #{tpu_custom_call.1} parent=23 // pred_check
          %p887 = pneg %p509
        $region94: #{tpu_custom_call.1} parent=23 // pred_check_branch
          %889 = sbr.rel (%p887) target = $region96
        $region95: #{tpu_custom_call.1} parent=23 // pred_region
          %p890 = scmp.lt.s32.totalorder %s43, 1
          %s891 = scalar_select %p890, %s43, 1
          %s892 = scalar_lea.vmem %s17, %s891
        $region96: #{tpu_custom_call.1} parent=23 // pred_fallthru
          _
        // Predicated region
        $region97: #{tpu_custom_call.1} parent=23 // pred_check
          %p893 = pneg %p535
        $region98: #{tpu_custom_call.1} parent=23 // pred_check_branch
          %895 = sbr.rel (%p893) target = $region100
        $region99: #{tpu_custom_call.1} parent=23 // pred_region
          %p896 = scmp.lt.s32.totalorder %s43, 1
          %s897 = scalar_select %p896, %s43, 1
          %s898 = scalar_lea.vmem %s18, %s897
        $region100: #{tpu_custom_call.1} parent=23 // pred_fallthru
          _
        // Predicated region
        $region101: #{tpu_custom_call.1} parent=23 // pred_check
          %p899 = pneg %p561
        $region102: #{tpu_custom_call.1} parent=23 // pred_check_branch
          %901 = sbr.rel (%p899) target = $region104
        $region103: #{tpu_custom_call.1} parent=23 // pred_region
          %p902 = scmp.lt.s32.totalorder %s43, 1
          %s903 = scalar_select %p902, %s43, 1
          %s904 = scalar_lea.vmem %s19, %s903
        $region104: #{tpu_custom_call.1} parent=23 // pred_fallthru
          _
        // Predicated region
        $region105: #{tpu_custom_call.1} parent=23 // pred_check
          %p905 = pneg %p587
        $region106: #{tpu_custom_call.1} parent=23 // pred_check_branch
          %907 = sbr.rel (%p905) target = $region108
        $region107: #{tpu_custom_call.1} parent=23 // pred_region
          %p908 = scmp.lt.s32.totalorder %s43, 1
          %s909 = scalar_select %p908, %s43, 1
          %s910 = scalar_lea.vmem %s20, %s909
        $region108: #{tpu_custom_call.1} parent=23 // pred_fallthru
          _
        // Predicated region
        $region109: #{tpu_custom_call.1} parent=23 // pred_check
          %p911 = pneg %p613
        $region110: #{tpu_custom_call.1} parent=23 // pred_check_branch
          %913 = sbr.rel (%p911) target = $region112
        $region111: #{tpu_custom_call.1} parent=23 // pred_region
          %p914 = scmp.lt.s32.totalorder %s43, 1
          %s915 = scalar_select %p914, %s43, 1
          %s916 = scalar_lea.vmem %s21, %s915
        $region112: #{tpu_custom_call.1} parent=23 // pred_fallthru
          _
        // Predicated region
        $region113: #{tpu_custom_call.1} parent=23 // pred_check
          %p917 = pneg %p639
        $region114: #{tpu_custom_call.1} parent=23 // pred_check_branch
          %919 = sbr.rel (%p917) target = $region116
        $region115: #{tpu_custom_call.1} parent=23 // pred_region
          %p920 = scmp.lt.s32.totalorder %s43, 1
          %s921 = scalar_select %p920, %s43, 1
          %s922 = scalar_lea.vmem %s22, %s921
        $region116: #{tpu_custom_call.1} parent=23 // pred_fallthru
          _
        // Predicated region
        $region117: #{tpu_custom_call.1} parent=23 // pred_check
          %p923 = pneg %p665
        $region118: #{tpu_custom_call.1} parent=23 // pred_check_branch
          %925 = sbr.rel (%p923) target = $region120
        $region119: #{tpu_custom_call.1} parent=23 // pred_region
          %p926 = scmp.lt.s32.totalorder %s43, 1
          %s927 = scalar_select %p926, %s43, 1
          %s928 = scalar_lea.vmem %s23, %s927
        $region120: #{tpu_custom_call.1} parent=23 // pred_fallthru
          _
      $region24: #{tpu_custom_call.1} parent=5 // pred_fallthru
        _
      %p929 = scmp.le.s32.totalorder 1, %s35
      %p930 = scmp.lt.s32.totalorder %s35, 5
      %p931 = pnand %p929, %p930
      %p932 = pneg %p931
      // Predicated region
      $region121: #{tpu_custom_call.1} parent=5 // pred_check
        _
      $region122: #{tpu_custom_call.1} parent=5 // pred_check_branch
        %934 = sbr.rel (%p931) target = $region124
      $region123: #{tpu_custom_call.1} parent=5 // pred_region
        %s935 = ssub.s32 %s35, 1
        %p936 = scmp.lt.s32.totalorder %s44, 1
        %s937 = scalar_select %p936, %s44, 1
        %s938 = smul.addr %s937, 8
        %s939 = scalar_lea.vmem %s0, %s938
        %p940 = pneg %p73
        %p941 = pneg %p70
        %p942 = scmp.lt.s32.totalorder %s44, 1
        %s943 = scalar_select %p942, %s44, 1
        %s944 = smul.addr %s943, 8
        %s945 = scalar_lea.vmem %s1, %s944
        %p946 = pneg %p99
        %p947 = pneg %p96
        %p948 = scmp.lt.s32.totalorder %s44, 1
        %s949 = scalar_select %p948, %s44, 1
        %s950 = smul.addr %s949, 8
        %s951 = scalar_lea.vmem %s2, %s950
        %p952 = pneg %p125
        %p953 = pneg %p122
        %p954 = scmp.lt.s32.totalorder %s44, 1
        %s955 = scalar_select %p954, %s44, 1
        %s956 = smul.addr %s955, 8
        %s957 = scalar_lea.vmem %s3, %s956
        %p958 = pneg %p151
        %p959 = pneg %p148
        %p960 = scmp.lt.s32.totalorder %s45, 1
        %s961 = scalar_select %p960, %s45, 1
        %s962 = smul.addr %s961, 48
        %s963 = smul.addr %s962, 4
        %s964 = scalar_lea.vmem %s4, %s963
        %p965 = pneg %p177
        %p966 = pneg %p174
        %p967 = scmp.lt.s32.totalorder %s45, 1
        %s968 = scalar_select %p967, %s45, 1
        %s969 = smul.addr %s968, 12
        %s970 = scalar_lea.vmem %s5, %s969
        %p971 = pneg %p203
        %p972 = pneg %p200
        %p973 = scmp.lt.s32.totalorder %s45, 1
        %s974 = scalar_select %p973, %s45, 1
        %s975 = smul.addr %s974, 4
        %s976 = smul.addr %s975, 4
        %s977 = scalar_lea.vmem %s6, %s976
        %p978 = pneg %p229
        %p979 = pneg %p226
        %p980 = scmp.lt.s32.totalorder %s45, 1
        %s981 = scalar_select %p980, %s45, 1
        %s982 = scalar_lea.vmem %s7, %s981
        %p983 = pneg %p255
        %p984 = pneg %p252
        %p985 = scmp.lt.s32.totalorder %s45, 1
        %s986 = scalar_select %p985, %s45, 1
        %s987 = smul.addr %s986, 16
        %s988 = smul.addr %s987, 4
        %s989 = scalar_lea.vmem %s8, %s988
        %p990 = pneg %p281
        %p991 = pneg %p278
        %p992 = scmp.lt.s32.totalorder %s45, 1
        %s993 = scalar_select %p992, %s45, 1
        %s994 = smul.addr %s993, 4
        %s995 = scalar_lea.vmem %s9, %s994
        %p996 = pneg %p307
        %p997 = pneg %p304
        %p998 = scmp.lt.s32.totalorder %s45, 1
        %s999 = scalar_select %p998, %s45, 1
        %s1000 = smul.addr %s999, 32
        %s1001 = smul.addr %s1000, 4
        %s1002 = scalar_lea.vmem %s10, %s1001
        %p1003 = pneg %p333
        %p1004 = pneg %p330
        %p1005 = scmp.lt.s32.totalorder %s45, 1
        %s1006 = scalar_select %p1005, %s45, 1
        %s1007 = smul.addr %s1006, 8
        %s1008 = scalar_lea.vmem %s11, %s1007
        %p1009 = pneg %p359
        %p1010 = pneg %p356
        %p1011 = scmp.lt.s32.totalorder %s45, 1
        %s1012 = scalar_select %p1011, %s45, 1
        %s1013 = smul.addr %s1012, 4
        %s1014 = smul.addr %s1013, 4
        %s1015 = scalar_lea.vmem %s12, %s1014
        %p1016 = pneg %p385
        %p1017 = pneg %p382
        %p1018 = scmp.lt.s32.totalorder %s45, 1
        %s1019 = scalar_select %p1018, %s45, 1
        %s1020 = scalar_lea.vmem %s13, %s1019
        %p1021 = pneg %p411
        %p1022 = pneg %p408
        %p1023 = scmp.lt.s32.totalorder %s45, 1
        %s1024 = scalar_select %p1023, %s45, 1
        %s1025 = smul.addr %s1024, 4
        %s1026 = smul.addr %s1025, 4
        %s1027 = scalar_lea.vmem %s14, %s1026
        %p1028 = pneg %p437
        %p1029 = pneg %p434
        %p1030 = scmp.lt.s32.totalorder %s45, 1
        %s1031 = scalar_select %p1030, %s45, 1
        %s1032 = scalar_lea.vmem %s15, %s1031
        %p1033 = pneg %p463
        %p1034 = pneg %p460
        %p1035 = scmp.lt.s32.totalorder %s45, 1
        %s1036 = scalar_select %p1035, %s45, 1
        %s1037 = smul.addr %s1036, 8
        %s1038 = smul.addr %s1037, 4
        %s1039 = scalar_lea.vmem %s16, %s1038
        %p1040 = pneg %p489
        %p1041 = pneg %p486
        %p1042 = scmp.lt.s32.totalorder %s45, 1
        %s1043 = scalar_select %p1042, %s45, 1
        %s1044 = scalar_lea.vmem %s17, %s1043
        %p1045 = pneg %p515
        %p1046 = pneg %p512
        %p1047 = scmp.lt.s32.totalorder %s45, 1
        %s1048 = scalar_select %p1047, %s45, 1
        %s1049 = scalar_lea.vmem %s18, %s1048
        %p1050 = pneg %p541
        %p1051 = pneg %p538
        %p1052 = scmp.lt.s32.totalorder %s45, 1
        %s1053 = scalar_select %p1052, %s45, 1
        %s1054 = scalar_lea.vmem %s19, %s1053
        %p1055 = pneg %p567
        %p1056 = pneg %p564
        %p1057 = scmp.lt.s32.totalorder %s45, 1
        %s1058 = scalar_select %p1057, %s45, 1
        %s1059 = scalar_lea.vmem %s20, %s1058
        %p1060 = pneg %p593
        %p1061 = pneg %p590
        %p1062 = scmp.lt.s32.totalorder %s45, 1
        %s1063 = scalar_select %p1062, %s45, 1
        %s1064 = scalar_lea.vmem %s21, %s1063
        %p1065 = pneg %p619
        %p1066 = pneg %p616
        %p1067 = scmp.lt.s32.totalorder %s45, 1
        %s1068 = scalar_select %p1067, %s45, 1
        %s1069 = scalar_lea.vmem %s22, %s1068
        %p1070 = pneg %p645
        %p1071 = pneg %p642
        %p1072 = scmp.lt.s32.totalorder %s45, 1
        %s1073 = scalar_select %p1072, %s45, 1
        %s1074 = scalar_lea.vmem %s23, %s1073
        %p1075 = pneg %p671
        %p1076 = pneg %p668
        %p1077 = pneg %p692
        %p1078 = pneg %p689
        %p1079 = pneg %p713
        %p1080 = pneg %p710
        %p1081 = pneg %p739
        %p1082 = pneg %p736
        %s1083 = sand.u32 %s726, 1
        %s1084 = scalar_lea.sflag [#allocation4], %s1083
        %s1085 = sand.u32 %s726, 1
        %s1086 = smul.addr %s1085, 8
        %s1087 = scalar_lea.vmem [#allocation3], %s1086
        %p1088 = scmp.lt.s32.totalorder %s44, 1
        %s1089 = scalar_select %p1088, %s44, 1
        %s1090 = smul.addr %s1089, 8
        %s1091 = scalar_lea.vmem %s0, %s1090
        %p1092 = scmp.lt.s32.totalorder %s44, 1
        %s1093 = scalar_select %p1092, %s44, 1
        %s1094 = smul.addr %s1093, 8
        %s1095 = scalar_lea.vmem %s1, %s1094
        %p1096 = scmp.lt.s32.totalorder %s44, 1
        %s1097 = scalar_select %p1096, %s44, 1
        %s1098 = smul.addr %s1097, 8
        %s1099 = scalar_lea.vmem %s2, %s1098
        %p1100 = scmp.lt.s32.totalorder %s44, 1
        %s1101 = scalar_select %p1100, %s44, 1
        %s1102 = smul.addr %s1101, 8
        %s1103 = scalar_lea.vmem %s3, %s1102
        %p1104 = scmp.lt.s32.totalorder %s45, 1
        %s1105 = scalar_select %p1104, %s45, 1
        %s1106 = smul.addr %s1105, 48
        %s1107 = smul.addr %s1106, 4
        %s1108 = scalar_lea.vmem %s4, %s1107
        %p1109 = scmp.lt.s32.totalorder %s45, 1
        %s1110 = scalar_select %p1109, %s45, 1
        %s1111 = smul.addr %s1110, 12
        %s1112 = scalar_lea.vmem %s5, %s1111
        %p1113 = scmp.lt.s32.totalorder %s45, 1
        %s1114 = scalar_select %p1113, %s45, 1
        %s1115 = smul.addr %s1114, 4
        %s1116 = smul.addr %s1115, 4
        %s1117 = scalar_lea.vmem %s6, %s1116
        %p1118 = scmp.lt.s32.totalorder %s45, 1
        %s1119 = scalar_select %p1118, %s45, 1
        %s1120 = scalar_lea.vmem %s7, %s1119
        %p1121 = scmp.lt.s32.totalorder %s45, 1
        %s1122 = scalar_select %p1121, %s45, 1
        %s1123 = smul.addr %s1122, 16
        %s1124 = smul.addr %s1123, 4
        %s1125 = scalar_lea.vmem %s8, %s1124
        %p1126 = scmp.lt.s32.totalorder %s45, 1
        %s1127 = scalar_select %p1126, %s45, 1
        %s1128 = smul.addr %s1127, 4
        %s1129 = scalar_lea.vmem %s9, %s1128
        %p1130 = scmp.lt.s32.totalorder %s45, 1
        %s1131 = scalar_select %p1130, %s45, 1
        %s1132 = smul.addr %s1131, 32
        %s1133 = smul.addr %s1132, 4
        %s1134 = scalar_lea.vmem %s10, %s1133
        %p1135 = scmp.lt.s32.totalorder %s45, 1
        %s1136 = scalar_select %p1135, %s45, 1
        %s1137 = smul.addr %s1136, 8
        %s1138 = scalar_lea.vmem %s11, %s1137
        %p1139 = scmp.lt.s32.totalorder %s45, 1
        %s1140 = scalar_select %p1139, %s45, 1
        %s1141 = smul.addr %s1140, 4
        %s1142 = smul.addr %s1141, 4
        %s1143 = scalar_lea.vmem %s12, %s1142
        %p1144 = scmp.lt.s32.totalorder %s45, 1
        %s1145 = scalar_select %p1144, %s45, 1
        %s1146 = scalar_lea.vmem %s13, %s1145
        %p1147 = scmp.lt.s32.totalorder %s45, 1
        %s1148 = scalar_select %p1147, %s45, 1
        %s1149 = smul.addr %s1148, 4
        %s1150 = smul.addr %s1149, 4
        %s1151 = scalar_lea.vmem %s14, %s1150
        %p1152 = scmp.lt.s32.totalorder %s45, 1
        %s1153 = scalar_select %p1152, %s45, 1
        %s1154 = scalar_lea.vmem %s15, %s1153
        %p1155 = scmp.lt.s32.totalorder %s45, 1
        %s1156 = scalar_select %p1155, %s45, 1
        %s1157 = smul.addr %s1156, 8
        %s1158 = smul.addr %s1157, 4
        %s1159 = scalar_lea.vmem %s16, %s1158
        %p1160 = scmp.lt.s32.totalorder %s45, 1
        %s1161 = scalar_select %p1160, %s45, 1
        %s1162 = scalar_lea.vmem %s17, %s1161
        %p1163 = scmp.lt.s32.totalorder %s45, 1
        %s1164 = scalar_select %p1163, %s45, 1
        %s1165 = scalar_lea.vmem %s18, %s1164
        %p1166 = scmp.lt.s32.totalorder %s45, 1
        %s1167 = scalar_select %p1166, %s45, 1
        %s1168 = scalar_lea.vmem %s19, %s1167
        %p1169 = scmp.lt.s32.totalorder %s45, 1
        %s1170 = scalar_select %p1169, %s45, 1
        %s1171 = scalar_lea.vmem %s20, %s1170
        %p1172 = scmp.lt.s32.totalorder %s45, 1
        %s1173 = scalar_select %p1172, %s45, 1
        %s1174 = scalar_lea.vmem %s21, %s1173
        %p1175 = scmp.lt.s32.totalorder %s45, 1
        %s1176 = scalar_select %p1175, %s45, 1
        %s1177 = scalar_lea.vmem %s22, %s1176
        %p1178 = scmp.lt.s32.totalorder %s45, 1
        %s1179 = scalar_select %p1178, %s45, 1
        %s1180 = scalar_lea.vmem %s23, %s1179
        %p1182 = scmp.eq.s32.totalorder %s45, 0
        // Predicated region
        $region125: #{tpu_custom_call.1} parent=123 // pred_check
          %p1183 = pneg %p1182
        $region126: #{tpu_custom_call.1} parent=123 // pred_check_branch
          %1185 = sbr.rel (%p1183) target = $region128
        $region127: #{tpu_custom_call.1} parent=123 // pred_region
          %v1186 = vld [vmem:[%s1091] sm:$0xff]
          %vm1187 = vcmask 261120
          %1188 = vst.msk [vmem:[#allocation2] sm:$0xff] %vm1187, %v1186
        $region128: #{tpu_custom_call.1} parent=123 // pred_fallthru
          _
        %v1189 = vld [vmem:[#allocation2] sm:$0xff]
        %v1190 = vld [vmem:[%s1095] sm:$0xff]
        %v1191 = vld [vmem:[%s1099] sm:$0xff]
        %v1192 = vld [vmem:[%s1103] sm:$0xff]
        %v1193 = vld [vmem:[%s1108] sm:$0xf]
        %v1194 = vld [vmem:[%s1108 + $0x4] sm:$0xf]
        %v1195 = vld [vmem:[%s1108 + $0x8] sm:$0xf]
        %v1196 = vld [vmem:[%s1108 + $0xc] sm:$0xf]
        %v1197 = vld [vmem:[%s1108 + $0x10] sm:$0xf]
        %v1198 = vld [vmem:[%s1108 + $0x14] sm:$0xf]
        %v1199 = vld [vmem:[%s1108 + $0x18] sm:$0xf]
        %v1200 = vld [vmem:[%s1108 + $0x1c] sm:$0xf]
        %v1201 = vld [vmem:[%s1108 + $0x20] sm:$0xf]
        %v1202 = vld [vmem:[%s1108 + $0x24] sm:$0xf]
        %v1203 = vld [vmem:[%s1108 + $0x28] sm:$0xf]
        %v1204 = vld [vmem:[%s1108 + $0x2c] sm:$0xf]
        %v1205 = vld [vmem:[%s1108 + $0x30] sm:$0xf]
        %v1206 = vld [vmem:[%s1108 + $0x34] sm:$0xf]
        %v1207 = vld [vmem:[%s1108 + $0x38] sm:$0xf]
        %v1208 = vld [vmem:[%s1108 + $0x3c] sm:$0xf]
        %v1209 = vld [vmem:[%s1108 + $0x40] sm:$0xf]
        %v1210 = vld [vmem:[%s1108 + $0x44] sm:$0xf]
        %v1211 = vld [vmem:[%s1108 + $0x48] sm:$0xf]
        %v1212 = vld [vmem:[%s1108 + $0x4c] sm:$0xf]
        %v1213 = vld [vmem:[%s1108 + $0x50] sm:$0xf]
        %v1214 = vld [vmem:[%s1108 + $0x54] sm:$0xf]
        %v1215 = vld [vmem:[%s1108 + $0x58] sm:$0xf]
        %v1216 = vld [vmem:[%s1108 + $0x5c] sm:$0xf]
        %v1217 = vld [vmem:[%s1108 + $0x60] sm:$0xf]
        %v1218 = vld [vmem:[%s1108 + $0x64] sm:$0xf]
        %v1219 = vld [vmem:[%s1108 + $0x68] sm:$0xf]
        %v1220 = vld [vmem:[%s1108 + $0x6c] sm:$0xf]
        %v1221 = vld [vmem:[%s1108 + $0x70] sm:$0xf]
        %v1222 = vld [vmem:[%s1108 + $0x74] sm:$0xf]
        %v1223 = vld [vmem:[%s1108 + $0x78] sm:$0xf]
        %v1224 = vld [vmem:[%s1108 + $0x7c] sm:$0xf]
        %v1225 = vld [vmem:[%s1108 + $0x80] sm:$0xf]
        %v1226 = vld [vmem:[%s1108 + $0x84] sm:$0xf]
        %v1227 = vld [vmem:[%s1108 + $0x88] sm:$0xf]
        %v1228 = vld [vmem:[%s1108 + $0x8c] sm:$0xf]
        %v1229 = vld [vmem:[%s1108 + $0x90] sm:$0xf]
        %v1230 = vld [vmem:[%s1108 + $0x94] sm:$0xf]
        %v1231 = vld [vmem:[%s1108 + $0x98] sm:$0xf]
        %v1232 = vld [vmem:[%s1108 + $0x9c] sm:$0xf]
        %v1233 = vld [vmem:[%s1108 + $0xa0] sm:$0xf]
        %v1234 = vld [vmem:[%s1108 + $0xa4] sm:$0xf]
        %v1235 = vld [vmem:[%s1108 + $0xa8] sm:$0xf]
        %v1236 = vld [vmem:[%s1108 + $0xac] sm:$0xf]
        %v1237 = vld [vmem:[%s1108 + $0xb0] sm:$0xf]
        %v1238 = vld [vmem:[%s1108 + $0xb4] sm:$0xf]
        %v1239 = vld [vmem:[%s1108 + $0xb8] sm:$0xf]
        %v1240 = vld [vmem:[%s1108 + $0xbc] sm:$0xf]
        %v1241 = vld [vmem:[%s1112] sm:$0x1]
        %v1242 = vld [vmem:[%s1112 + $0x1] sm:$0x1]
        %v1243 = vld [vmem:[%s1112 + $0x2] sm:$0x1]
        %v1244 = vld [vmem:[%s1112 + $0x3] sm:$0x1]
        %v1245 = vld [vmem:[%s1112 + $0x4] sm:$0x1]
        %v1246 = vld [vmem:[%s1112 + $0x5] sm:$0x1]
        %v1247 = vld [vmem:[%s1112 + $0x6] sm:$0x1]
        %v1248 = vld [vmem:[%s1112 + $0x7] sm:$0x1]
        %v1249 = vld [vmem:[%s1112 + $0x8] sm:$0x1]
        %v1250 = vld [vmem:[%s1112 + $0x9] sm:$0x1]
        %v1251 = vld [vmem:[%s1112 + $0xa] sm:$0x1]
        %v1252 = vld [vmem:[%s1112 + $0xb] sm:$0x1]
        %v1253 = vpack.c.bf16 %v1189, %v1189
        %v1266 = vperm.slane %v1241, 0
        %v1267 = vperm.slane %v1242, 0
        %v1268 = vperm.slane %v1243, 0
        %v1269 = vperm.slane %v1244, 0
        %v1270 = vperm.slane %v1245, 0
        %v1271 = vperm.slane %v1246, 0
        %v1272 = vperm.slane %v1247, 0
        %v1273 = vperm.slane %v1248, 0
        %v1274 = vperm.slane %v1249, 0
        %v1275 = vperm.slane %v1250, 0
        %v1276 = vperm.slane %v1251, 0
        %v1277 = vperm.slane %v1252, 0
        %v1294 = vunpack.c.l.b16 %v1193
        %v1295 = vunpack.c.l.b16 %v1194
        %v1296 = vunpack.c.l.b16 %v1195
        %v1297 = vunpack.c.l.b16 %v1196
        %v1298 = vpack.c.b16 %v1295, %v1294
        %v1299 = vpack.c.b16 %v1297, %v1296
        %vm1302 = vcmask 261120
        %v1304 = vsel %vm1302, %v1253, 0
        %1306 = vmatpush.bf16.msra.mxu0 0
        %1307 = vmatpush.bf16.msra.mxu0 0
        %1308 = vmatpush.bf16.msra.mxu0 0
        %1309 = vmatpush.bf16.msra.mxu0 0
        %1310 = vmatpush.bf16.msra.mxu0 0
        %1311 = vmatpush.bf16.msra.mxu0 0
        %1312 = vmatpush.bf16.msra.mxu0 %v1299
        %1313 = vmatpush.bf16.msra.mxu0 %v1298
        %1314 = vmatmul.bf16.gmra.mxu0 %v1304
        %v1315 = vpop.f32.mrf.mxu0
        %v1316 = vadd.f32 %v1266, %v1315
        %v1317 = vpop.f32.mrf.mxu0
        %1318 = vdwg.mxu0
        %v1323 = vunpack.c.l.b16 %v1197
        %v1324 = vunpack.c.l.b16 %v1198
        %v1325 = vunpack.c.l.b16 %v1199
        %v1326 = vunpack.c.l.b16 %v1200
        %v1327 = vpack.c.b16 %v1324, %v1323
        %v1328 = vpack.c.b16 %v1326, %v1325
        %1331 = vmatpush.bf16.msra.mxu0 0
        %1332 = vmatpush.bf16.msra.mxu0 0
        %1333 = vmatpush.bf16.msra.mxu0 0
        %1334 = vmatpush.bf16.msra.mxu0 0
        %1335 = vmatpush.bf16.msra.mxu0 0
        %1336 = vmatpush.bf16.msra.mxu0 0
        %1337 = vmatpush.bf16.msra.mxu0 %v1328
        %1338 = vmatpush.bf16.msra.mxu0 %v1327
        %1339 = vmatmul.bf16.gmra.mxu0 %v1304
        %v1340 = vpop.f32.mrf.mxu0
        %v1341 = vadd.f32 %v1267, %v1340
        %v1342 = vpop.f32.mrf.mxu0
        %1343 = vdwg.mxu0
        %v1348 = vunpack.c.l.b16 %v1201
        %v1349 = vunpack.c.l.b16 %v1202
        %v1350 = vunpack.c.l.b16 %v1203
        %v1351 = vunpack.c.l.b16 %v1204
        %v1352 = vpack.c.b16 %v1349, %v1348
        %v1353 = vpack.c.b16 %v1351, %v1350
        %1356 = vmatpush.bf16.msra.mxu0 0
        %1357 = vmatpush.bf16.msra.mxu0 0
        %1358 = vmatpush.bf16.msra.mxu0 0
        %1359 = vmatpush.bf16.msra.mxu0 0
        %1360 = vmatpush.bf16.msra.mxu0 0
        %1361 = vmatpush.bf16.msra.mxu0 0
        %1362 = vmatpush.bf16.msra.mxu0 %v1353
        %1363 = vmatpush.bf16.msra.mxu0 %v1352
        %1364 = vmatmul.bf16.gmra.mxu0 %v1304
        %v1365 = vpop.f32.mrf.mxu0
        %v1366 = vadd.f32 %v1268, %v1365
        %v1367 = vpop.f32.mrf.mxu0
        %1368 = vdwg.mxu0
        %v1373 = vunpack.c.l.b16 %v1205
        %v1374 = vunpack.c.l.b16 %v1206
        %v1375 = vunpack.c.l.b16 %v1207
        %v1376 = vunpack.c.l.b16 %v1208
        %v1377 = vpack.c.b16 %v1374, %v1373
        %v1378 = vpack.c.b16 %v1376, %v1375
        %1381 = vmatpush.bf16.msra.mxu0 0
        %1382 = vmatpush.bf16.msra.mxu0 0
        %1383 = vmatpush.bf16.msra.mxu0 0
        %1384 = vmatpush.bf16.msra.mxu0 0
        %1385 = vmatpush.bf16.msra.mxu0 0
        %1386 = vmatpush.bf16.msra.mxu0 0
        %1387 = vmatpush.bf16.msra.mxu0 %v1378
        %1388 = vmatpush.bf16.msra.mxu0 %v1377
        %1389 = vmatmul.bf16.gmra.mxu0 %v1304
        %v1390 = vpop.f32.mrf.mxu0
        %v1391 = vadd.f32 %v1269, %v1390
        %v1392 = vpop.f32.mrf.mxu0
        %1393 = vdwg.mxu0
        %v1398 = vunpack.c.l.b16 %v1209
        %v1399 = vunpack.c.l.b16 %v1210
        %v1400 = vunpack.c.l.b16 %v1211
        %v1401 = vunpack.c.l.b16 %v1212
        %v1402 = vpack.c.b16 %v1399, %v1398
        %v1403 = vpack.c.b16 %v1401, %v1400
        %1406 = vmatpush.bf16.msra.mxu0 0
        %1407 = vmatpush.bf16.msra.mxu0 0
        %1408 = vmatpush.bf16.msra.mxu0 0
        %1409 = vmatpush.bf16.msra.mxu0 0
        %1410 = vmatpush.bf16.msra.mxu0 0
        %1411 = vmatpush.bf16.msra.mxu0 0
        %1412 = vmatpush.bf16.msra.mxu0 %v1403
        %1413 = vmatpush.bf16.msra.mxu0 %v1402
        %1414 = vmatmul.bf16.gmra.mxu0 %v1304
        %v1415 = vpop.f32.mrf.mxu0
        %v1416 = vadd.f32 %v1270, %v1415
        %v1417 = vpop.f32.mrf.mxu0
        %1418 = vdwg.mxu0
        %v1423 = vunpack.c.l.b16 %v1213
        %v1424 = vunpack.c.l.b16 %v1214
        %v1425 = vunpack.c.l.b16 %v1215
        %v1426 = vunpack.c.l.b16 %v1216
        %v1427 = vpack.c.b16 %v1424, %v1423
        %v1428 = vpack.c.b16 %v1426, %v1425
        %1431 = vmatpush.bf16.msra.mxu0 0
        %1432 = vmatpush.bf16.msra.mxu0 0
        %1433 = vmatpush.bf16.msra.mxu0 0
        %1434 = vmatpush.bf16.msra.mxu0 0
        %1435 = vmatpush.bf16.msra.mxu0 0
        %1436 = vmatpush.bf16.msra.mxu0 0
        %1437 = vmatpush.bf16.msra.mxu0 %v1428
        %1438 = vmatpush.bf16.msra.mxu0 %v1427
        %1439 = vmatmul.bf16.gmra.mxu0 %v1304
        %v1440 = vpop.f32.mrf.mxu0
        %v1441 = vadd.f32 %v1271, %v1440
        %v1442 = vpop.f32.mrf.mxu0
        %1443 = vdwg.mxu0
        %v1448 = vunpack.c.l.b16 %v1217
        %v1449 = vunpack.c.l.b16 %v1218
        %v1450 = vunpack.c.l.b16 %v1219
        %v1451 = vunpack.c.l.b16 %v1220
        %v1452 = vpack.c.b16 %v1449, %v1448
        %v1453 = vpack.c.b16 %v1451, %v1450
        %1456 = vmatpush.bf16.msra.mxu0 0
        %1457 = vmatpush.bf16.msra.mxu0 0
        %1458 = vmatpush.bf16.msra.mxu0 0
        %1459 = vmatpush.bf16.msra.mxu0 0
        %1460 = vmatpush.bf16.msra.mxu0 0
        %1461 = vmatpush.bf16.msra.mxu0 0
        %1462 = vmatpush.bf16.msra.mxu0 %v1453
        %1463 = vmatpush.bf16.msra.mxu0 %v1452
        %1464 = vmatmul.bf16.gmra.mxu0 %v1304
        %v1465 = vpop.f32.mrf.mxu0
        %v1466 = vadd.f32 %v1272, %v1465
        %v1467 = vpop.f32.mrf.mxu0
        %1468 = vdwg.mxu0
        %v1473 = vunpack.c.l.b16 %v1221
        %v1474 = vunpack.c.l.b16 %v1222
        %v1475 = vunpack.c.l.b16 %v1223
        %v1476 = vunpack.c.l.b16 %v1224
        %v1477 = vpack.c.b16 %v1474, %v1473
        %v1478 = vpack.c.b16 %v1476, %v1475
        %1481 = vmatpush.bf16.msra.mxu0 0
        %1482 = vmatpush.bf16.msra.mxu0 0
        %1483 = vmatpush.bf16.msra.mxu0 0
        %1484 = vmatpush.bf16.msra.mxu0 0
        %1485 = vmatpush.bf16.msra.mxu0 0
        %1486 = vmatpush.bf16.msra.mxu0 0
        %1487 = vmatpush.bf16.msra.mxu0 %v1478
        %1488 = vmatpush.bf16.msra.mxu0 %v1477
        %1489 = vmatmul.bf16.gmra.mxu0 %v1304
        %v1490 = vpop.f32.mrf.mxu0
        %v1491 = vadd.f32 %v1273, %v1490
        %v1492 = vpop.f32.mrf.mxu0
        %1493 = vdwg.mxu0
        %v1498 = vunpack.c.l.b16 %v1225
        %v1499 = vunpack.c.l.b16 %v1226
        %v1500 = vunpack.c.l.b16 %v1227
        %v1501 = vunpack.c.l.b16 %v1228
        %v1502 = vpack.c.b16 %v1499, %v1498
        %v1503 = vpack.c.b16 %v1501, %v1500
        %1506 = vmatpush.bf16.msra.mxu0 0
        %1507 = vmatpush.bf16.msra.mxu0 0
        %1508 = vmatpush.bf16.msra.mxu0 0
        %1509 = vmatpush.bf16.msra.mxu0 0
        %1510 = vmatpush.bf16.msra.mxu0 0
        %1511 = vmatpush.bf16.msra.mxu0 0
        %1512 = vmatpush.bf16.msra.mxu0 %v1503
        %1513 = vmatpush.bf16.msra.mxu0 %v1502
        %1514 = vmatmul.bf16.gmra.mxu0 %v1304
        %v1515 = vpop.f32.mrf.mxu0
        %v1516 = vadd.f32 %v1274, %v1515
        %v1517 = vpop.f32.mrf.mxu0
        %1518 = vdwg.mxu0
        %v1523 = vunpack.c.l.b16 %v1229
        %v1524 = vunpack.c.l.b16 %v1230
        %v1525 = vunpack.c.l.b16 %v1231
        %v1526 = vunpack.c.l.b16 %v1232
        %v1527 = vpack.c.b16 %v1524, %v1523
        %v1528 = vpack.c.b16 %v1526, %v1525
        %1531 = vmatpush.bf16.msra.mxu0 0
        %1532 = vmatpush.bf16.msra.mxu0 0
        %1533 = vmatpush.bf16.msra.mxu0 0
        %1534 = vmatpush.bf16.msra.mxu0 0
        %1535 = vmatpush.bf16.msra.mxu0 0
        %1536 = vmatpush.bf16.msra.mxu0 0
        %1537 = vmatpush.bf16.msra.mxu0 %v1528
        %1538 = vmatpush.bf16.msra.mxu0 %v1527
        %1539 = vmatmul.bf16.gmra.mxu0 %v1304
        %v1540 = vpop.f32.mrf.mxu0
        %v1541 = vadd.f32 %v1275, %v1540
        %v1542 = vpop.f32.mrf.mxu0
        %1543 = vdwg.mxu0
        %v1548 = vunpack.c.l.b16 %v1233
        %v1549 = vunpack.c.l.b16 %v1234
        %v1550 = vunpack.c.l.b16 %v1235
        %v1551 = vunpack.c.l.b16 %v1236
        %v1552 = vpack.c.b16 %v1549, %v1548
        %v1553 = vpack.c.b16 %v1551, %v1550
        %1556 = vmatpush.bf16.msra.mxu0 0
        %1557 = vmatpush.bf16.msra.mxu0 0
        %1558 = vmatpush.bf16.msra.mxu0 0
        %1559 = vmatpush.bf16.msra.mxu0 0
        %1560 = vmatpush.bf16.msra.mxu0 0
        %1561 = vmatpush.bf16.msra.mxu0 0
        %1562 = vmatpush.bf16.msra.mxu0 %v1553
        %1563 = vmatpush.bf16.msra.mxu0 %v1552
        %1564 = vmatmul.bf16.gmra.mxu0 %v1304
        %v1565 = vpop.f32.mrf.mxu0
        %v1566 = vadd.f32 %v1276, %v1565
        %v1567 = vpop.f32.mrf.mxu0
        %1568 = vdwg.mxu0
        %v1573 = vunpack.c.l.b16 %v1237
        %v1574 = vunpack.c.l.b16 %v1238
        %v1575 = vunpack.c.l.b16 %v1239
        %v1576 = vunpack.c.l.b16 %v1240
        %v1577 = vpack.c.b16 %v1574, %v1573
        %v1578 = vpack.c.b16 %v1576, %v1575
        %1581 = vmatpush.bf16.msra.mxu0 0
        %1582 = vmatpush.bf16.msra.mxu0 0
        %1583 = vmatpush.bf16.msra.mxu0 0
        %1584 = vmatpush.bf16.msra.mxu0 0
        %1585 = vmatpush.bf16.msra.mxu0 0
        %1586 = vmatpush.bf16.msra.mxu0 0
        %1587 = vmatpush.bf16.msra.mxu0 %v1578
        %1588 = vmatpush.bf16.msra.mxu0 %v1577
        %1589 = vmatmul.bf16.gmra.mxu0 %v1304
        %v1590 = vpop.f32.mrf.mxu0
        %v1591 = vadd.f32 %v1277, %v1590
        %v1592 = vpop.f32.mrf.mxu0
        %1593 = vdwg.mxu0
        %v1594 = vld [vmem:[%s1117] sm:$0xf]
        %v1595 = vld [vmem:[%s1117 + $0x4] sm:$0xf]
        %v1596 = vld [vmem:[%s1117 + $0x8] sm:$0xf]
        %v1597 = vld [vmem:[%s1117 + $0xc] sm:$0xf]
        %v1598 = vld [vmem:[%s1120] sm:$0x1]
        %v1599 = vmul.f32 %v1316, 0.35355338
        %v1600 = vmul.f32 %v1341, 0.35355338
        %v1601 = vmul.f32 %v1366, 0.35355338
        %v1602 = vmul.f32 %v1391, 0.35355338
        %v1603 = vpack.c.bf16 %v1599, %v1599
        %v1604 = vpack.c.bf16 %v1600, %v1600
        %v1605 = vpack.c.bf16 %v1601, %v1601
        %v1606 = vpack.c.bf16 %v1602, %v1602
        %v1607 = vpack.c.bf16 %v1416, %v1416
        %v1608 = vpack.c.bf16 %v1441, %v1441
        %v1609 = vpack.c.bf16 %v1466, %v1466
        %v1610 = vpack.c.bf16 %v1491, %v1491
        %vm1611 = vcmask 64512
        %v1613 = vsel %vm1611, %v1603, 0
        %v1616 = vsel %vm1611, %v1607, 0
        %1618 = vmatpush.bf16.xpose.msra.mxu0 0
        %1619 = vmatpush.bf16.xpose.msra.mxu0 0
        %1620 = vmatpush.bf16.xpose.msra.mxu0 0
        %1621 = vmatpush.bf16.xpose.msra.mxu0 0
        %1622 = vmatpush.bf16.xpose.msra.mxu0 0
        %1623 = vmatpush.bf16.xpose.msra.mxu0 0
        %1624 = vmatpush.bf16.xpose.msra.mxu0 0
        %1625 = vmatpush.bf16.xpose.msra.mxu0 %v1616
        %1626 = vmatmul.bf16.gmra.mxu0 %v1613
        %v1627 = vpop.f32.mrf.mxu0
        %v1628 = vadd.f32 0.0, %v1627
        %v1629 = vpop.f32.mrf.mxu0
        %1630 = vdwg.mxu0
        %v1632 = vsel %vm1611, %v1604, 0
        %v1635 = vsel %vm1611, %v1608, 0
        %1637 = vmatpush.bf16.xpose.msra.mxu0 0
        %1638 = vmatpush.bf16.xpose.msra.mxu0 0
        %1639 = vmatpush.bf16.xpose.msra.mxu0 0
        %1640 = vmatpush.bf16.xpose.msra.mxu0 0
        %1641 = vmatpush.bf16.xpose.msra.mxu0 0
        %1642 = vmatpush.bf16.xpose.msra.mxu0 0
        %1643 = vmatpush.bf16.xpose.msra.mxu0 0
        %1644 = vmatpush.bf16.xpose.msra.mxu0 %v1635
        %1645 = vmatmul.bf16.gmra.mxu0 %v1632
        %v1646 = vpop.f32.mrf.mxu0
        %v1647 = vadd.f32 0.0, %v1646
        %v1648 = vpop.f32.mrf.mxu0
        %1649 = vdwg.mxu0
        %v1651 = vsel %vm1611, %v1605, 0
        %v1654 = vsel %vm1611, %v1609, 0
        %1656 = vmatpush.bf16.xpose.msra.mxu0 0
        %1657 = vmatpush.bf16.xpose.msra.mxu0 0
        %1658 = vmatpush.bf16.xpose.msra.mxu0 0
        %1659 = vmatpush.bf16.xpose.msra.mxu0 0
        %1660 = vmatpush.bf16.xpose.msra.mxu0 0
        %1661 = vmatpush.bf16.xpose.msra.mxu0 0
        %1662 = vmatpush.bf16.xpose.msra.mxu0 0
        %1663 = vmatpush.bf16.xpose.msra.mxu0 %v1654
        %1664 = vmatmul.bf16.gmra.mxu0 %v1651
        %v1665 = vpop.f32.mrf.mxu0
        %v1666 = vadd.f32 0.0, %v1665
        %v1667 = vpop.f32.mrf.mxu0
        %1668 = vdwg.mxu0
        %v1670 = vsel %vm1611, %v1606, 0
        %v1673 = vsel %vm1611, %v1610, 0
        %1675 = vmatpush.bf16.xpose.msra.mxu0 0
        %1676 = vmatpush.bf16.xpose.msra.mxu0 0
        %1677 = vmatpush.bf16.xpose.msra.mxu0 0
        %1678 = vmatpush.bf16.xpose.msra.mxu0 0
        %1679 = vmatpush.bf16.xpose.msra.mxu0 0
        %1680 = vmatpush.bf16.xpose.msra.mxu0 0
        %1681 = vmatpush.bf16.xpose.msra.mxu0 0
        %1682 = vmatpush.bf16.xpose.msra.mxu0 %v1673
        %1683 = vmatmul.bf16.gmra.mxu0 %v1670
        %v1684 = vpop.f32.mrf.mxu0
        %v1685 = vadd.f32 0.0, %v1684
        %v1686 = vpop.f32.mrf.mxu0
        %1687 = vdwg.mxu0
        %vm1688 = vcmp.gt.f32.partialorder %v1191, 0.0
        %v1689 = vsel %vm1688, 1, 0
        %vm1690 = vcmp.eq.s32.totalorder %v1689, 1
        %v1691 = vsel %vm1690, %v1628, -1e+09
        %v1692 = vsel %vm1690, %v1647, -1e+09
        %v1693 = vsel %vm1690, %v1666, -1e+09
        %v1694 = vsel %vm1690, %v1685, -1e+09
        %v1695 = vsel %vm1611, %v1691, -inf
        %1696 = vmax.xlane.f32.xlu0 %v1695
        %v1697 = vpop.xlane.xlu0 %1696
        %v1698 = vsel %vm1611, %v1692, -inf
        %1699 = vmax.xlane.f32.xlu0 %v1698
        %v1700 = vpop.xlane.xlu0 %1699
        %v1701 = vsel %vm1611, %v1693, -inf
        %1702 = vmax.xlane.f32.xlu0 %v1701
        %v1703 = vpop.xlane.xlu0 %1702
        %v1704 = vsel %vm1611, %v1694, -inf
        %1705 = vmax.xlane.f32.xlu0 %v1704
        %v1706 = vpop.xlane.xlu0 %1705
        %v1707 = vsub.f32 %v1691, %v1697
        %v1708 = vsub.f32 %v1692, %v1700
        %v1709 = vsub.f32 %v1693, %v1703
        %v1710 = vsub.f32 %v1694, %v1706
        %v1711 = vmul.f32 %v1707, 1.442695
        %v1712 = vpow.pop %v1711
        %v1713 = vmul.f32 %v1708, 1.442695
        %v1714 = vpow.pop %v1713
        %v1715 = vmul.f32 %v1709, 1.442695
        %v1716 = vpow.pop %v1715
        %v1717 = vmul.f32 %v1710, 1.442695
        %v1718 = vpow.pop %v1717
        %v1719 = vsel %vm1611, %v1712, 0.0
        %1720 = vadd.xlane.f32.xlu0 %v1719
        %v1721 = vpop.xlane.xlu0 %1720
        %v1722 = vsel %vm1611, %v1714, 0.0
        %1723 = vadd.xlane.f32.xlu0 %v1722
        %v1724 = vpop.xlane.xlu0 %1723
        %v1725 = vsel %vm1611, %v1716, 0.0
        %1726 = vadd.xlane.f32.xlu0 %v1725
        %v1727 = vpop.xlane.xlu0 %1726
        %v1728 = vsel %vm1611, %v1718, 0.0
        %1729 = vadd.xlane.f32.xlu0 %v1728
        %v1730 = vpop.xlane.xlu0 %1729
        %v1731 = vrcp.pop %v1721
        %v1732 = vrcp.pop %v1724
        %v1733 = vrcp.pop %v1727
        %v1734 = vrcp.pop %v1730
        %v1735 = vmul.f32 %v1712, %v1731
        %v1736 = vmul.f32 %v1714, %v1732
        %v1737 = vmul.f32 %v1716, %v1733
        %v1738 = vmul.f32 %v1718, %v1734
        %v1739 = vpack.c.bf16 %v1735, %v1735
        %v1740 = vpack.c.bf16 %v1736, %v1736
        %v1741 = vpack.c.bf16 %v1737, %v1737
        %v1742 = vpack.c.bf16 %v1738, %v1738
        %v1743 = vpack.c.bf16 %v1516, %v1516
        %v1744 = vpack.c.bf16 %v1541, %v1541
        %v1745 = vpack.c.bf16 %v1566, %v1566
        %v1746 = vpack.c.bf16 %v1591, %v1591
        %v1748 = vsel %vm1611, %v1739, 0
        %vm1750 = vcmask 1043456
        %v1752 = vsel %vm1750, %v1743, 0
        %1754 = vmatpush.bf16.msra.mxu0 0
        %1755 = vmatpush.bf16.msra.mxu0 0
        %1756 = vmatpush.bf16.msra.mxu0 0
        %1757 = vmatpush.bf16.msra.mxu0 0
        %1758 = vmatpush.bf16.msra.mxu0 0
        %1759 = vmatpush.bf16.msra.mxu0 0
        %1760 = vmatpush.bf16.msra.mxu0 0
        %1761 = vmatpush.bf16.msra.mxu0 %v1752
        %1762 = vmatmul.bf16.gmra.mxu0 %v1748
        %v1763 = vpop.f32.mrf.mxu0
        %v1764 = vadd.f32 0.0, %v1763
        %v1765 = vpop.f32.mrf.mxu0
        %1766 = vdwg.mxu0
        %v1768 = vsel %vm1611, %v1740, 0
        %v1771 = vsel %vm1750, %v1744, 0
        %1773 = vmatpush.bf16.msra.mxu0 0
        %1774 = vmatpush.bf16.msra.mxu0 0
        %1775 = vmatpush.bf16.msra.mxu0 0
        %1776 = vmatpush.bf16.msra.mxu0 0
        %1777 = vmatpush.bf16.msra.mxu0 0
        %1778 = vmatpush.bf16.msra.mxu0 0
        %1779 = vmatpush.bf16.msra.mxu0 0
        %1780 = vmatpush.bf16.msra.mxu0 %v1771
        %1781 = vmatmul.bf16.gmra.mxu0 %v1768
        %v1782 = vpop.f32.mrf.mxu0
        %v1783 = vadd.f32 0.0, %v1782
        %v1784 = vpop.f32.mrf.mxu0
        %1785 = vdwg.mxu0
        %v1787 = vsel %vm1611, %v1741, 0
        %v1790 = vsel %vm1750, %v1745, 0
        %1792 = vmatpush.bf16.msra.mxu0 0
        %1793 = vmatpush.bf16.msra.mxu0 0
        %1794 = vmatpush.bf16.msra.mxu0 0
        %1795 = vmatpush.bf16.msra.mxu0 0
        %1796 = vmatpush.bf16.msra.mxu0 0
        %1797 = vmatpush.bf16.msra.mxu0 0
        %1798 = vmatpush.bf16.msra.mxu0 0
        %1799 = vmatpush.bf16.msra.mxu0 %v1790
        %1800 = vmatmul.bf16.gmra.mxu0 %v1787
        %v1801 = vpop.f32.mrf.mxu0
        %v1802 = vadd.f32 0.0, %v1801
        %v1803 = vpop.f32.mrf.mxu0
        %1804 = vdwg.mxu0
        %v1806 = vsel %vm1611, %v1742, 0
        %v1809 = vsel %vm1750, %v1746, 0
        %1811 = vmatpush.bf16.msra.mxu0 0
        %1812 = vmatpush.bf16.msra.mxu0 0
        %1813 = vmatpush.bf16.msra.mxu0 0
        %1814 = vmatpush.bf16.msra.mxu0 0
        %1815 = vmatpush.bf16.msra.mxu0 0
        %1816 = vmatpush.bf16.msra.mxu0 0
        %1817 = vmatpush.bf16.msra.mxu0 0
        %1818 = vmatpush.bf16.msra.mxu0 %v1809
        %1819 = vmatmul.bf16.gmra.mxu0 %v1806
        %v1820 = vpop.f32.mrf.mxu0
        %v1821 = vadd.f32 0.0, %v1820
        %v1822 = vpop.f32.mrf.mxu0
        %1823 = vdwg.mxu0
        %v1824 = vpack.c.bf16 %v1764, %v1764
        %v1825 = vpack.c.bf16 %v1783, %v1783
        %v1826 = vpack.c.bf16 %v1802, %v1802
        %v1827 = vpack.c.bf16 %v1821, %v1821
        %v1829 = vsel %vm1611, %v1824, 0
        %v1832 = vsel %vm1750, %v1594, 0
        %1834 = vmatpush.bf16.msra.mxu0 0
        %1835 = vmatpush.bf16.msra.mxu0 0
        %1836 = vmatpush.bf16.msra.mxu0 0
        %1837 = vmatpush.bf16.msra.mxu0 0
        %1838 = vmatpush.bf16.msra.mxu0 0
        %1839 = vmatpush.bf16.msra.mxu0 0
        %1840 = vmatpush.bf16.msra.mxu0 0
        %1841 = vmatpush.bf16.msra.mxu0 %v1832
        %1842 = vmatmul.bf16.gmra.mxu0 %v1829
        %v1843 = vpop.f32.mrf.mxu0
        %v1844 = vadd.f32 0.0, %v1843
        %v1845 = vpop.f32.mrf.mxu0
        %1846 = vdwg.mxu0
        %v1848 = vsel %vm1611, %v1825, 0
        %v1851 = vsel %vm1750, %v1595, 0
        %1853 = vmatpush.bf16.msra.mxu0 0
        %1854 = vmatpush.bf16.msra.mxu0 0
        %1855 = vmatpush.bf16.msra.mxu0 0
        %1856 = vmatpush.bf16.msra.mxu0 0
        %1857 = vmatpush.bf16.msra.mxu0 0
        %1858 = vmatpush.bf16.msra.mxu0 0
        %1859 = vmatpush.bf16.msra.mxu0 0
        %1860 = vmatpush.bf16.msra.mxu0 %v1851
        %1861 = vmatmul.bf16.gmra.mxu0 %v1848
        %v1862 = vpop.f32.mrf.mxu0
        %v1863 = vadd.f32 0.0, %v1862
        %v1864 = vpop.f32.mrf.mxu0
        %1865 = vdwg.mxu0
        %v1867 = vsel %vm1611, %v1826, 0
        %v1870 = vsel %vm1750, %v1596, 0
        %1872 = vmatpush.bf16.msra.mxu0 0
        %1873 = vmatpush.bf16.msra.mxu0 0
        %1874 = vmatpush.bf16.msra.mxu0 0
        %1875 = vmatpush.bf16.msra.mxu0 0
        %1876 = vmatpush.bf16.msra.mxu0 0
        %1877 = vmatpush.bf16.msra.mxu0 0
        %1878 = vmatpush.bf16.msra.mxu0 0
        %1879 = vmatpush.bf16.msra.mxu0 %v1870
        %1880 = vmatmul.bf16.gmra.mxu0 %v1867
        %v1881 = vpop.f32.mrf.mxu0
        %v1882 = vadd.f32 0.0, %v1881
        %v1883 = vpop.f32.mrf.mxu0
        %1884 = vdwg.mxu0
        %v1886 = vsel %vm1611, %v1827, 0
        %v1889 = vsel %vm1750, %v1597, 0
        %1891 = vmatpush.bf16.msra.mxu0 0
        %1892 = vmatpush.bf16.msra.mxu0 0
        %1893 = vmatpush.bf16.msra.mxu0 0
        %1894 = vmatpush.bf16.msra.mxu0 0
        %1895 = vmatpush.bf16.msra.mxu0 0
        %1896 = vmatpush.bf16.msra.mxu0 0
        %1897 = vmatpush.bf16.msra.mxu0 0
        %1898 = vmatpush.bf16.msra.mxu0 %v1889
        %1899 = vmatmul.bf16.gmra.mxu0 %v1886
        %v1900 = vpop.f32.mrf.mxu0
        %v1901 = vadd.f32 0.0, %v1900
        %v1902 = vpop.f32.mrf.mxu0
        %1903 = vdwg.mxu0
        %v1904 = vsel %vm1302, %v1844, 0.0
        %v1905 = vsel %vm1302, %v1863, 0.0
        %v1906 = vadd.f32 %v1904, %v1905
        %v1907 = vsel %vm1302, %v1882, 0.0
        %v1908 = vadd.f32 %v1906, %v1907
        %v1909 = vsel %vm1302, %v1901, 0.0
        %v1910 = vadd.f32 %v1908, %v1909
        %v1912 = vperm.slane %v1598, 0
        %v1914 = vadd.f32 %v1910, %v1912
        %v1915 = vld [vmem:[%s1165] sm:$0x1]
        %v1916 = vld [vmem:[%s1168] sm:$0x1]
        %v1917 = vadd.f32 %v1914, %v1189
        %v1918 = vsel %vm1302, %v1917, 0.0
        %1919 = vadd.xlane.f32.xlu0 %v1918
        %v1920 = vpop.xlane.xlu0 %1919
        %v1921 = vrcp.pop 32.0
        %v1922 = vmul.f32 32.0, %v1921
        %v1923 = vsub.f32 1.0, %v1922
        %v1924 = vmul.f32 %v1921, %v1923
        %v1925 = vadd.f32 %v1921, %v1924
        %vm1926 = vweird.f32 %v1921
        %v1927 = vsel %vm1926, %v1921, %v1925
        %v1928 = vmul.f32 %v1920, %v1927
        %v1929 = vsub.f32 %v1917, %v1928
        %v1930 = vmul.f32 %v1929, %v1929
        %v1931 = vsel %vm1302, %v1930, 0.0
        %1932 = vadd.xlane.f32.xlu0 %v1931
        %v1933 = vpop.xlane.xlu0 %1932
        %v1934 = vmul.f32 %v1933, %v1927
        %v1935 = vadd.f32 %v1934, 1e-05
        %v1936 = vrsqrt.pop %v1935
        %v1937 = vmul.f32 %v1936, %v1935
        %v1938 = vmul.f32 %v1937, %v1936
        %v1939 = vmul.f32 0.5, %v1938
        %v1940 = vsub.f32 1.5, %v1939
        %v1941 = vmul.f32 %v1936, %v1940
        %vm1942 = vweird.f32 %v1935
        %vm1943 = vweird.f32 %v1936
        %vm1944 = vmor %vm1942, %vm1943
        %v1945 = vsel %vm1944, %v1936, %v1941
        %v1946 = vmul.f32 %v1929, %v1945
        %v1948 = vperm.slane %v1915, 0
        %v1950 = vmul.f32 %v1946, %v1948
        %v1952 = vperm.slane %v1916, 0
        %v1954 = vadd.f32 %v1950, %v1952
        %v1955 = vld [vmem:[%s1125] sm:$0xf]
        %v1956 = vld [vmem:[%s1125 + $0x4] sm:$0xf]
        %v1957 = vld [vmem:[%s1125 + $0x8] sm:$0xf]
        %v1958 = vld [vmem:[%s1125 + $0xc] sm:$0xf]
        %v1959 = vld [vmem:[%s1125 + $0x10] sm:$0xf]
        %v1960 = vld [vmem:[%s1125 + $0x14] sm:$0xf]
        %v1961 = vld [vmem:[%s1125 + $0x18] sm:$0xf]
        %v1962 = vld [vmem:[%s1125 + $0x1c] sm:$0xf]
        %v1963 = vld [vmem:[%s1125 + $0x20] sm:$0xf]
        %v1964 = vld [vmem:[%s1125 + $0x24] sm:$0xf]
        %v1965 = vld [vmem:[%s1125 + $0x28] sm:$0xf]
        %v1966 = vld [vmem:[%s1125 + $0x2c] sm:$0xf]
        %v1967 = vld [vmem:[%s1125 + $0x30] sm:$0xf]
        %v1968 = vld [vmem:[%s1125 + $0x34] sm:$0xf]
        %v1969 = vld [vmem:[%s1125 + $0x38] sm:$0xf]
        %v1970 = vld [vmem:[%s1125 + $0x3c] sm:$0xf]
        %v1971 = vld [vmem:[%s1129] sm:$0x1]
        %v1972 = vld [vmem:[%s1129 + $0x1] sm:$0x1]
        %v1973 = vld [vmem:[%s1129 + $0x2] sm:$0x1]
        %v1974 = vld [vmem:[%s1129 + $0x3] sm:$0x1]
        %v1975 = vpack.c.bf16 %v1954, %v1954
        %v1980 = vperm.slane %v1971, 0
        %v1981 = vperm.slane %v1972, 0
        %v1982 = vperm.slane %v1973, 0
        %v1983 = vperm.slane %v1974, 0
        %v1992 = vunpack.c.l.b16 %v1955
        %v1993 = vunpack.c.l.b16 %v1956
        %v1994 = vunpack.c.l.b16 %v1957
        %v1995 = vunpack.c.l.b16 %v1958
        %v1996 = vpack.c.b16 %v1993, %v1992
        %v1997 = vpack.c.b16 %v1995, %v1994
        %v2001 = vsel %vm1302, %v1975, 0
        %2003 = vmatpush.bf16.msra.mxu0 0
        %2004 = vmatpush.bf16.msra.mxu0 0
        %2005 = vmatpush.bf16.msra.mxu0 0
        %2006 = vmatpush.bf16.msra.mxu0 0
        %2007 = vmatpush.bf16.msra.mxu0 0
        %2008 = vmatpush.bf16.msra.mxu0 0
        %2009 = vmatpush.bf16.msra.mxu0 %v1997
        %2010 = vmatpush.bf16.msra.mxu0 %v1996
        %2011 = vmatmul.bf16.gmra.mxu0 %v2001
        %v2012 = vpop.f32.mrf.mxu0
        %v2013 = vadd.f32 %v1980, %v2012
        %v2014 = vpop.f32.mrf.mxu0
        %2015 = vdwg.mxu0
        %v2020 = vunpack.c.l.b16 %v1959
        %v2021 = vunpack.c.l.b16 %v1960
        %v2022 = vunpack.c.l.b16 %v1961
        %v2023 = vunpack.c.l.b16 %v1962
        %v2024 = vpack.c.b16 %v2021, %v2020
        %v2025 = vpack.c.b16 %v2023, %v2022
        %2028 = vmatpush.bf16.msra.mxu0 0
        %2029 = vmatpush.bf16.msra.mxu0 0
        %2030 = vmatpush.bf16.msra.mxu0 0
        %2031 = vmatpush.bf16.msra.mxu0 0
        %2032 = vmatpush.bf16.msra.mxu0 0
        %2033 = vmatpush.bf16.msra.mxu0 0
        %2034 = vmatpush.bf16.msra.mxu0 %v2025
        %2035 = vmatpush.bf16.msra.mxu0 %v2024
        %2036 = vmatmul.bf16.gmra.mxu0 %v2001
        %v2037 = vpop.f32.mrf.mxu0
        %v2038 = vadd.f32 %v1981, %v2037
        %v2039 = vpop.f32.mrf.mxu0
        %2040 = vdwg.mxu0
        %v2045 = vunpack.c.l.b16 %v1963
        %v2046 = vunpack.c.l.b16 %v1964
        %v2047 = vunpack.c.l.b16 %v1965
        %v2048 = vunpack.c.l.b16 %v1966
        %v2049 = vpack.c.b16 %v2046, %v2045
        %v2050 = vpack.c.b16 %v2048, %v2047
        %2053 = vmatpush.bf16.msra.mxu0 0
        %2054 = vmatpush.bf16.msra.mxu0 0
        %2055 = vmatpush.bf16.msra.mxu0 0
        %2056 = vmatpush.bf16.msra.mxu0 0
        %2057 = vmatpush.bf16.msra.mxu0 0
        %2058 = vmatpush.bf16.msra.mxu0 0
        %2059 = vmatpush.bf16.msra.mxu0 %v2050
        %2060 = vmatpush.bf16.msra.mxu0 %v2049
        %2061 = vmatmul.bf16.gmra.mxu0 %v2001
        %v2062 = vpop.f32.mrf.mxu0
        %v2063 = vadd.f32 %v1982, %v2062
        %v2064 = vpop.f32.mrf.mxu0
        %2065 = vdwg.mxu0
        %v2070 = vunpack.c.l.b16 %v1967
        %v2071 = vunpack.c.l.b16 %v1968
        %v2072 = vunpack.c.l.b16 %v1969
        %v2073 = vunpack.c.l.b16 %v1970
        %v2074 = vpack.c.b16 %v2071, %v2070
        %v2075 = vpack.c.b16 %v2073, %v2072
        %2078 = vmatpush.bf16.msra.mxu0 0
        %2079 = vmatpush.bf16.msra.mxu0 0
        %2080 = vmatpush.bf16.msra.mxu0 0
        %2081 = vmatpush.bf16.msra.mxu0 0
        %2082 = vmatpush.bf16.msra.mxu0 0
        %2083 = vmatpush.bf16.msra.mxu0 0
        %2084 = vmatpush.bf16.msra.mxu0 %v2075
        %2085 = vmatpush.bf16.msra.mxu0 %v2074
        %2086 = vmatmul.bf16.gmra.mxu0 %v2001
        %v2087 = vpop.f32.mrf.mxu0
        %v2088 = vadd.f32 %v1983, %v2087
        %v2089 = vpop.f32.mrf.mxu0
        %2090 = vdwg.mxu0
        %v2091 = vld [vmem:[%s1134] sm:$0xf]
        %v2092 = vld [vmem:[%s1134 + $0x4] sm:$0xf]
        %v2093 = vld [vmem:[%s1134 + $0x8] sm:$0xf]
        %v2094 = vld [vmem:[%s1134 + $0xc] sm:$0xf]
        %v2095 = vld [vmem:[%s1134 + $0x10] sm:$0xf]
        %v2096 = vld [vmem:[%s1134 + $0x14] sm:$0xf]
        %v2097 = vld [vmem:[%s1134 + $0x18] sm:$0xf]
        %v2098 = vld [vmem:[%s1134 + $0x1c] sm:$0xf]
        %v2099 = vld [vmem:[%s1134 + $0x20] sm:$0xf]
        %v2100 = vld [vmem:[%s1134 + $0x24] sm:$0xf]
        %v2101 = vld [vmem:[%s1134 + $0x28] sm:$0xf]
        %v2102 = vld [vmem:[%s1134 + $0x2c] sm:$0xf]
        %v2103 = vld [vmem:[%s1134 + $0x30] sm:$0xf]
        %v2104 = vld [vmem:[%s1134 + $0x34] sm:$0xf]
        %v2105 = vld [vmem:[%s1134 + $0x38] sm:$0xf]
        %v2106 = vld [vmem:[%s1134 + $0x3c] sm:$0xf]
        %v2107 = vld [vmem:[%s1134 + $0x40] sm:$0xf]
        %v2108 = vld [vmem:[%s1134 + $0x44] sm:$0xf]
        %v2109 = vld [vmem:[%s1134 + $0x48] sm:$0xf]
        %v2110 = vld [vmem:[%s1134 + $0x4c] sm:$0xf]
        %v2111 = vld [vmem:[%s1134 + $0x50] sm:$0xf]
        %v2112 = vld [vmem:[%s1134 + $0x54] sm:$0xf]
        %v2113 = vld [vmem:[%s1134 + $0x58] sm:$0xf]
        %v2114 = vld [vmem:[%s1134 + $0x5c] sm:$0xf]
        %v2115 = vld [vmem:[%s1134 + $0x60] sm:$0xf]
        %v2116 = vld [vmem:[%s1134 + $0x64] sm:$0xf]
        %v2117 = vld [vmem:[%s1134 + $0x68] sm:$0xf]
        %v2118 = vld [vmem:[%s1134 + $0x6c] sm:$0xf]
        %v2119 = vld [vmem:[%s1134 + $0x70] sm:$0xf]
        %v2120 = vld [vmem:[%s1134 + $0x74] sm:$0xf]
        %v2121 = vld [vmem:[%s1134 + $0x78] sm:$0xf]
        %v2122 = vld [vmem:[%s1134 + $0x7c] sm:$0xf]
        %v2123 = vld [vmem:[%s1138] sm:$0x1]
        %v2124 = vld [vmem:[%s1138 + $0x1] sm:$0x1]
        %v2125 = vld [vmem:[%s1138 + $0x2] sm:$0x1]
        %v2126 = vld [vmem:[%s1138 + $0x3] sm:$0x1]
        %v2127 = vld [vmem:[%s1138 + $0x4] sm:$0x1]
        %v2128 = vld [vmem:[%s1138 + $0x5] sm:$0x1]
        %v2129 = vld [vmem:[%s1138 + $0x6] sm:$0x1]
        %v2130 = vld [vmem:[%s1138 + $0x7] sm:$0x1]
        %v2131 = vpack.c.bf16 %v1190, %v1190
        %v2140 = vperm.slane %v2123, 0
        %v2141 = vperm.slane %v2124, 0
        %v2142 = vperm.slane %v2125, 0
        %v2143 = vperm.slane %v2126, 0
        %v2144 = vperm.slane %v2127, 0
        %v2145 = vperm.slane %v2128, 0
        %v2146 = vperm.slane %v2129, 0
        %v2147 = vperm.slane %v2130, 0
        %v2160 = vunpack.c.l.b16 %v2091
        %v2161 = vunpack.c.l.b16 %v2092
        %v2162 = vunpack.c.l.b16 %v2093
        %v2163 = vunpack.c.l.b16 %v2094
        %v2164 = vpack.c.b16 %v2161, %v2160
        %v2165 = vpack.c.b16 %v2163, %v2162
        %v2169 = vsel %vm1302, %v2131, 0
        %2171 = vmatpush.bf16.msra.mxu0 0
        %2172 = vmatpush.bf16.msra.mxu0 0
        %2173 = vmatpush.bf16.msra.mxu0 0
        %2174 = vmatpush.bf16.msra.mxu0 0
        %2175 = vmatpush.bf16.msra.mxu0 0
        %2176 = vmatpush.bf16.msra.mxu0 0
        %2177 = vmatpush.bf16.msra.mxu0 %v2165
        %2178 = vmatpush.bf16.msra.mxu0 %v2164
        %2179 = vmatmul.bf16.gmra.mxu0 %v2169
        %v2180 = vpop.f32.mrf.mxu0
        %v2181 = vadd.f32 %v2140, %v2180
        %v2182 = vpop.f32.mrf.mxu0
        %2183 = vdwg.mxu0
        %v2188 = vunpack.c.l.b16 %v2095
        %v2189 = vunpack.c.l.b16 %v2096
        %v2190 = vunpack.c.l.b16 %v2097
        %v2191 = vunpack.c.l.b16 %v2098
        %v2192 = vpack.c.b16 %v2189, %v2188
        %v2193 = vpack.c.b16 %v2191, %v2190
        %2196 = vmatpush.bf16.msra.mxu0 0
        %2197 = vmatpush.bf16.msra.mxu0 0
        %2198 = vmatpush.bf16.msra.mxu0 0
        %2199 = vmatpush.bf16.msra.mxu0 0
        %2200 = vmatpush.bf16.msra.mxu0 0
        %2201 = vmatpush.bf16.msra.mxu0 0
        %2202 = vmatpush.bf16.msra.mxu0 %v2193
        %2203 = vmatpush.bf16.msra.mxu0 %v2192
        %2204 = vmatmul.bf16.gmra.mxu0 %v2169
        %v2205 = vpop.f32.mrf.mxu0
        %v2206 = vadd.f32 %v2141, %v2205
        %v2207 = vpop.f32.mrf.mxu0
        %2208 = vdwg.mxu0
        %v2213 = vunpack.c.l.b16 %v2099
        %v2214 = vunpack.c.l.b16 %v2100
        %v2215 = vunpack.c.l.b16 %v2101
        %v2216 = vunpack.c.l.b16 %v2102
        %v2217 = vpack.c.b16 %v2214, %v2213
        %v2218 = vpack.c.b16 %v2216, %v2215
        %2221 = vmatpush.bf16.msra.mxu0 0
        %2222 = vmatpush.bf16.msra.mxu0 0
        %2223 = vmatpush.bf16.msra.mxu0 0
        %2224 = vmatpush.bf16.msra.mxu0 0
        %2225 = vmatpush.bf16.msra.mxu0 0
        %2226 = vmatpush.bf16.msra.mxu0 0
        %2227 = vmatpush.bf16.msra.mxu0 %v2218
        %2228 = vmatpush.bf16.msra.mxu0 %v2217
        %2229 = vmatmul.bf16.gmra.mxu0 %v2169
        %v2230 = vpop.f32.mrf.mxu0
        %v2231 = vadd.f32 %v2142, %v2230
        %v2232 = vpop.f32.mrf.mxu0
        %2233 = vdwg.mxu0
        %v2238 = vunpack.c.l.b16 %v2103
        %v2239 = vunpack.c.l.b16 %v2104
        %v2240 = vunpack.c.l.b16 %v2105
        %v2241 = vunpack.c.l.b16 %v2106
        %v2242 = vpack.c.b16 %v2239, %v2238
        %v2243 = vpack.c.b16 %v2241, %v2240
        %2246 = vmatpush.bf16.msra.mxu0 0
        %2247 = vmatpush.bf16.msra.mxu0 0
        %2248 = vmatpush.bf16.msra.mxu0 0
        %2249 = vmatpush.bf16.msra.mxu0 0
        %2250 = vmatpush.bf16.msra.mxu0 0
        %2251 = vmatpush.bf16.msra.mxu0 0
        %2252 = vmatpush.bf16.msra.mxu0 %v2243
        %2253 = vmatpush.bf16.msra.mxu0 %v2242
        %2254 = vmatmul.bf16.gmra.mxu0 %v2169
        %v2255 = vpop.f32.mrf.mxu0
        %v2256 = vadd.f32 %v2143, %v2255
        %v2257 = vpop.f32.mrf.mxu0
        %2258 = vdwg.mxu0
        %v2263 = vunpack.c.l.b16 %v2107
        %v2264 = vunpack.c.l.b16 %v2108
        %v2265 = vunpack.c.l.b16 %v2109
        %v2266 = vunpack.c.l.b16 %v2110
        %v2267 = vpack.c.b16 %v2264, %v2263
        %v2268 = vpack.c.b16 %v2266, %v2265
        %2271 = vmatpush.bf16.msra.mxu0 0
        %2272 = vmatpush.bf16.msra.mxu0 0
        %2273 = vmatpush.bf16.msra.mxu0 0
        %2274 = vmatpush.bf16.msra.mxu0 0
        %2275 = vmatpush.bf16.msra.mxu0 0
        %2276 = vmatpush.bf16.msra.mxu0 0
        %2277 = vmatpush.bf16.msra.mxu0 %v2268
        %2278 = vmatpush.bf16.msra.mxu0 %v2267
        %2279 = vmatmul.bf16.gmra.mxu0 %v2169
        %v2280 = vpop.f32.mrf.mxu0
        %v2281 = vadd.f32 %v2144, %v2280
        %v2282 = vpop.f32.mrf.mxu0
        %2283 = vdwg.mxu0
        %v2288 = vunpack.c.l.b16 %v2111
        %v2289 = vunpack.c.l.b16 %v2112
        %v2290 = vunpack.c.l.b16 %v2113
        %v2291 = vunpack.c.l.b16 %v2114
        %v2292 = vpack.c.b16 %v2289, %v2288
        %v2293 = vpack.c.b16 %v2291, %v2290
        %2296 = vmatpush.bf16.msra.mxu0 0
        %2297 = vmatpush.bf16.msra.mxu0 0
        %2298 = vmatpush.bf16.msra.mxu0 0
        %2299 = vmatpush.bf16.msra.mxu0 0
        %2300 = vmatpush.bf16.msra.mxu0 0
        %2301 = vmatpush.bf16.msra.mxu0 0
        %2302 = vmatpush.bf16.msra.mxu0 %v2293
        %2303 = vmatpush.bf16.msra.mxu0 %v2292
        %2304 = vmatmul.bf16.gmra.mxu0 %v2169
        %v2305 = vpop.f32.mrf.mxu0
        %v2306 = vadd.f32 %v2145, %v2305
        %v2307 = vpop.f32.mrf.mxu0
        %2308 = vdwg.mxu0
        %v2313 = vunpack.c.l.b16 %v2115
        %v2314 = vunpack.c.l.b16 %v2116
        %v2315 = vunpack.c.l.b16 %v2117
        %v2316 = vunpack.c.l.b16 %v2118
        %v2317 = vpack.c.b16 %v2314, %v2313
        %v2318 = vpack.c.b16 %v2316, %v2315
        %2321 = vmatpush.bf16.msra.mxu0 0
        %2322 = vmatpush.bf16.msra.mxu0 0
        %2323 = vmatpush.bf16.msra.mxu0 0
        %2324 = vmatpush.bf16.msra.mxu0 0
        %2325 = vmatpush.bf16.msra.mxu0 0
        %2326 = vmatpush.bf16.msra.mxu0 0
        %2327 = vmatpush.bf16.msra.mxu0 %v2318
        %2328 = vmatpush.bf16.msra.mxu0 %v2317
        %2329 = vmatmul.bf16.gmra.mxu0 %v2169
        %v2330 = vpop.f32.mrf.mxu0
        %v2331 = vadd.f32 %v2146, %v2330
        %v2332 = vpop.f32.mrf.mxu0
        %2333 = vdwg.mxu0
        %v2338 = vunpack.c.l.b16 %v2119
        %v2339 = vunpack.c.l.b16 %v2120
        %v2340 = vunpack.c.l.b16 %v2121
        %v2341 = vunpack.c.l.b16 %v2122
        %v2342 = vpack.c.b16 %v2339, %v2338
        %v2343 = vpack.c.b16 %v2341, %v2340
        %2346 = vmatpush.bf16.msra.mxu0 0
        %2347 = vmatpush.bf16.msra.mxu0 0
        %2348 = vmatpush.bf16.msra.mxu0 0
        %2349 = vmatpush.bf16.msra.mxu0 0
        %2350 = vmatpush.bf16.msra.mxu0 0
        %2351 = vmatpush.bf16.msra.mxu0 0
        %2352 = vmatpush.bf16.msra.mxu0 %v2343
        %2353 = vmatpush.bf16.msra.mxu0 %v2342
        %2354 = vmatmul.bf16.gmra.mxu0 %v2169
        %v2355 = vpop.f32.mrf.mxu0
        %v2356 = vadd.f32 %v2147, %v2355
        %v2357 = vpop.f32.mrf.mxu0
        %2358 = vdwg.mxu0
        %v2359 = vld [vmem:[%s1143] sm:$0xf]
        %v2360 = vld [vmem:[%s1143 + $0x4] sm:$0xf]
        %v2361 = vld [vmem:[%s1143 + $0x8] sm:$0xf]
        %v2362 = vld [vmem:[%s1143 + $0xc] sm:$0xf]
        %v2363 = vld [vmem:[%s1146] sm:$0x1]
        %v2364 = vmul.f32 %v2013, 0.35355338
        %v2365 = vmul.f32 %v2038, 0.35355338
        %v2366 = vmul.f32 %v2063, 0.35355338
        %v2367 = vmul.f32 %v2088, 0.35355338
        %v2368 = vpack.c.bf16 %v2364, %v2364
        %v2369 = vpack.c.bf16 %v2365, %v2365
        %v2370 = vpack.c.bf16 %v2366, %v2366
        %v2371 = vpack.c.bf16 %v2367, %v2367
        %v2372 = vpack.c.bf16 %v2181, %v2181
        %v2373 = vpack.c.bf16 %v2206, %v2206
        %v2374 = vpack.c.bf16 %v2231, %v2231
        %v2375 = vpack.c.bf16 %v2256, %v2256
        %v2377 = vsel %vm1611, %v2368, 0
        %v2380 = vsel %vm1611, %v2372, 0
        %2382 = vmatpush.bf16.xpose.msra.mxu0 0
        %2383 = vmatpush.bf16.xpose.msra.mxu0 0
        %2384 = vmatpush.bf16.xpose.msra.mxu0 0
        %2385 = vmatpush.bf16.xpose.msra.mxu0 0
        %2386 = vmatpush.bf16.xpose.msra.mxu0 0
        %2387 = vmatpush.bf16.xpose.msra.mxu0 0
        %2388 = vmatpush.bf16.xpose.msra.mxu0 0
        %2389 = vmatpush.bf16.xpose.msra.mxu0 %v2380
        %2390 = vmatmul.bf16.gmra.mxu0 %v2377
        %v2391 = vpop.f32.mrf.mxu0
        %v2392 = vadd.f32 0.0, %v2391
        %v2393 = vpop.f32.mrf.mxu0
        %2394 = vdwg.mxu0
        %v2396 = vsel %vm1611, %v2369, 0
        %v2399 = vsel %vm1611, %v2373, 0
        %2401 = vmatpush.bf16.xpose.msra.mxu0 0
        %2402 = vmatpush.bf16.xpose.msra.mxu0 0
        %2403 = vmatpush.bf16.xpose.msra.mxu0 0
        %2404 = vmatpush.bf16.xpose.msra.mxu0 0
        %2405 = vmatpush.bf16.xpose.msra.mxu0 0
        %2406 = vmatpush.bf16.xpose.msra.mxu0 0
        %2407 = vmatpush.bf16.xpose.msra.mxu0 0
        %2408 = vmatpush.bf16.xpose.msra.mxu0 %v2399
        %2409 = vmatmul.bf16.gmra.mxu0 %v2396
        %v2410 = vpop.f32.mrf.mxu0
        %v2411 = vadd.f32 0.0, %v2410
        %v2412 = vpop.f32.mrf.mxu0
        %2413 = vdwg.mxu0
        %v2415 = vsel %vm1611, %v2370, 0
        %v2418 = vsel %vm1611, %v2374, 0
        %2420 = vmatpush.bf16.xpose.msra.mxu0 0
        %2421 = vmatpush.bf16.xpose.msra.mxu0 0
        %2422 = vmatpush.bf16.xpose.msra.mxu0 0
        %2423 = vmatpush.bf16.xpose.msra.mxu0 0
        %2424 = vmatpush.bf16.xpose.msra.mxu0 0
        %2425 = vmatpush.bf16.xpose.msra.mxu0 0
        %2426 = vmatpush.bf16.xpose.msra.mxu0 0
        %2427 = vmatpush.bf16.xpose.msra.mxu0 %v2418
        %2428 = vmatmul.bf16.gmra.mxu0 %v2415
        %v2429 = vpop.f32.mrf.mxu0
        %v2430 = vadd.f32 0.0, %v2429
        %v2431 = vpop.f32.mrf.mxu0
        %2432 = vdwg.mxu0
        %v2434 = vsel %vm1611, %v2371, 0
        %v2437 = vsel %vm1611, %v2375, 0
        %2439 = vmatpush.bf16.xpose.msra.mxu0 0
        %2440 = vmatpush.bf16.xpose.msra.mxu0 0
        %2441 = vmatpush.bf16.xpose.msra.mxu0 0
        %2442 = vmatpush.bf16.xpose.msra.mxu0 0
        %2443 = vmatpush.bf16.xpose.msra.mxu0 0
        %2444 = vmatpush.bf16.xpose.msra.mxu0 0
        %2445 = vmatpush.bf16.xpose.msra.mxu0 0
        %2446 = vmatpush.bf16.xpose.msra.mxu0 %v2437
        %2447 = vmatmul.bf16.gmra.mxu0 %v2434
        %v2448 = vpop.f32.mrf.mxu0
        %v2449 = vadd.f32 0.0, %v2448
        %v2450 = vpop.f32.mrf.mxu0
        %2451 = vdwg.mxu0
        %vm2452 = vcmp.gt.f32.partialorder %v1192, 0.0
        %v2453 = vsel %vm2452, 1, 0
        %vm2454 = vcmp.eq.s32.totalorder %v2453, 1
        %v2455 = vsel %vm2454, %v2392, -1e+09
        %v2456 = vsel %vm2454, %v2411, -1e+09
        %v2457 = vsel %vm2454, %v2430, -1e+09
        %v2458 = vsel %vm2454, %v2449, -1e+09
        %v2459 = vsel %vm1611, %v2455, -inf
        %2460 = vmax.xlane.f32.xlu0 %v2459
        %v2461 = vpop.xlane.xlu0 %2460
        %v2462 = vsel %vm1611, %v2456, -inf
        %2463 = vmax.xlane.f32.xlu0 %v2462
        %v2464 = vpop.xlane.xlu0 %2463
        %v2465 = vsel %vm1611, %v2457, -inf
        %2466 = vmax.xlane.f32.xlu0 %v2465
        %v2467 = vpop.xlane.xlu0 %2466
        %v2468 = vsel %vm1611, %v2458, -inf
        %2469 = vmax.xlane.f32.xlu0 %v2468
        %v2470 = vpop.xlane.xlu0 %2469
        %v2471 = vsub.f32 %v2455, %v2461
        %v2472 = vsub.f32 %v2456, %v2464
        %v2473 = vsub.f32 %v2457, %v2467
        %v2474 = vsub.f32 %v2458, %v2470
        %v2475 = vmul.f32 %v2471, 1.442695
        %v2476 = vpow.pop %v2475
        %v2477 = vmul.f32 %v2472, 1.442695
        %v2478 = vpow.pop %v2477
        %v2479 = vmul.f32 %v2473, 1.442695
        %v2480 = vpow.pop %v2479
        %v2481 = vmul.f32 %v2474, 1.442695
        %v2482 = vpow.pop %v2481
        %v2483 = vsel %vm1611, %v2476, 0.0
        %2484 = vadd.xlane.f32.xlu0 %v2483
        %v2485 = vpop.xlane.xlu0 %2484
        %v2486 = vsel %vm1611, %v2478, 0.0
        %2487 = vadd.xlane.f32.xlu0 %v2486
        %v2488 = vpop.xlane.xlu0 %2487
        %v2489 = vsel %vm1611, %v2480, 0.0
        %2490 = vadd.xlane.f32.xlu0 %v2489
        %v2491 = vpop.xlane.xlu0 %2490
        %v2492 = vsel %vm1611, %v2482, 0.0
        %2493 = vadd.xlane.f32.xlu0 %v2492
        %v2494 = vpop.xlane.xlu0 %2493
        %v2495 = vrcp.pop %v2485
        %v2496 = vrcp.pop %v2488
        %v2497 = vrcp.pop %v2491
        %v2498 = vrcp.pop %v2494
        %v2499 = vmul.f32 %v2476, %v2495
        %v2500 = vmul.f32 %v2478, %v2496
        %v2501 = vmul.f32 %v2480, %v2497
        %v2502 = vmul.f32 %v2482, %v2498
        %v2503 = vpack.c.bf16 %v2499, %v2499
        %v2504 = vpack.c.bf16 %v2500, %v2500
        %v2505 = vpack.c.bf16 %v2501, %v2501
        %v2506 = vpack.c.bf16 %v2502, %v2502
        %v2507 = vpack.c.bf16 %v2281, %v2281
        %v2508 = vpack.c.bf16 %v2306, %v2306
        %v2509 = vpack.c.bf16 %v2331, %v2331
        %v2510 = vpack.c.bf16 %v2356, %v2356
        %v2512 = vsel %vm1611, %v2503, 0
        %v2515 = vsel %vm1750, %v2507, 0
        %2517 = vmatpush.bf16.msra.mxu0 0
        %2518 = vmatpush.bf16.msra.mxu0 0
        %2519 = vmatpush.bf16.msra.mxu0 0
        %2520 = vmatpush.bf16.msra.mxu0 0
        %2521 = vmatpush.bf16.msra.mxu0 0
        %2522 = vmatpush.bf16.msra.mxu0 0
        %2523 = vmatpush.bf16.msra.mxu0 0
        %2524 = vmatpush.bf16.msra.mxu0 %v2515
        %2525 = vmatmul.bf16.gmra.mxu0 %v2512
        %v2526 = vpop.f32.mrf.mxu0
        %v2527 = vadd.f32 0.0, %v2526
        %v2528 = vpop.f32.mrf.mxu0
        %2529 = vdwg.mxu0
        %v2531 = vsel %vm1611, %v2504, 0
        %v2534 = vsel %vm1750, %v2508, 0
        %2536 = vmatpush.bf16.msra.mxu0 0
        %2537 = vmatpush.bf16.msra.mxu0 0
        %2538 = vmatpush.bf16.msra.mxu0 0
        %2539 = vmatpush.bf16.msra.mxu0 0
        %2540 = vmatpush.bf16.msra.mxu0 0
        %2541 = vmatpush.bf16.msra.mxu0 0
        %2542 = vmatpush.bf16.msra.mxu0 0
        %2543 = vmatpush.bf16.msra.mxu0 %v2534
        %2544 = vmatmul.bf16.gmra.mxu0 %v2531
        %v2545 = vpop.f32.mrf.mxu0
        %v2546 = vadd.f32 0.0, %v2545
        %v2547 = vpop.f32.mrf.mxu0
        %2548 = vdwg.mxu0
        %v2550 = vsel %vm1611, %v2505, 0
        %v2553 = vsel %vm1750, %v2509, 0
        %2555 = vmatpush.bf16.msra.mxu0 0
        %2556 = vmatpush.bf16.msra.mxu0 0
        %2557 = vmatpush.bf16.msra.mxu0 0
        %2558 = vmatpush.bf16.msra.mxu0 0
        %2559 = vmatpush.bf16.msra.mxu0 0
        %2560 = vmatpush.bf16.msra.mxu0 0
        %2561 = vmatpush.bf16.msra.mxu0 0
        %2562 = vmatpush.bf16.msra.mxu0 %v2553
        %2563 = vmatmul.bf16.gmra.mxu0 %v2550
        %v2564 = vpop.f32.mrf.mxu0
        %v2565 = vadd.f32 0.0, %v2564
        %v2566 = vpop.f32.mrf.mxu0
        %2567 = vdwg.mxu0
        %v2569 = vsel %vm1611, %v2506, 0
        %v2572 = vsel %vm1750, %v2510, 0
        %2574 = vmatpush.bf16.msra.mxu0 0
        %2575 = vmatpush.bf16.msra.mxu0 0
        %2576 = vmatpush.bf16.msra.mxu0 0
        %2577 = vmatpush.bf16.msra.mxu0 0
        %2578 = vmatpush.bf16.msra.mxu0 0
        %2579 = vmatpush.bf16.msra.mxu0 0
        %2580 = vmatpush.bf16.msra.mxu0 0
        %2581 = vmatpush.bf16.msra.mxu0 %v2572
        %2582 = vmatmul.bf16.gmra.mxu0 %v2569
        %v2583 = vpop.f32.mrf.mxu0
        %v2584 = vadd.f32 0.0, %v2583
        %v2585 = vpop.f32.mrf.mxu0
        %2586 = vdwg.mxu0
        %v2587 = vpack.c.bf16 %v2527, %v2527
        %v2588 = vpack.c.bf16 %v2546, %v2546
        %v2589 = vpack.c.bf16 %v2565, %v2565
        %v2590 = vpack.c.bf16 %v2584, %v2584
        %v2592 = vsel %vm1611, %v2587, 0
        %v2595 = vsel %vm1750, %v2359, 0
        %2597 = vmatpush.bf16.msra.mxu0 0
        %2598 = vmatpush.bf16.msra.mxu0 0
        %2599 = vmatpush.bf16.msra.mxu0 0
        %2600 = vmatpush.bf16.msra.mxu0 0
        %2601 = vmatpush.bf16.msra.mxu0 0
        %2602 = vmatpush.bf16.msra.mxu0 0
        %2603 = vmatpush.bf16.msra.mxu0 0
        %2604 = vmatpush.bf16.msra.mxu0 %v2595
        %2605 = vmatmul.bf16.gmra.mxu0 %v2592
        %v2606 = vpop.f32.mrf.mxu0
        %v2607 = vadd.f32 0.0, %v2606
        %v2608 = vpop.f32.mrf.mxu0
        %2609 = vdwg.mxu0
        %v2611 = vsel %vm1611, %v2588, 0
        %v2614 = vsel %vm1750, %v2360, 0
        %2616 = vmatpush.bf16.msra.mxu0 0
        %2617 = vmatpush.bf16.msra.mxu0 0
        %2618 = vmatpush.bf16.msra.mxu0 0
        %2619 = vmatpush.bf16.msra.mxu0 0
        %2620 = vmatpush.bf16.msra.mxu0 0
        %2621 = vmatpush.bf16.msra.mxu0 0
        %2622 = vmatpush.bf16.msra.mxu0 0
        %2623 = vmatpush.bf16.msra.mxu0 %v2614
        %2624 = vmatmul.bf16.gmra.mxu0 %v2611
        %v2625 = vpop.f32.mrf.mxu0
        %v2626 = vadd.f32 0.0, %v2625
        %v2627 = vpop.f32.mrf.mxu0
        %2628 = vdwg.mxu0
        %v2630 = vsel %vm1611, %v2589, 0
        %v2633 = vsel %vm1750, %v2361, 0
        %2635 = vmatpush.bf16.msra.mxu0 0
        %2636 = vmatpush.bf16.msra.mxu0 0
        %2637 = vmatpush.bf16.msra.mxu0 0
        %2638 = vmatpush.bf16.msra.mxu0 0
        %2639 = vmatpush.bf16.msra.mxu0 0
        %2640 = vmatpush.bf16.msra.mxu0 0
        %2641 = vmatpush.bf16.msra.mxu0 0
        %2642 = vmatpush.bf16.msra.mxu0 %v2633
        %2643 = vmatmul.bf16.gmra.mxu0 %v2630
        %v2644 = vpop.f32.mrf.mxu0
        %v2645 = vadd.f32 0.0, %v2644
        %v2646 = vpop.f32.mrf.mxu0
        %2647 = vdwg.mxu0
        %v2649 = vsel %vm1611, %v2590, 0
        %v2652 = vsel %vm1750, %v2362, 0
        %2654 = vmatpush.bf16.msra.mxu0 0
        %2655 = vmatpush.bf16.msra.mxu0 0
        %2656 = vmatpush.bf16.msra.mxu0 0
        %2657 = vmatpush.bf16.msra.mxu0 0
        %2658 = vmatpush.bf16.msra.mxu0 0
        %2659 = vmatpush.bf16.msra.mxu0 0
        %2660 = vmatpush.bf16.msra.mxu0 0
        %2661 = vmatpush.bf16.msra.mxu0 %v2652
        %2662 = vmatmul.bf16.gmra.mxu0 %v2649
        %v2663 = vpop.f32.mrf.mxu0
        %v2664 = vadd.f32 0.0, %v2663
        %v2665 = vpop.f32.mrf.mxu0
        %2666 = vdwg.mxu0
        %v2667 = vsel %vm1302, %v2607, 0.0
        %v2668 = vsel %vm1302, %v2626, 0.0
        %v2669 = vadd.f32 %v2667, %v2668
        %v2670 = vsel %vm1302, %v2645, 0.0
        %v2671 = vadd.f32 %v2669, %v2670
        %v2672 = vsel %vm1302, %v2664, 0.0
        %v2673 = vadd.f32 %v2671, %v2672
        %v2675 = vperm.slane %v2363, 0
        %v2677 = vadd.f32 %v2673, %v2675
        %v2678 = vld [vmem:[%s1171] sm:$0x1]
        %v2679 = vld [vmem:[%s1174] sm:$0x1]
        %v2680 = vadd.f32 %v2677, %v1954
        %v2681 = vsel %vm1302, %v2680, 0.0
        %2682 = vadd.xlane.f32.xlu0 %v2681
        %v2683 = vpop.xlane.xlu0 %2682
        %v2684 = vmul.f32 %v2683, %v1927
        %v2685 = vsub.f32 %v2680, %v2684
        %v2686 = vmul.f32 %v2685, %v2685
        %v2687 = vsel %vm1302, %v2686, 0.0
        %2688 = vadd.xlane.f32.xlu0 %v2687
        %v2689 = vpop.xlane.xlu0 %2688
        %v2690 = vmul.f32 %v2689, %v1927
        %v2691 = vadd.f32 %v2690, 1e-05
        %v2692 = vrsqrt.pop %v2691
        %v2693 = vmul.f32 %v2692, %v2691
        %v2694 = vmul.f32 %v2693, %v2692
        %v2695 = vmul.f32 0.5, %v2694
        %v2696 = vsub.f32 1.5, %v2695
        %v2697 = vmul.f32 %v2692, %v2696
        %vm2698 = vweird.f32 %v2691
        %vm2699 = vweird.f32 %v2692
        %vm2700 = vmor %vm2698, %vm2699
        %v2701 = vsel %vm2700, %v2692, %v2697
        %v2702 = vmul.f32 %v2685, %v2701
        %v2704 = vperm.slane %v2678, 0
        %v2706 = vmul.f32 %v2702, %v2704
        %v2708 = vperm.slane %v2679, 0
        %v2710 = vadd.f32 %v2706, %v2708
        %v2711 = vpack.c.bf16 %v2710, %v2710
        %v2712 = vld [vmem:[%s1151] sm:$0xf]
        %v2713 = vld [vmem:[%s1151 + $0x4] sm:$0xf]
        %v2714 = vld [vmem:[%s1151 + $0x8] sm:$0xf]
        %v2715 = vld [vmem:[%s1151 + $0xc] sm:$0xf]
        %v2716 = vld [vmem:[%s1154] sm:$0x1]
        %v2718 = vperm.slane %v2716, 0
        %v2724 = vunpack.c.l.b16 %v2712
        %v2725 = vunpack.c.l.b16 %v2713
        %v2726 = vunpack.c.l.b16 %v2714
        %v2727 = vunpack.c.l.b16 %v2715
        %v2728 = vpack.c.b16 %v2725, %v2724
        %v2729 = vpack.c.b16 %v2727, %v2726
        %v2733 = vsel %vm1302, %v2711, 0
        %2735 = vmatpush.bf16.msra.mxu0 0
        %2736 = vmatpush.bf16.msra.mxu0 0
        %2737 = vmatpush.bf16.msra.mxu0 0
        %2738 = vmatpush.bf16.msra.mxu0 0
        %2739 = vmatpush.bf16.msra.mxu0 0
        %2740 = vmatpush.bf16.msra.mxu0 0
        %2741 = vmatpush.bf16.msra.mxu0 %v2729
        %2742 = vmatpush.bf16.msra.mxu0 %v2728
        %2743 = vmatmul.bf16.gmra.mxu0 %v2733
        %v2744 = vpop.f32.mrf.mxu0
        %v2745 = vadd.f32 %v2718, %v2744
        %v2746 = vpop.f32.mrf.mxu0
        %2747 = vdwg.mxu0
        %v2748 = vmax.f32 %v2745, 0.0
        %v2749 = vpack.c.bf16 %v2748, %v2748
        %v2750 = vld [vmem:[%s1159] sm:$0xf]
        %v2751 = vld [vmem:[%s1159 + $0x4] sm:$0xf]
        %v2752 = vld [vmem:[%s1159 + $0x8] sm:$0xf]
        %v2753 = vld [vmem:[%s1159 + $0xc] sm:$0xf]
        %v2754 = vld [vmem:[%s1159 + $0x10] sm:$0xf]
        %v2755 = vld [vmem:[%s1159 + $0x14] sm:$0xf]
        %v2756 = vld [vmem:[%s1159 + $0x18] sm:$0xf]
        %v2757 = vld [vmem:[%s1159 + $0x1c] sm:$0xf]
        %v2758 = vld [vmem:[%s1162] sm:$0x1]
        %v2760 = vperm.slane %v2758, 0
        %v2770 = vunpack.c.l.b16 %v2750
        %v2771 = vunpack.c.l.b16 %v2751
        %v2772 = vunpack.c.l.b16 %v2752
        %v2773 = vunpack.c.l.b16 %v2753
        %v2774 = vunpack.c.l.b16 %v2754
        %v2775 = vunpack.c.l.b16 %v2755
        %v2776 = vunpack.c.l.b16 %v2756
        %v2777 = vunpack.c.l.b16 %v2757
        %v2778 = vpack.c.b16 %v2771, %v2770
        %v2779 = vpack.c.b16 %v2773, %v2772
        %v2780 = vpack.c.b16 %v2775, %v2774
        %v2781 = vpack.c.b16 %v2777, %v2776
        %vm2786 = vcmask 523264
        %v2788 = vsel %vm2786, %v2749, 0
        %2790 = vmatpush.bf16.msra.mxu0 0
        %2791 = vmatpush.bf16.msra.mxu0 0
        %2792 = vmatpush.bf16.msra.mxu0 0
        %2793 = vmatpush.bf16.msra.mxu0 0
        %2794 = vmatpush.bf16.msra.mxu0 %v2781
        %2795 = vmatpush.bf16.msra.mxu0 %v2780
        %2796 = vmatpush.bf16.msra.mxu0 %v2779
        %2797 = vmatpush.bf16.msra.mxu0 %v2778
        %2798 = vmatmul.bf16.gmra.mxu0 %v2788
        %v2799 = vpop.f32.mrf.mxu0
        %v2800 = vadd.f32 %v2760, %v2799
        %v2801 = vpop.f32.mrf.mxu0
        %2802 = vdwg.mxu0
        %v2803 = vld [vmem:[%s1177] sm:$0x1]
        %v2804 = vld [vmem:[%s1180] sm:$0x1]
        %v2805 = vadd.f32 %v2800, %v2710
        %v2806 = vsel %vm1302, %v2805, 0.0
        %2807 = vadd.xlane.f32.xlu0 %v2806
        %v2808 = vpop.xlane.xlu0 %2807
        %v2809 = vmul.f32 %v2808, %v1927
        %v2810 = vsub.f32 %v2805, %v2809
        %v2811 = vmul.f32 %v2810, %v2810
        %v2812 = vsel %vm1302, %v2811, 0.0
        %2813 = vadd.xlane.f32.xlu0 %v2812
        %v2814 = vpop.xlane.xlu0 %2813
        %v2815 = vmul.f32 %v2814, %v1927
        %v2816 = vadd.f32 %v2815, 1e-05
        %v2817 = vrsqrt.pop %v2816
        %v2818 = vmul.f32 %v2817, %v2816
        %v2819 = vmul.f32 %v2818, %v2817
        %v2820 = vmul.f32 0.5, %v2819
        %v2821 = vsub.f32 1.5, %v2820
        %v2822 = vmul.f32 %v2817, %v2821
        %vm2823 = vweird.f32 %v2816
        %vm2824 = vweird.f32 %v2817
        %vm2825 = vmor %vm2823, %vm2824
        %v2826 = vsel %vm2825, %v2817, %v2822
        %v2827 = vmul.f32 %v2810, %v2826
        %v2829 = vperm.slane %v2803, 0
        %v2831 = vmul.f32 %v2827, %v2829
        %v2833 = vperm.slane %v2804, 0
        %v2835 = vadd.f32 %v2831, %v2833
        %2836 = vst.msk [vmem:[#allocation2] sm:$0xff] %vm1302, %v2835
        %p2837 = scmp.eq.s32.totalorder %s45, 1
        // Predicated region
        $region129: #{tpu_custom_call.1} parent=123 // pred_check
          %p2838 = pneg %p2837
        $region130: #{tpu_custom_call.1} parent=123 // pred_check_branch
          %2840 = sbr.rel (%p2838) target = $region132
        $region131: #{tpu_custom_call.1} parent=123 // pred_region
          %v2841 = vpack.c.bf16 %v2835, %v2835
          %v2842 = vld [vmem:[%s24] sm:$0xf]
          %v2843 = vld [vmem:[%s24 + $0x4] sm:$0xf]
          %v2844 = vld [vmem:[%s24 + $0x8] sm:$0xf]
          %v2845 = vld [vmem:[%s24 + $0xc] sm:$0xf]
          %v2846 = vld [vmem:[%s25] sm:$0x1]
          %v2848 = vperm.slane %v2846, 0
          %v2854 = vunpack.c.l.b16 %v2842
          %v2855 = vunpack.c.l.b16 %v2843
          %v2856 = vunpack.c.l.b16 %v2844
          %v2857 = vunpack.c.l.b16 %v2845
          %v2858 = vpack.c.b16 %v2855, %v2854
          %v2859 = vpack.c.b16 %v2857, %v2856
          %v2863 = vsel %vm1302, %v2841, 0
          %2865 = vmatpush.bf16.msra.mxu0 0
          %2866 = vmatpush.bf16.msra.mxu0 0
          %2867 = vmatpush.bf16.msra.mxu0 0
          %2868 = vmatpush.bf16.msra.mxu0 0
          %2869 = vmatpush.bf16.msra.mxu0 0
          %2870 = vmatpush.bf16.msra.mxu0 0
          %2871 = vmatpush.bf16.msra.mxu0 %v2859
          %2872 = vmatpush.bf16.msra.mxu0 %v2858
          %2873 = vmatmul.bf16.gmra.mxu0 %v2863
          %v2874 = vpop.f32.mrf.mxu0
          %v2875 = vadd.f32 %v2848, %v2874
          %v2876 = vpop.f32.mrf.mxu0
          %2877 = vdwg.mxu0
          %vm2878 = vcmask 408576
          %2879 = vst.msk [vmem:[%s1087] sm:$0xff] %vm2878, %v2875
        $region132: #{tpu_custom_call.1} parent=123 // pred_fallthru
          _
        %s2880 = sand.u32 %s726, 1
        %s2881 = scalar_lea.sflag [#allocation4], %s2880
        %s2882 = sand.u32 %s726, 1
        %s2883 = smul.addr %s2882, 8
        %s2884 = scalar_lea.vmem [#allocation3], %s2883
        // Predicated region
        $region133: #{tpu_custom_call.1} parent=123 // pred_check
          %p2885 = pneg %p736
        $region134: #{tpu_custom_call.1} parent=123 // pred_check_branch
          %2887 = sbr.rel (%p2885) target = $region136
        $region135: #{tpu_custom_call.1} parent=123 // pred_region
          %2889 = vsyncadd %s2881, 0
          %s2890 = smul.addr %s44, 8
          %s2891 = scalar_lea.hbm %s26, %s2890
          %s2893 = sshll.u32 %s2884, 4
          %s2894 = int_to_ptr.vmem [resolvable:$true] %s2893
          %s2895 = sshll.u32 %s2891, 4
          %s2896 = int_to_ptr.hbm [resolvable:$true] %s2895
          %2898 = dma.vmem_to_hbm [thread:$0]  %s2894, 128, %s2896, %s2881
        $region136: #{tpu_custom_call.1} parent=123 // pred_fallthru
          _
      $region124: #{tpu_custom_call.1} parent=5 // pred_fallthru
        _
      %p2899 = scmp.le.s32.totalorder 2, %s35
      // Predicated region
      $region137: #{tpu_custom_call.1} parent=5 // pred_check
        %p2900 = pneg %p2899
      $region138: #{tpu_custom_call.1} parent=5 // pred_check_branch
        %2902 = sbr.rel (%p2900) target = $region140
      $region139: #{tpu_custom_call.1} parent=5 // pred_region
        %s2903 = ssub.s32 %s35, 2
        // Predicated region
        $region141: #{tpu_custom_call.1} parent=139 // pred_check
          %p2904 = pneg %p742
        $region142: #{tpu_custom_call.1} parent=139 // pred_check_branch
          %2906 = sbr.rel (%p2904) target = $region144
        $region143: #{tpu_custom_call.1} parent=139 // pred_region
          %s2907 = sand.u32 %s727, 1
          %s2908 = scalar_lea.sflag [#allocation4], %s2907
          %s2909 = sand.u32 %s727, 1
          %s2910 = smul.addr %s2909, 8
          %s2911 = scalar_lea.vmem [#allocation3], %s2910
          %2913 = dma.done %s2908, 128
        $region144: #{tpu_custom_call.1} parent=139 // pred_fallthru
          _
      $region140: #{tpu_custom_call.1} parent=5 // pred_fallthru
        _
    $region6: #{tpu_custom_call.1} parent=1 // loop_footer
      %s39 = sadd.s32 1, %s35
    $region7: #{tpu_custom_call.1} parent=1 // loop_footer_branch
      %34 = sbr.rel target = $region3
    $region8: #{tpu_custom_call.1} parent=1 // loop_exit
      _
    %2914 = vsyncpa [#allocation4], 1
    %s2915 = scalar_lea.sflag [#allocation4], 1
    %2916 = vsyncpa %s2915, 1

</llo_original>
